<compile_context>
chip_gen: v7x
topology: tpu7x:2x2x1
jax: 0.10.0
libtpu: 0.0.40
codegen_flags: <defaults>
</compile_context>

<pallas_src>
import functools

import jax
import jax.numpy as jnp
from jax import lax
from jax.experimental import pallas as pl
from jax.experimental.pallas import tpu as pltpu

_EPS = 1e-5


def _rup8(c):
    return ((c + 7) // 8) * 8


def _im2col(x_cm, h_idx, w_idx, dil, H, W, M):
    """x_cm: (C, M) f32, flat index = n*H*W + h*W + w.
    Returns (9*C, M) patch matrix for a 3x3 'same' conv with dilation `dil`.
    Spatial shifts are lane rolls (XLU slot) + boundary masks; works for any dilation."""
    taps = []
    for kh in range(3):
        for kw in range(3):
            oh = (kh - 1) * dil
            ow = (kw - 1) * dil
            off = oh * W + ow
            t = pltpu.roll(x_cm, (-off) % M, axis=1) if off != 0 else x_cm
            if oh != 0 or ow != 0:
                valid = ((h_idx + oh >= 0) & (h_idx + oh < H)
                         & (w_idx + ow >= 0) & (w_idx + ow < W))
                t = jnp.where(valid, t, 0.0)
            taps.append(t)
    return jnp.concatenate(taps, axis=0)  # aligned: C is a multiple of 8


def _bn_relu(x_cm, g, b, inv_m):
    """BatchNorm2d (track_running_stats=False -> batch stats, biased var) + ReLU.
    x_cm: (C, M); stats over lanes (= over N,H,W).  One-pass fused moments;
    var clamped at 0 against cancellation (values are O(1) here)."""
    s1 = jnp.sum(x_cm, axis=1, keepdims=True)
    s2 = jnp.sum(x_cm * x_cm, axis=1, keepdims=True)
    mean = s1 * inv_m
    var = jnp.maximum(s2 * inv_m - mean * mean, 0.0)
    y = (x_cm - mean) * (lax.rsqrt(var + _EPS) * g) + b
    return jnp.maximum(y, 0.0)


def _make_kernel(H, W, M, dilation):
    inv_m = 1.0 / M

    def kernel(x_ref, hidx_ref, widx_ref,
               w1_ref, w2a_ref, w2b_ref, w3_ref, b3_ref,
               g1_ref, be1_ref, g2_ref, be2_ref,
               out_ref):
        h_idx = hidx_ref[...]                               # (1, M) int32
        w_idx = widx_ref[...]                               # (1, M) int32
        x = x_ref[...]                                      # (Cin_p, M) f32

        # conv1 (dil=1) -> BN1 -> ReLU   (conv bias cancels through batch-stat BN)
        p1 = _im2col(x, h_idx, w_idx, 1, H, W, M).astype(jnp.bfloat16)
        y = jnp.dot(w1_ref[...], p1, preferred_element_type=jnp.float32)
        y = _bn_relu(y, g1_ref[...], be1_ref[...], inv_m)   # (C1_p, M)

        # two dilated 3x3 branches; channel concat == sublane concat here
        p2a = _im2col(y, h_idx, w_idx, 2, H, W, M).astype(jnp.bfloat16)
        y1 = jnp.dot(w2a_ref[...], p2a, preferred_element_type=jnp.float32)
        p2b = _im2col(y, h_idx, w_idx, dilation, H, W, M).astype(jnp.bfloat16)
        y2 = jnp.dot(w2b_ref[...], p2b, preferred_element_type=jnp.float32)
        z = jnp.concatenate([y1, y2], axis=0)               # (2*half_p, M), aligned
        z = _bn_relu(z, g2_ref[...], be2_ref[...], inv_m)

        # conv3 (dil=1) + bias, then LogSoftmax over channels (sublane axis)
        p3 = _im2col(z, h_idx, w_idx, 1, H, W, M).astype(jnp.bfloat16)
        o = jnp.dot(w3_ref[...], p3, preferred_element_type=jnp.float32) + b3_ref[...]
        mx = jnp.max(o, axis=0, keepdims=True)
        s = o - mx
        lse = jnp.log(jnp.sum(jnp.exp(s), axis=0, keepdims=True))
        out_ref[...] = (s - lse).astype(out_ref.dtype)      # (Cout, M) lane-dense store

    return kernel


def _pack_conv_weight(w_hwio, cin_pad, cout_pad):
    """HWIO (3,3,Cin,Cout) -> (Cout_pad, 9*Cin_pad) bf16, im2col-ordered, zero-padded."""
    kh, kw, cin, cout = w_hwio.shape
    wp = jnp.zeros((kh, kw, cin_pad, cout_pad), w_hwio.dtype)
    wp = wp.at[:, :, :cin, :cout].set(w_hwio)
    wm = jnp.transpose(wp, (3, 0, 1, 2)).reshape(cout_pad, kh * kw * cin_pad)
    return wm.astype(jnp.bfloat16)


def _pack_w3(w3, half, half_p, cout):
    """conv3 weight with its input channels scattered into the padded [y1|pad|y2|pad] layout."""
    c2_p = 2 * half_p
    wp = jnp.zeros((3, 3, c2_p, cout), w3.dtype)
    wp = wp.at[:, :, :half, :].set(w3[:, :, :half, :])
    wp = wp.at[:, :, half_p:half_p + half, :].set(w3[:, :, half:, :])
    wm = jnp.transpose(wp, (3, 0, 1, 2)).reshape(cout, 9 * c2_p)
    return wm.astype(jnp.bfloat16)


def _pad_col(v_1c, c_pad):
    """(1, C) -> (c_pad, 1) f32 column, zero in padded slots."""
    c = v_1c.shape[1]
    return jnp.zeros((c_pad, 1), jnp.float32).at[:c, 0].set(v_1c[0].astype(jnp.float32))


def three_layer_semseg_highdim(x_nchw, params, dilation):
    """Forward pass matching ThreeLayerSemSegNetHighDim. x_nchw: (N,Cin,H,W) -> (N,Cout,H,W)."""
    n, cin, hh, ww = x_nchw.shape
    (w1, b1, w2a, b2a, w2b, b2b, w3, b3, g1, be1, g2, be2) = params
    del b1, b2a, b2b  # per-channel bias before batch-stat BatchNorm cancels exactly
    c1 = w1.shape[3]
    half = w2a.shape[3]
    cout = w3.shape[3]
    m = n * hh * ww

    cin_p = _rup8(cin)
    c1_p = _rup8(c1)
    half_p = _rup8(half)

    # activations: NCHW -> channels-on-sublane, flattened spatial on lanes (C, N*H*W)
    x_cm = jnp.transpose(x_nchw, (1, 0, 2, 3)).reshape(cin, m).astype(jnp.float32)
    x_cm = jnp.pad(x_cm, ((0, cin_p - cin), (0, 0)))

    # precomputed (h, w) index rows for the in-kernel boundary masks
    flat = jnp.arange(m, dtype=jnp.int32)
    w_idx = (flat % ww).reshape(1, m)
    h_idx = ((flat // ww) % hh).reshape(1, m)

    # im2col-packed weights (bf16) and padded per-channel params (f32 columns)
    w1m = _pack_conv_weight(w1, cin_p, c1_p)
    w2am = _pack_conv_weight(w2a, c1_p, half_p)
    w2bm = _pack_conv_weight(w2b, c1_p, half_p)
    w3m = _pack_w3(w3, half, half_p, cout)
    b3c = b3.reshape(cout, 1).astype(jnp.float32)
    g1p = _pad_col(g1, c1_p)
    be1p = _pad_col(be1, c1_p)
    g2p = jnp.concatenate([_pad_col(g2[:, :half], half_p),
                           _pad_col(g2[:, half:], half_p)], axis=0)
    be2p = jnp.concatenate([_pad_col(be2[:, :half], half_p),
                            _pad_col(be2[:, half:], half_p)], axis=0)

    kernel = _make_kernel(hh, ww, m, dilation)
    vspec = pl.BlockSpec(memory_space=pltpu.MemorySpace.VMEM)
    out_cm = pl.pallas_call(
        kernel,
        out_shape=jax.ShapeDtypeStruct((cout, m), jnp.float32),
        in_specs=[vspec] * 12,
        out_specs=vspec,
        compiler_params=pltpu.CompilerParams(vmem_limit_bytes=32 * 1024 * 1024),
    )(x_cm, h_idx, w_idx, w1m, w2am, w2bm, w3m, b3c, g1p, be1p, g2p, be2p)

    # (Cout, N*H*W) -> (N, Cout, H, W)
    return jnp.transpose(out_cm.reshape(cout, n, hh, ww), (1, 0, 2, 3))


def init_params(key, in_channel, out_channel, conv1_outdim, conv2_outdim):
    """Deterministic synthetic parameters with the same shapes as the PyTorch module."""
    ks = jax.random.split(key, 12)
    half = conv2_outdim // 2

    def conv_w(k, cin, co):
        bound = 1.0 / ((cin * 9) ** 0.5)
        return jax.random.uniform(k, (3, 3, cin, co), jnp.float32, -bound, bound)

    def conv_b(k, cin, co):
        bound = 1.0 / ((cin * 9) ** 0.5)
        return jax.random.uniform(k, (1, co), jnp.float32, -bound, bound)

    w1 = conv_w(ks[0], in_channel, conv1_outdim); b1 = conv_b(ks[1], in_channel, conv1_outdim)
    w2a = conv_w(ks[2], conv1_outdim, half);      b2a = conv_b(ks[3], conv1_outdim, half)
    w2b = conv_w(ks[4], conv1_outdim, half);      b2b = conv_b(ks[5], conv1_outdim, half)
    w3 = conv_w(ks[6], conv2_outdim, out_channel); b3 = conv_b(ks[7], conv2_outdim, out_channel)
    g1 = 1.0 + 0.1 * jax.random.normal(ks[8], (1, conv1_outdim), jnp.float32)
    be1 = 0.1 * jax.random.normal(ks[9], (1, conv1_outdim), jnp.float32)
    g2 = 1.0 + 0.1 * jax.random.normal(ks[10], (1, conv2_outdim), jnp.float32)
    be2 = 0.1 * jax.random.normal(ks[11], (1, conv2_outdim), jnp.float32)
    return (w1, b1, w2a, b2a, w2b, b2b, w3, b3, g1, be1, g2, be2)


def reference_forward(x_nchw, params, dilation):
    """Pure-JAX/XLA reference of the same forward pass (for verification)."""
    (w1, b1, w2a, b2a, w2b, b2b, w3, b3, g1, be1, g2, be2) = params
    x = jnp.transpose(x_nchw, (0, 2, 3, 1))

    def conv(xx, wt, b, dil):
        out = lax.conv_general_dilated(
            xx, wt, window_strides=(1, 1),
            padding=[(dil, dil), (dil, dil)], rhs_dilation=(dil, dil),
            dimension_numbers=('NHWC', 'HWIO', 'NHWC'),
            precision=lax.Precision.HIGHEST)
        return out + b.reshape(1, 1, 1, -1)

    def bn(xx, g, be):
        mean = jnp.mean(xx, axis=(0, 1, 2), keepdims=True)
        var = jnp.mean((xx - mean) ** 2, axis=(0, 1, 2), keepdims=True)
        return (xx - mean) * lax.rsqrt(var + _EPS) * g.reshape(1, 1, 1, -1) + be.reshape(1, 1, 1, -1)

    y = jax.nn.relu(bn(conv(x, w1, b1, 1), g1, be1))
    y1 = conv(y, w2a, b2a, 2)
    y2 = conv(y, w2b, b2b, dilation)
    z = jax.nn.relu(bn(jnp.concatenate([y1, y2], axis=-1), g2, be2))
    o = jax.nn.log_softmax(conv(z, w3, b3, 1), axis=-1)
    return jnp.transpose(o, (0, 3, 1, 2))


if __name__ == "__main__":
    N, Cin, H, W = 2, 4, 16, 16
    conv1_outdim, conv2_outdim, out_channel, dilation = 8, 8, 5, 3

    key = jax.random.PRNGKey(0)
    kx, kp = jax.random.split(key)
    x = jax.random.normal(kx, (N, Cin, H, W), jnp.float32)
    params = init_params(kp, Cin, out_channel, conv1_outdim, conv2_outdim)

    fwd = jax.jit(functools.partial(three_layer_semseg_highdim, dilation=dilation))
    out = fwd(x, params)
    jax.block_until_ready(out)

    ref = reference_forward(x, params, dilation)
    assert out.shape == (N, out_channel, H, W), out.shape
    assert bool(jnp.all(jnp.isfinite(out)))
    err = float(jnp.max(jnp.abs(out - ref)))
    assert bool(jnp.allclose(out, ref, atol=5e-2, rtol=5e-2)), err
    print("KERNEL_OK")
</pallas_src>

<mosaic_0001>
module attributes {stable_mosaic.version = 11 : i64} {
  func.func @kernel(%arg0: memref<8x512xf32, #tpu.memory_space<vmem>>, %arg1: memref<1x512xi32, #tpu.memory_space<vmem>>, %arg2: memref<1x512xi32, #tpu.memory_space<vmem>>, %arg3: memref<8x72xbf16, #tpu.memory_space<vmem>>, %arg4: memref<8x72xbf16, #tpu.memory_space<vmem>>, %arg5: memref<8x72xbf16, #tpu.memory_space<vmem>>, %arg6: memref<5x144xbf16, #tpu.memory_space<vmem>>, %arg7: memref<5x1xf32, #tpu.memory_space<vmem>>, %arg8: memref<8x1xf32, #tpu.memory_space<vmem>>, %arg9: memref<8x1xf32, #tpu.memory_space<vmem>>, %arg10: memref<16x1xf32, #tpu.memory_space<vmem>>, %arg11: memref<16x1xf32, #tpu.memory_space<vmem>>, %arg12: memref<5x512xf32, #tpu.memory_space<vmem>>) attributes {dimension_semantics = [], scalar_prefetch = 0 : i64, scratch_operands = 0 : i64, tpu.core_type = #tpu.core_type<tc>} {
    %c0 = arith.constant 0 : index
    %c0_0 = arith.constant 0 : index
    %0 = vector.load %arg1[%c0, %c0_0] : memref<1x512xi32, #tpu.memory_space<vmem>>, vector<1x512xi32>
    %c0_1 = arith.constant 0 : index
    %c0_2 = arith.constant 0 : index
    %1 = vector.load %arg2[%c0_1, %c0_2] : memref<1x512xi32, #tpu.memory_space<vmem>>, vector<1x512xi32>
    %c0_3 = arith.constant 0 : index
    %c0_4 = arith.constant 0 : index
    %2 = vector.load %arg0[%c0_3, %c0_4] : memref<8x512xf32, #tpu.memory_space<vmem>>, vector<8x512xf32>
    %c17_i32 = arith.constant 17 : i32
    %3 = tpu.dynamic_rotate %2 by %c17_i32 dim 1 : vector<8x512xf32>, i32 -> vector<8x512xf32>
    %c-1_i32 = arith.constant -1 : i32
    %4 = vector.broadcast %c-1_i32 : i32 to vector<1x512xi32>
    %5 = arith.addi %0, %4 : vector<1x512xi32>
    %c0_i32 = arith.constant 0 : i32
    %6 = vector.broadcast %c0_i32 : i32 to vector<1x512xi32>
    %7 = arith.cmpi sge, %5, %6 : vector<1x512xi32>
    %c-1_i32_5 = arith.constant -1 : i32
    %8 = vector.broadcast %c-1_i32_5 : i32 to vector<1x512xi32>
    %9 = arith.addi %0, %8 : vector<1x512xi32>
    %c16_i32 = arith.constant 16 : i32
    %10 = vector.broadcast %c16_i32 : i32 to vector<1x512xi32>
    %11 = arith.cmpi slt, %9, %10 : vector<1x512xi32>
    %12 = arith.andi %7, %11 : vector<1x512xi1>
    %c-1_i32_6 = arith.constant -1 : i32
    %13 = vector.broadcast %c-1_i32_6 : i32 to vector<1x512xi32>
    %14 = arith.addi %1, %13 : vector<1x512xi32>
    %c0_i32_7 = arith.constant 0 : i32
    %15 = vector.broadcast %c0_i32_7 : i32 to vector<1x512xi32>
    %16 = arith.cmpi sge, %14, %15 : vector<1x512xi32>
    %17 = arith.andi %12, %16 : vector<1x512xi1>
    %c-1_i32_8 = arith.constant -1 : i32
    %18 = vector.broadcast %c-1_i32_8 : i32 to vector<1x512xi32>
    %19 = arith.addi %1, %18 : vector<1x512xi32>
    %c16_i32_9 = arith.constant 16 : i32
    %20 = vector.broadcast %c16_i32_9 : i32 to vector<1x512xi32>
    %21 = arith.cmpi slt, %19, %20 : vector<1x512xi32>
    %22 = arith.andi %17, %21 : vector<1x512xi1>
    %cst = arith.constant 0.000000e+00 : f32
    %23 = vector.shape_cast %22 : vector<1x512xi1> to vector<1x512xi1>
    %24 = vector.broadcast %23 : vector<1x512xi1> to vector<8x512xi1>
    %25 = vector.broadcast %cst : f32 to vector<8x512xf32>
    %26 = arith.select %24, %3, %25 : vector<8x512xi1>, vector<8x512xf32>
    %c16_i32_10 = arith.constant 16 : i32
    %27 = tpu.dynamic_rotate %2 by %c16_i32_10 dim 1 : vector<8x512xf32>, i32 -> vector<8x512xf32>
    %c-1_i32_11 = arith.constant -1 : i32
    %28 = vector.broadcast %c-1_i32_11 : i32 to vector<1x512xi32>
    %29 = arith.addi %0, %28 : vector<1x512xi32>
    %c0_i32_12 = arith.constant 0 : i32
    %30 = vector.broadcast %c0_i32_12 : i32 to vector<1x512xi32>
    %31 = arith.cmpi sge, %29, %30 : vector<1x512xi32>
    %c-1_i32_13 = arith.constant -1 : i32
    %32 = vector.broadcast %c-1_i32_13 : i32 to vector<1x512xi32>
    %33 = arith.addi %0, %32 : vector<1x512xi32>
    %c16_i32_14 = arith.constant 16 : i32
    %34 = vector.broadcast %c16_i32_14 : i32 to vector<1x512xi32>
    %35 = arith.cmpi slt, %33, %34 : vector<1x512xi32>
    %36 = arith.andi %31, %35 : vector<1x512xi1>
    %c0_i32_15 = arith.constant 0 : i32
    %37 = vector.broadcast %c0_i32_15 : i32 to vector<1x512xi32>
    %38 = arith.addi %1, %37 : vector<1x512xi32>
    %c0_i32_16 = arith.constant 0 : i32
    %39 = vector.broadcast %c0_i32_16 : i32 to vector<1x512xi32>
    %40 = arith.cmpi sge, %38, %39 : vector<1x512xi32>
    %41 = arith.andi %36, %40 : vector<1x512xi1>
    %c0_i32_17 = arith.constant 0 : i32
    %42 = vector.broadcast %c0_i32_17 : i32 to vector<1x512xi32>
    %43 = arith.addi %1, %42 : vector<1x512xi32>
    %c16_i32_18 = arith.constant 16 : i32
    %44 = vector.broadcast %c16_i32_18 : i32 to vector<1x512xi32>
    %45 = arith.cmpi slt, %43, %44 : vector<1x512xi32>
    %46 = arith.andi %41, %45 : vector<1x512xi1>
    %cst_19 = arith.constant 0.000000e+00 : f32
    %47 = vector.shape_cast %46 : vector<1x512xi1> to vector<1x512xi1>
    %48 = vector.broadcast %47 : vector<1x512xi1> to vector<8x512xi1>
    %49 = vector.broadcast %cst_19 : f32 to vector<8x512xf32>
    %50 = arith.select %48, %27, %49 : vector<8x512xi1>, vector<8x512xf32>
    %c15_i32 = arith.constant 15 : i32
    %51 = tpu.dynamic_rotate %2 by %c15_i32 dim 1 : vector<8x512xf32>, i32 -> vector<8x512xf32>
    %c-1_i32_20 = arith.constant -1 : i32
    %52 = vector.broadcast %c-1_i32_20 : i32 to vector<1x512xi32>
    %53 = arith.addi %0, %52 : vector<1x512xi32>
    %c0_i32_21 = arith.constant 0 : i32
    %54 = vector.broadcast %c0_i32_21 : i32 to vector<1x512xi32>
    %55 = arith.cmpi sge, %53, %54 : vector<1x512xi32>
    %c-1_i32_22 = arith.constant -1 : i32
    %56 = vector.broadcast %c-1_i32_22 : i32 to vector<1x512xi32>
    %57 = arith.addi %0, %56 : vector<1x512xi32>
    %c16_i32_23 = arith.constant 16 : i32
    %58 = vector.broadcast %c16_i32_23 : i32 to vector<1x512xi32>
    %59 = arith.cmpi slt, %57, %58 : vector<1x512xi32>
    %60 = arith.andi %55, %59 : vector<1x512xi1>
    %c1_i32 = arith.constant 1 : i32
    %61 = vector.broadcast %c1_i32 : i32 to vector<1x512xi32>
    %62 = arith.addi %1, %61 : vector<1x512xi32>
    %c0_i32_24 = arith.constant 0 : i32
    %63 = vector.broadcast %c0_i32_24 : i32 to vector<1x512xi32>
    %64 = arith.cmpi sge, %62, %63 : vector<1x512xi32>
    %65 = arith.andi %60, %64 : vector<1x512xi1>
    %c1_i32_25 = arith.constant 1 : i32
    %66 = vector.broadcast %c1_i32_25 : i32 to vector<1x512xi32>
    %67 = arith.addi %1, %66 : vector<1x512xi32>
    %c16_i32_26 = arith.constant 16 : i32
    %68 = vector.broadcast %c16_i32_26 : i32 to vector<1x512xi32>
    %69 = arith.cmpi slt, %67, %68 : vector<1x512xi32>
    %70 = arith.andi %65, %69 : vector<1x512xi1>
    %cst_27 = arith.constant 0.000000e+00 : f32
    %71 = vector.shape_cast %70 : vector<1x512xi1> to vector<1x512xi1>
    %72 = vector.broadcast %71 : vector<1x512xi1> to vector<8x512xi1>
    %73 = vector.broadcast %cst_27 : f32 to vector<8x512xf32>
    %74 = arith.select %72, %51, %73 : vector<8x512xi1>, vector<8x512xf32>
    %c1_i32_28 = arith.constant 1 : i32
    %75 = tpu.dynamic_rotate %2 by %c1_i32_28 dim 1 : vector<8x512xf32>, i32 -> vector<8x512xf32>
    %c0_i32_29 = arith.constant 0 : i32
    %76 = vector.broadcast %c0_i32_29 : i32 to vector<1x512xi32>
    %77 = arith.addi %0, %76 : vector<1x512xi32>
    %c0_i32_30 = arith.constant 0 : i32
    %78 = vector.broadcast %c0_i32_30 : i32 to vector<1x512xi32>
    %79 = arith.cmpi sge, %77, %78 : vector<1x512xi32>
    %c0_i32_31 = arith.constant 0 : i32
    %80 = vector.broadcast %c0_i32_31 : i32 to vector<1x512xi32>
    %81 = arith.addi %0, %80 : vector<1x512xi32>
    %c16_i32_32 = arith.constant 16 : i32
    %82 = vector.broadcast %c16_i32_32 : i32 to vector<1x512xi32>
    %83 = arith.cmpi slt, %81, %82 : vector<1x512xi32>
    %84 = arith.andi %79, %83 : vector<1x512xi1>
    %c-1_i32_33 = arith.constant -1 : i32
    %85 = vector.broadcast %c-1_i32_33 : i32 to vector<1x512xi32>
    %86 = arith.addi %1, %85 : vector<1x512xi32>
    %c0_i32_34 = arith.constant 0 : i32
    %87 = vector.broadcast %c0_i32_34 : i32 to vector<1x512xi32>
    %88 = arith.cmpi sge, %86, %87 : vector<1x512xi32>
    %89 = arith.andi %84, %88 : vector<1x512xi1>
    %c-1_i32_35 = arith.constant -1 : i32
    %90 = vector.broadcast %c-1_i32_35 : i32 to vector<1x512xi32>
    %91 = arith.addi %1, %90 : vector<1x512xi32>
    %c16_i32_36 = arith.constant 16 : i32
    %92 = vector.broadcast %c16_i32_36 : i32 to vector<1x512xi32>
    %93 = arith.cmpi slt, %91, %92 : vector<1x512xi32>
    %94 = arith.andi %89, %93 : vector<1x512xi1>
    %cst_37 = arith.constant 0.000000e+00 : f32
    %95 = vector.shape_cast %94 : vector<1x512xi1> to vector<1x512xi1>
    %96 = vector.broadcast %95 : vector<1x512xi1> to vector<8x512xi1>
    %97 = vector.broadcast %cst_37 : f32 to vector<8x512xf32>
    %98 = arith.select %96, %75, %97 : vector<8x512xi1>, vector<8x512xf32>
    %c511_i32 = arith.constant 511 : i32
    %99 = tpu.dynamic_rotate %2 by %c511_i32 dim 1 : vector<8x512xf32>, i32 -> vector<8x512xf32>
    %c0_i32_38 = arith.constant 0 : i32
    %100 = vector.broadcast %c0_i32_38 : i32 to vector<1x512xi32>
    %101 = arith.addi %0, %100 : vector<1x512xi32>
    %c0_i32_39 = arith.constant 0 : i32
    %102 = vector.broadcast %c0_i32_39 : i32 to vector<1x512xi32>
    %103 = arith.cmpi sge, %101, %102 : vector<1x512xi32>
    %c0_i32_40 = arith.constant 0 : i32
    %104 = vector.broadcast %c0_i32_40 : i32 to vector<1x512xi32>
    %105 = arith.addi %0, %104 : vector<1x512xi32>
    %c16_i32_41 = arith.constant 16 : i32
    %106 = vector.broadcast %c16_i32_41 : i32 to vector<1x512xi32>
    %107 = arith.cmpi slt, %105, %106 : vector<1x512xi32>
    %108 = arith.andi %103, %107 : vector<1x512xi1>
    %c1_i32_42 = arith.constant 1 : i32
    %109 = vector.broadcast %c1_i32_42 : i32 to vector<1x512xi32>
    %110 = arith.addi %1, %109 : vector<1x512xi32>
    %c0_i32_43 = arith.constant 0 : i32
    %111 = vector.broadcast %c0_i32_43 : i32 to vector<1x512xi32>
    %112 = arith.cmpi sge, %110, %111 : vector<1x512xi32>
    %113 = arith.andi %108, %112 : vector<1x512xi1>
    %c1_i32_44 = arith.constant 1 : i32
    %114 = vector.broadcast %c1_i32_44 : i32 to vector<1x512xi32>
    %115 = arith.addi %1, %114 : vector<1x512xi32>
    %c16_i32_45 = arith.constant 16 : i32
    %116 = vector.broadcast %c16_i32_45 : i32 to vector<1x512xi32>
    %117 = arith.cmpi slt, %115, %116 : vector<1x512xi32>
    %118 = arith.andi %113, %117 : vector<1x512xi1>
    %cst_46 = arith.constant 0.000000e+00 : f32
    %119 = vector.shape_cast %118 : vector<1x512xi1> to vector<1x512xi1>
    %120 = vector.broadcast %119 : vector<1x512xi1> to vector<8x512xi1>
    %121 = vector.broadcast %cst_46 : f32 to vector<8x512xf32>
    %122 = arith.select %120, %99, %121 : vector<8x512xi1>, vector<8x512xf32>
    %c497_i32 = arith.constant 497 : i32
    %123 = tpu.dynamic_rotate %2 by %c497_i32 dim 1 : vector<8x512xf32>, i32 -> vector<8x512xf32>
    %c1_i32_47 = arith.constant 1 : i32
    %124 = vector.broadcast %c1_i32_47 : i32 to vector<1x512xi32>
    %125 = arith.addi %0, %124 : vector<1x512xi32>
    %c0_i32_48 = arith.constant 0 : i32
    %126 = vector.broadcast %c0_i32_48 : i32 to vector<1x512xi32>
    %127 = arith.cmpi sge, %125, %126 : vector<1x512xi32>
    %c1_i32_49 = arith.constant 1 : i32
    %128 = vector.broadcast %c1_i32_49 : i32 to vector<1x512xi32>
    %129 = arith.addi %0, %128 : vector<1x512xi32>
    %c16_i32_50 = arith.constant 16 : i32
    %130 = vector.broadcast %c16_i32_50 : i32 to vector<1x512xi32>
    %131 = arith.cmpi slt, %129, %130 : vector<1x512xi32>
    %132 = arith.andi %127, %131 : vector<1x512xi1>
    %c-1_i32_51 = arith.constant -1 : i32
    %133 = vector.broadcast %c-1_i32_51 : i32 to vector<1x512xi32>
    %134 = arith.addi %1, %133 : vector<1x512xi32>
    %c0_i32_52 = arith.constant 0 : i32
    %135 = vector.broadcast %c0_i32_52 : i32 to vector<1x512xi32>
    %136 = arith.cmpi sge, %134, %135 : vector<1x512xi32>
    %137 = arith.andi %132, %136 : vector<1x512xi1>
    %c-1_i32_53 = arith.constant -1 : i32
    %138 = vector.broadcast %c-1_i32_53 : i32 to vector<1x512xi32>
    %139 = arith.addi %1, %138 : vector<1x512xi32>
    %c16_i32_54 = arith.constant 16 : i32
    %140 = vector.broadcast %c16_i32_54 : i32 to vector<1x512xi32>
    %141 = arith.cmpi slt, %139, %140 : vector<1x512xi32>
    %142 = arith.andi %137, %141 : vector<1x512xi1>
    %cst_55 = arith.constant 0.000000e+00 : f32
    %143 = vector.shape_cast %142 : vector<1x512xi1> to vector<1x512xi1>
    %144 = vector.broadcast %143 : vector<1x512xi1> to vector<8x512xi1>
    %145 = vector.broadcast %cst_55 : f32 to vector<8x512xf32>
    %146 = arith.select %144, %123, %145 : vector<8x512xi1>, vector<8x512xf32>
    %c496_i32 = arith.constant 496 : i32
    %147 = tpu.dynamic_rotate %2 by %c496_i32 dim 1 : vector<8x512xf32>, i32 -> vector<8x512xf32>
    %c1_i32_56 = arith.constant 1 : i32
    %148 = vector.broadcast %c1_i32_56 : i32 to vector<1x512xi32>
    %149 = arith.addi %0, %148 : vector<1x512xi32>
    %c0_i32_57 = arith.constant 0 : i32
    %150 = vector.broadcast %c0_i32_57 : i32 to vector<1x512xi32>
    %151 = arith.cmpi sge, %149, %150 : vector<1x512xi32>
    %c1_i32_58 = arith.constant 1 : i32
    %152 = vector.broadcast %c1_i32_58 : i32 to vector<1x512xi32>
    %153 = arith.addi %0, %152 : vector<1x512xi32>
    %c16_i32_59 = arith.constant 16 : i32
    %154 = vector.broadcast %c16_i32_59 : i32 to vector<1x512xi32>
    %155 = arith.cmpi slt, %153, %154 : vector<1x512xi32>
    %156 = arith.andi %151, %155 : vector<1x512xi1>
    %c0_i32_60 = arith.constant 0 : i32
    %157 = vector.broadcast %c0_i32_60 : i32 to vector<1x512xi32>
    %158 = arith.addi %1, %157 : vector<1x512xi32>
    %c0_i32_61 = arith.constant 0 : i32
    %159 = vector.broadcast %c0_i32_61 : i32 to vector<1x512xi32>
    %160 = arith.cmpi sge, %158, %159 : vector<1x512xi32>
    %161 = arith.andi %156, %160 : vector<1x512xi1>
    %c0_i32_62 = arith.constant 0 : i32
    %162 = vector.broadcast %c0_i32_62 : i32 to vector<1x512xi32>
    %163 = arith.addi %1, %162 : vector<1x512xi32>
    %c16_i32_63 = arith.constant 16 : i32
    %164 = vector.broadcast %c16_i32_63 : i32 to vector<1x512xi32>
    %165 = arith.cmpi slt, %163, %164 : vector<1x512xi32>
    %166 = arith.andi %161, %165 : vector<1x512xi1>
    %cst_64 = arith.constant 0.000000e+00 : f32
    %167 = vector.shape_cast %166 : vector<1x512xi1> to vector<1x512xi1>
    %168 = vector.broadcast %167 : vector<1x512xi1> to vector<8x512xi1>
    %169 = vector.broadcast %cst_64 : f32 to vector<8x512xf32>
    %170 = arith.select %168, %147, %169 : vector<8x512xi1>, vector<8x512xf32>
    %c495_i32 = arith.constant 495 : i32
    %171 = tpu.dynamic_rotate %2 by %c495_i32 dim 1 : vector<8x512xf32>, i32 -> vector<8x512xf32>
    %c1_i32_65 = arith.constant 1 : i32
    %172 = vector.broadcast %c1_i32_65 : i32 to vector<1x512xi32>
    %173 = arith.addi %0, %172 : vector<1x512xi32>
    %c0_i32_66 = arith.constant 0 : i32
    %174 = vector.broadcast %c0_i32_66 : i32 to vector<1x512xi32>
    %175 = arith.cmpi sge, %173, %174 : vector<1x512xi32>
    %c1_i32_67 = arith.constant 1 : i32
    %176 = vector.broadcast %c1_i32_67 : i32 to vector<1x512xi32>
    %177 = arith.addi %0, %176 : vector<1x512xi32>
    %c16_i32_68 = arith.constant 16 : i32
    %178 = vector.broadcast %c16_i32_68 : i32 to vector<1x512xi32>
    %179 = arith.cmpi slt, %177, %178 : vector<1x512xi32>
    %180 = arith.andi %175, %179 : vector<1x512xi1>
    %c1_i32_69 = arith.constant 1 : i32
    %181 = vector.broadcast %c1_i32_69 : i32 to vector<1x512xi32>
    %182 = arith.addi %1, %181 : vector<1x512xi32>
    %c0_i32_70 = arith.constant 0 : i32
    %183 = vector.broadcast %c0_i32_70 : i32 to vector<1x512xi32>
    %184 = arith.cmpi sge, %182, %183 : vector<1x512xi32>
    %185 = arith.andi %180, %184 : vector<1x512xi1>
    %c1_i32_71 = arith.constant 1 : i32
    %186 = vector.broadcast %c1_i32_71 : i32 to vector<1x512xi32>
    %187 = arith.addi %1, %186 : vector<1x512xi32>
    %c16_i32_72 = arith.constant 16 : i32
    %188 = vector.broadcast %c16_i32_72 : i32 to vector<1x512xi32>
    %189 = arith.cmpi slt, %187, %188 : vector<1x512xi32>
    %190 = arith.andi %185, %189 : vector<1x512xi1>
    %cst_73 = arith.constant 0.000000e+00 : f32
    %191 = vector.shape_cast %190 : vector<1x512xi1> to vector<1x512xi1>
    %192 = vector.broadcast %191 : vector<1x512xi1> to vector<8x512xi1>
    %193 = vector.broadcast %cst_73 : f32 to vector<8x512xf32>
    %194 = arith.select %192, %171, %193 : vector<8x512xi1>, vector<8x512xf32>
    %195 = tpu.concatenate %26, %50, %74, %98, %2, %122, %146, %170, %194 in 0 : vector<8x512xf32>, vector<8x512xf32>, vector<8x512xf32>, vector<8x512xf32>, vector<8x512xf32>, vector<8x512xf32>, vector<8x512xf32>, vector<8x512xf32>, vector<8x512xf32> -> vector<72x512xf32>
    %196 = arith.truncf %195 : vector<72x512xf32> to vector<72x512xbf16>
    %c0_74 = arith.constant 0 : index
    %c0_75 = arith.constant 0 : index
    %197 = vector.load %arg3[%c0_74, %c0_75] : memref<8x72xbf16, #tpu.memory_space<vmem>>, vector<8x72xbf16>
    %cst_76 = arith.constant dense<0.000000e+00> : vector<8x512xf32>
    %198 = tpu.matmul %197, %196, %cst_76 {dimension_numbers = #tpu.dot_dimension_numbers<[1], [0], [0], [1], [0, 0, 1, 1], [], []>} : vector<8x72xbf16>, vector<72x512xbf16>, vector<8x512xf32> -> vector<8x512xf32>
    %c0_77 = arith.constant 0 : index
    %c0_78 = arith.constant 0 : index
    %199 = vector.load %arg8[%c0_77, %c0_78] : memref<8x1xf32, #tpu.memory_space<vmem>>, vector<8x1xf32>
    %c0_79 = arith.constant 0 : index
    %c0_80 = arith.constant 0 : index
    %200 = vector.load %arg9[%c0_79, %c0_80] : memref<8x1xf32, #tpu.memory_space<vmem>>, vector<8x1xf32>
    %cst_81 = arith.constant dense<0.000000e+00> : vector<8xf32>
    %201 = vector.multi_reduction <add>, %198, %cst_81 [1] : vector<8x512xf32> to vector<8xf32>
    %202 = vector.shape_cast %201 : vector<8xf32> to vector<8x1xf32>
    %203 = arith.mulf %198, %198 : vector<8x512xf32>
    %cst_82 = arith.constant dense<0.000000e+00> : vector<8xf32>
    %204 = vector.multi_reduction <add>, %203, %cst_82 [1] : vector<8x512xf32> to vector<8xf32>
    %205 = vector.shape_cast %204 : vector<8xf32> to vector<8x1xf32>
    %cst_83 = arith.constant 0.001953125 : f32
    %206 = vector.broadcast %cst_83 : f32 to vector<8x1xf32>
    %207 = arith.mulf %202, %206 : vector<8x1xf32>
    %cst_84 = arith.constant 0.001953125 : f32
    %208 = vector.broadcast %cst_84 : f32 to vector<8x1xf32>
    %209 = arith.mulf %205, %208 : vector<8x1xf32>
    %210 = arith.mulf %207, %207 : vector<8x1xf32>
    %211 = arith.subf %209, %210 : vector<8x1xf32>
    %cst_85 = arith.constant 0.000000e+00 : f32
    %212 = vector.broadcast %cst_85 : f32 to vector<8x1xf32>
    %213 = arith.maximumf %211, %212 : vector<8x1xf32>
    %214 = vector.broadcast %207 : vector<8x1xf32> to vector<8x512xf32>
    %215 = arith.subf %198, %214 : vector<8x512xf32>
    %cst_86 = arith.constant 9.99999974E-6 : f32
    %216 = vector.broadcast %cst_86 : f32 to vector<8x1xf32>
    %217 = arith.addf %213, %216 : vector<8x1xf32>
    %218 = math.rsqrt %217 : vector<8x1xf32>
    %219 = arith.mulf %218, %199 : vector<8x1xf32>
    %220 = vector.broadcast %219 : vector<8x1xf32> to vector<8x512xf32>
    %221 = arith.mulf %215, %220 : vector<8x512xf32>
    %222 = vector.broadcast %200 : vector<8x1xf32> to vector<8x512xf32>
    %223 = arith.addf %221, %222 : vector<8x512xf32>
    %cst_87 = arith.constant 0.000000e+00 : f32
    %224 = vector.broadcast %cst_87 : f32 to vector<8x512xf32>
    %225 = arith.maximumf %223, %224 : vector<8x512xf32>
    %c34_i32 = arith.constant 34 : i32
    %226 = tpu.dynamic_rotate %225 by %c34_i32 dim 1 : vector<8x512xf32>, i32 -> vector<8x512xf32>
    %c-2_i32 = arith.constant -2 : i32
    %227 = vector.broadcast %c-2_i32 : i32 to vector<1x512xi32>
    %228 = arith.addi %0, %227 : vector<1x512xi32>
    %c0_i32_88 = arith.constant 0 : i32
    %229 = vector.broadcast %c0_i32_88 : i32 to vector<1x512xi32>
    %230 = arith.cmpi sge, %228, %229 : vector<1x512xi32>
    %c-2_i32_89 = arith.constant -2 : i32
    %231 = vector.broadcast %c-2_i32_89 : i32 to vector<1x512xi32>
    %232 = arith.addi %0, %231 : vector<1x512xi32>
    %c16_i32_90 = arith.constant 16 : i32
    %233 = vector.broadcast %c16_i32_90 : i32 to vector<1x512xi32>
    %234 = arith.cmpi slt, %232, %233 : vector<1x512xi32>
    %235 = arith.andi %230, %234 : vector<1x512xi1>
    %c-2_i32_91 = arith.constant -2 : i32
    %236 = vector.broadcast %c-2_i32_91 : i32 to vector<1x512xi32>
    %237 = arith.addi %1, %236 : vector<1x512xi32>
    %c0_i32_92 = arith.constant 0 : i32
    %238 = vector.broadcast %c0_i32_92 : i32 to vector<1x512xi32>
    %239 = arith.cmpi sge, %237, %238 : vector<1x512xi32>
    %240 = arith.andi %235, %239 : vector<1x512xi1>
    %c-2_i32_93 = arith.constant -2 : i32
    %241 = vector.broadcast %c-2_i32_93 : i32 to vector<1x512xi32>
    %242 = arith.addi %1, %241 : vector<1x512xi32>
    %c16_i32_94 = arith.constant 16 : i32
    %243 = vector.broadcast %c16_i32_94 : i32 to vector<1x512xi32>
    %244 = arith.cmpi slt, %242, %243 : vector<1x512xi32>
    %245 = arith.andi %240, %244 : vector<1x512xi1>
    %cst_95 = arith.constant 0.000000e+00 : f32
    %246 = vector.shape_cast %245 : vector<1x512xi1> to vector<1x512xi1>
    %247 = vector.broadcast %246 : vector<1x512xi1> to vector<8x512xi1>
    %248 = vector.broadcast %cst_95 : f32 to vector<8x512xf32>
    %249 = arith.select %247, %226, %248 : vector<8x512xi1>, vector<8x512xf32>
    %c32_i32 = arith.constant 32 : i32
    %250 = tpu.dynamic_rotate %225 by %c32_i32 dim 1 : vector<8x512xf32>, i32 -> vector<8x512xf32>
    %c-2_i32_96 = arith.constant -2 : i32
    %251 = vector.broadcast %c-2_i32_96 : i32 to vector<1x512xi32>
    %252 = arith.addi %0, %251 : vector<1x512xi32>
    %c0_i32_97 = arith.constant 0 : i32
    %253 = vector.broadcast %c0_i32_97 : i32 to vector<1x512xi32>
    %254 = arith.cmpi sge, %252, %253 : vector<1x512xi32>
    %c-2_i32_98 = arith.constant -2 : i32
    %255 = vector.broadcast %c-2_i32_98 : i32 to vector<1x512xi32>
    %256 = arith.addi %0, %255 : vector<1x512xi32>
    %c16_i32_99 = arith.constant 16 : i32
    %257 = vector.broadcast %c16_i32_99 : i32 to vector<1x512xi32>
    %258 = arith.cmpi slt, %256, %257 : vector<1x512xi32>
    %259 = arith.andi %254, %258 : vector<1x512xi1>
    %c0_i32_100 = arith.constant 0 : i32
    %260 = vector.broadcast %c0_i32_100 : i32 to vector<1x512xi32>
    %261 = arith.addi %1, %260 : vector<1x512xi32>
    %c0_i32_101 = arith.constant 0 : i32
    %262 = vector.broadcast %c0_i32_101 : i32 to vector<1x512xi32>
    %263 = arith.cmpi sge, %261, %262 : vector<1x512xi32>
    %264 = arith.andi %259, %263 : vector<1x512xi1>
    %c0_i32_102 = arith.constant 0 : i32
    %265 = vector.broadcast %c0_i32_102 : i32 to vector<1x512xi32>
    %266 = arith.addi %1, %265 : vector<1x512xi32>
    %c16_i32_103 = arith.constant 16 : i32
    %267 = vector.broadcast %c16_i32_103 : i32 to vector<1x512xi32>
    %268 = arith.cmpi slt, %266, %267 : vector<1x512xi32>
    %269 = arith.andi %264, %268 : vector<1x512xi1>
    %cst_104 = arith.constant 0.000000e+00 : f32
    %270 = vector.shape_cast %269 : vector<1x512xi1> to vector<1x512xi1>
    %271 = vector.broadcast %270 : vector<1x512xi1> to vector<8x512xi1>
    %272 = vector.broadcast %cst_104 : f32 to vector<8x512xf32>
    %273 = arith.select %271, %250, %272 : vector<8x512xi1>, vector<8x512xf32>
    %c30_i32 = arith.constant 30 : i32
    %274 = tpu.dynamic_rotate %225 by %c30_i32 dim 1 : vector<8x512xf32>, i32 -> vector<8x512xf32>
    %c-2_i32_105 = arith.constant -2 : i32
    %275 = vector.broadcast %c-2_i32_105 : i32 to vector<1x512xi32>
    %276 = arith.addi %0, %275 : vector<1x512xi32>
    %c0_i32_106 = arith.constant 0 : i32
    %277 = vector.broadcast %c0_i32_106 : i32 to vector<1x512xi32>
    %278 = arith.cmpi sge, %276, %277 : vector<1x512xi32>
    %c-2_i32_107 = arith.constant -2 : i32
    %279 = vector.broadcast %c-2_i32_107 : i32 to vector<1x512xi32>
    %280 = arith.addi %0, %279 : vector<1x512xi32>
    %c16_i32_108 = arith.constant 16 : i32
    %281 = vector.broadcast %c16_i32_108 : i32 to vector<1x512xi32>
    %282 = arith.cmpi slt, %280, %281 : vector<1x512xi32>
    %283 = arith.andi %278, %282 : vector<1x512xi1>
    %c2_i32 = arith.constant 2 : i32
    %284 = vector.broadcast %c2_i32 : i32 to vector<1x512xi32>
    %285 = arith.addi %1, %284 : vector<1x512xi32>
    %c0_i32_109 = arith.constant 0 : i32
    %286 = vector.broadcast %c0_i32_109 : i32 to vector<1x512xi32>
    %287 = arith.cmpi sge, %285, %286 : vector<1x512xi32>
    %288 = arith.andi %283, %287 : vector<1x512xi1>
    %c2_i32_110 = arith.constant 2 : i32
    %289 = vector.broadcast %c2_i32_110 : i32 to vector<1x512xi32>
    %290 = arith.addi %1, %289 : vector<1x512xi32>
    %c16_i32_111 = arith.constant 16 : i32
    %291 = vector.broadcast %c16_i32_111 : i32 to vector<1x512xi32>
    %292 = arith.cmpi slt, %290, %291 : vector<1x512xi32>
    %293 = arith.andi %288, %292 : vector<1x512xi1>
    %cst_112 = arith.constant 0.000000e+00 : f32
    %294 = vector.shape_cast %293 : vector<1x512xi1> to vector<1x512xi1>
    %295 = vector.broadcast %294 : vector<1x512xi1> to vector<8x512xi1>
    %296 = vector.broadcast %cst_112 : f32 to vector<8x512xf32>
    %297 = arith.select %295, %274, %296 : vector<8x512xi1>, vector<8x512xf32>
    %c2_i32_113 = arith.constant 2 : i32
    %298 = tpu.dynamic_rotate %225 by %c2_i32_113 dim 1 : vector<8x512xf32>, i32 -> vector<8x512xf32>
    %c0_i32_114 = arith.constant 0 : i32
    %299 = vector.broadcast %c0_i32_114 : i32 to vector<1x512xi32>
    %300 = arith.addi %0, %299 : vector<1x512xi32>
    %c0_i32_115 = arith.constant 0 : i32
    %301 = vector.broadcast %c0_i32_115 : i32 to vector<1x512xi32>
    %302 = arith.cmpi sge, %300, %301 : vector<1x512xi32>
    %c0_i32_116 = arith.constant 0 : i32
    %303 = vector.broadcast %c0_i32_116 : i32 to vector<1x512xi32>
    %304 = arith.addi %0, %303 : vector<1x512xi32>
    %c16_i32_117 = arith.constant 16 : i32
    %305 = vector.broadcast %c16_i32_117 : i32 to vector<1x512xi32>
    %306 = arith.cmpi slt, %304, %305 : vector<1x512xi32>
    %307 = arith.andi %302, %306 : vector<1x512xi1>
    %c-2_i32_118 = arith.constant -2 : i32
    %308 = vector.broadcast %c-2_i32_118 : i32 to vector<1x512xi32>
    %309 = arith.addi %1, %308 : vector<1x512xi32>
    %c0_i32_119 = arith.constant 0 : i32
    %310 = vector.broadcast %c0_i32_119 : i32 to vector<1x512xi32>
    %311 = arith.cmpi sge, %309, %310 : vector<1x512xi32>
    %312 = arith.andi %307, %311 : vector<1x512xi1>
    %c-2_i32_120 = arith.constant -2 : i32
    %313 = vector.broadcast %c-2_i32_120 : i32 to vector<1x512xi32>
    %314 = arith.addi %1, %313 : vector<1x512xi32>
    %c16_i32_121 = arith.constant 16 : i32
    %315 = vector.broadcast %c16_i32_121 : i32 to vector<1x512xi32>
    %316 = arith.cmpi slt, %314, %315 : vector<1x512xi32>
    %317 = arith.andi %312, %316 : vector<1x512xi1>
    %cst_122 = arith.constant 0.000000e+00 : f32
    %318 = vector.shape_cast %317 : vector<1x512xi1> to vector<1x512xi1>
    %319 = vector.broadcast %318 : vector<1x512xi1> to vector<8x512xi1>
    %320 = vector.broadcast %cst_122 : f32 to vector<8x512xf32>
    %321 = arith.select %319, %298, %320 : vector<8x512xi1>, vector<8x512xf32>
    %c510_i32 = arith.constant 510 : i32
    %322 = tpu.dynamic_rotate %225 by %c510_i32 dim 1 : vector<8x512xf32>, i32 -> vector<8x512xf32>
    %c0_i32_123 = arith.constant 0 : i32
    %323 = vector.broadcast %c0_i32_123 : i32 to vector<1x512xi32>
    %324 = arith.addi %0, %323 : vector<1x512xi32>
    %c0_i32_124 = arith.constant 0 : i32
    %325 = vector.broadcast %c0_i32_124 : i32 to vector<1x512xi32>
    %326 = arith.cmpi sge, %324, %325 : vector<1x512xi32>
    %c0_i32_125 = arith.constant 0 : i32
    %327 = vector.broadcast %c0_i32_125 : i32 to vector<1x512xi32>
    %328 = arith.addi %0, %327 : vector<1x512xi32>
    %c16_i32_126 = arith.constant 16 : i32
    %329 = vector.broadcast %c16_i32_126 : i32 to vector<1x512xi32>
    %330 = arith.cmpi slt, %328, %329 : vector<1x512xi32>
    %331 = arith.andi %326, %330 : vector<1x512xi1>
    %c2_i32_127 = arith.constant 2 : i32
    %332 = vector.broadcast %c2_i32_127 : i32 to vector<1x512xi32>
    %333 = arith.addi %1, %332 : vector<1x512xi32>
    %c0_i32_128 = arith.constant 0 : i32
    %334 = vector.broadcast %c0_i32_128 : i32 to vector<1x512xi32>
    %335 = arith.cmpi sge, %333, %334 : vector<1x512xi32>
    %336 = arith.andi %331, %335 : vector<1x512xi1>
    %c2_i32_129 = arith.constant 2 : i32
    %337 = vector.broadcast %c2_i32_129 : i32 to vector<1x512xi32>
    %338 = arith.addi %1, %337 : vector<1x512xi32>
    %c16_i32_130 = arith.constant 16 : i32
    %339 = vector.broadcast %c16_i32_130 : i32 to vector<1x512xi32>
    %340 = arith.cmpi slt, %338, %339 : vector<1x512xi32>
    %341 = arith.andi %336, %340 : vector<1x512xi1>
    %cst_131 = arith.constant 0.000000e+00 : f32
    %342 = vector.shape_cast %341 : vector<1x512xi1> to vector<1x512xi1>
    %343 = vector.broadcast %342 : vector<1x512xi1> to vector<8x512xi1>
    %344 = vector.broadcast %cst_131 : f32 to vector<8x512xf32>
    %345 = arith.select %343, %322, %344 : vector<8x512xi1>, vector<8x512xf32>
    %c482_i32 = arith.constant 482 : i32
    %346 = tpu.dynamic_rotate %225 by %c482_i32 dim 1 : vector<8x512xf32>, i32 -> vector<8x512xf32>
    %c2_i32_132 = arith.constant 2 : i32
    %347 = vector.broadcast %c2_i32_132 : i32 to vector<1x512xi32>
    %348 = arith.addi %0, %347 : vector<1x512xi32>
    %c0_i32_133 = arith.constant 0 : i32
    %349 = vector.broadcast %c0_i32_133 : i32 to vector<1x512xi32>
    %350 = arith.cmpi sge, %348, %349 : vector<1x512xi32>
    %c2_i32_134 = arith.constant 2 : i32
    %351 = vector.broadcast %c2_i32_134 : i32 to vector<1x512xi32>
    %352 = arith.addi %0, %351 : vector<1x512xi32>
    %c16_i32_135 = arith.constant 16 : i32
    %353 = vector.broadcast %c16_i32_135 : i32 to vector<1x512xi32>
    %354 = arith.cmpi slt, %352, %353 : vector<1x512xi32>
    %355 = arith.andi %350, %354 : vector<1x512xi1>
    %c-2_i32_136 = arith.constant -2 : i32
    %356 = vector.broadcast %c-2_i32_136 : i32 to vector<1x512xi32>
    %357 = arith.addi %1, %356 : vector<1x512xi32>
    %c0_i32_137 = arith.constant 0 : i32
    %358 = vector.broadcast %c0_i32_137 : i32 to vector<1x512xi32>
    %359 = arith.cmpi sge, %357, %358 : vector<1x512xi32>
    %360 = arith.andi %355, %359 : vector<1x512xi1>
    %c-2_i32_138 = arith.constant -2 : i32
    %361 = vector.broadcast %c-2_i32_138 : i32 to vector<1x512xi32>
    %362 = arith.addi %1, %361 : vector<1x512xi32>
    %c16_i32_139 = arith.constant 16 : i32
    %363 = vector.broadcast %c16_i32_139 : i32 to vector<1x512xi32>
    %364 = arith.cmpi slt, %362, %363 : vector<1x512xi32>
    %365 = arith.andi %360, %364 : vector<1x512xi1>
    %cst_140 = arith.constant 0.000000e+00 : f32
    %366 = vector.shape_cast %365 : vector<1x512xi1> to vector<1x512xi1>
    %367 = vector.broadcast %366 : vector<1x512xi1> to vector<8x512xi1>
    %368 = vector.broadcast %cst_140 : f32 to vector<8x512xf32>
    %369 = arith.select %367, %346, %368 : vector<8x512xi1>, vector<8x512xf32>
    %c480_i32 = arith.constant 480 : i32
    %370 = tpu.dynamic_rotate %225 by %c480_i32 dim 1 : vector<8x512xf32>, i32 -> vector<8x512xf32>
    %c2_i32_141 = arith.constant 2 : i32
    %371 = vector.broadcast %c2_i32_141 : i32 to vector<1x512xi32>
    %372 = arith.addi %0, %371 : vector<1x512xi32>
    %c0_i32_142 = arith.constant 0 : i32
    %373 = vector.broadcast %c0_i32_142 : i32 to vector<1x512xi32>
    %374 = arith.cmpi sge, %372, %373 : vector<1x512xi32>
    %c2_i32_143 = arith.constant 2 : i32
    %375 = vector.broadcast %c2_i32_143 : i32 to vector<1x512xi32>
    %376 = arith.addi %0, %375 : vector<1x512xi32>
    %c16_i32_144 = arith.constant 16 : i32
    %377 = vector.broadcast %c16_i32_144 : i32 to vector<1x512xi32>
    %378 = arith.cmpi slt, %376, %377 : vector<1x512xi32>
    %379 = arith.andi %374, %378 : vector<1x512xi1>
    %c0_i32_145 = arith.constant 0 : i32
    %380 = vector.broadcast %c0_i32_145 : i32 to vector<1x512xi32>
    %381 = arith.addi %1, %380 : vector<1x512xi32>
    %c0_i32_146 = arith.constant 0 : i32
    %382 = vector.broadcast %c0_i32_146 : i32 to vector<1x512xi32>
    %383 = arith.cmpi sge, %381, %382 : vector<1x512xi32>
    %384 = arith.andi %379, %383 : vector<1x512xi1>
    %c0_i32_147 = arith.constant 0 : i32
    %385 = vector.broadcast %c0_i32_147 : i32 to vector<1x512xi32>
    %386 = arith.addi %1, %385 : vector<1x512xi32>
    %c16_i32_148 = arith.constant 16 : i32
    %387 = vector.broadcast %c16_i32_148 : i32 to vector<1x512xi32>
    %388 = arith.cmpi slt, %386, %387 : vector<1x512xi32>
    %389 = arith.andi %384, %388 : vector<1x512xi1>
    %cst_149 = arith.constant 0.000000e+00 : f32
    %390 = vector.shape_cast %389 : vector<1x512xi1> to vector<1x512xi1>
    %391 = vector.broadcast %390 : vector<1x512xi1> to vector<8x512xi1>
    %392 = vector.broadcast %cst_149 : f32 to vector<8x512xf32>
    %393 = arith.select %391, %370, %392 : vector<8x512xi1>, vector<8x512xf32>
    %c478_i32 = arith.constant 478 : i32
    %394 = tpu.dynamic_rotate %225 by %c478_i32 dim 1 : vector<8x512xf32>, i32 -> vector<8x512xf32>
    %c2_i32_150 = arith.constant 2 : i32
    %395 = vector.broadcast %c2_i32_150 : i32 to vector<1x512xi32>
    %396 = arith.addi %0, %395 : vector<1x512xi32>
    %c0_i32_151 = arith.constant 0 : i32
    %397 = vector.broadcast %c0_i32_151 : i32 to vector<1x512xi32>
    %398 = arith.cmpi sge, %396, %397 : vector<1x512xi32>
    %c2_i32_152 = arith.constant 2 : i32
    %399 = vector.broadcast %c2_i32_152 : i32 to vector<1x512xi32>
    %400 = arith.addi %0, %399 : vector<1x512xi32>
    %c16_i32_153 = arith.constant 16 : i32
    %401 = vector.broadcast %c16_i32_153 : i32 to vector<1x512xi32>
    %402 = arith.cmpi slt, %400, %401 : vector<1x512xi32>
    %403 = arith.andi %398, %402 : vector<1x512xi1>
    %c2_i32_154 = arith.constant 2 : i32
    %404 = vector.broadcast %c2_i32_154 : i32 to vector<1x512xi32>
    %405 = arith.addi %1, %404 : vector<1x512xi32>
    %c0_i32_155 = arith.constant 0 : i32
    %406 = vector.broadcast %c0_i32_155 : i32 to vector<1x512xi32>
    %407 = arith.cmpi sge, %405, %406 : vector<1x512xi32>
    %408 = arith.andi %403, %407 : vector<1x512xi1>
    %c2_i32_156 = arith.constant 2 : i32
    %409 = vector.broadcast %c2_i32_156 : i32 to vector<1x512xi32>
    %410 = arith.addi %1, %409 : vector<1x512xi32>
    %c16_i32_157 = arith.constant 16 : i32
    %411 = vector.broadcast %c16_i32_157 : i32 to vector<1x512xi32>
    %412 = arith.cmpi slt, %410, %411 : vector<1x512xi32>
    %413 = arith.andi %408, %412 : vector<1x512xi1>
    %cst_158 = arith.constant 0.000000e+00 : f32
    %414 = vector.shape_cast %413 : vector<1x512xi1> to vector<1x512xi1>
    %415 = vector.broadcast %414 : vector<1x512xi1> to vector<8x512xi1>
    %416 = vector.broadcast %cst_158 : f32 to vector<8x512xf32>
    %417 = arith.select %415, %394, %416 : vector<8x512xi1>, vector<8x512xf32>
    %418 = tpu.concatenate %249, %273, %297, %321, %225, %345, %369, %393, %417 in 0 : vector<8x512xf32>, vector<8x512xf32>, vector<8x512xf32>, vector<8x512xf32>, vector<8x512xf32>, vector<8x512xf32>, vector<8x512xf32>, vector<8x512xf32>, vector<8x512xf32> -> vector<72x512xf32>
    %419 = arith.truncf %418 : vector<72x512xf32> to vector<72x512xbf16>
    %c0_159 = arith.constant 0 : index
    %c0_160 = arith.constant 0 : index
    %420 = vector.load %arg4[%c0_159, %c0_160] : memref<8x72xbf16, #tpu.memory_space<vmem>>, vector<8x72xbf16>
    %cst_161 = arith.constant dense<0.000000e+00> : vector<8x512xf32>
    %421 = tpu.matmul %420, %419, %cst_161 {dimension_numbers = #tpu.dot_dimension_numbers<[1], [0], [0], [1], [0, 0, 1, 1], [], []>} : vector<8x72xbf16>, vector<72x512xbf16>, vector<8x512xf32> -> vector<8x512xf32>
    %c51_i32 = arith.constant 51 : i32
    %422 = tpu.dynamic_rotate %225 by %c51_i32 dim 1 : vector<8x512xf32>, i32 -> vector<8x512xf32>
    %c-3_i32 = arith.constant -3 : i32
    %423 = vector.broadcast %c-3_i32 : i32 to vector<1x512xi32>
    %424 = arith.addi %0, %423 : vector<1x512xi32>
    %c0_i32_162 = arith.constant 0 : i32
    %425 = vector.broadcast %c0_i32_162 : i32 to vector<1x512xi32>
    %426 = arith.cmpi sge, %424, %425 : vector<1x512xi32>
    %c-3_i32_163 = arith.constant -3 : i32
    %427 = vector.broadcast %c-3_i32_163 : i32 to vector<1x512xi32>
    %428 = arith.addi %0, %427 : vector<1x512xi32>
    %c16_i32_164 = arith.constant 16 : i32
    %429 = vector.broadcast %c16_i32_164 : i32 to vector<1x512xi32>
    %430 = arith.cmpi slt, %428, %429 : vector<1x512xi32>
    %431 = arith.andi %426, %430 : vector<1x512xi1>
    %c-3_i32_165 = arith.constant -3 : i32
    %432 = vector.broadcast %c-3_i32_165 : i32 to vector<1x512xi32>
    %433 = arith.addi %1, %432 : vector<1x512xi32>
    %c0_i32_166 = arith.constant 0 : i32
    %434 = vector.broadcast %c0_i32_166 : i32 to vector<1x512xi32>
    %435 = arith.cmpi sge, %433, %434 : vector<1x512xi32>
    %436 = arith.andi %431, %435 : vector<1x512xi1>
    %c-3_i32_167 = arith.constant -3 : i32
    %437 = vector.broadcast %c-3_i32_167 : i32 to vector<1x512xi32>
    %438 = arith.addi %1, %437 : vector<1x512xi32>
    %c16_i32_168 = arith.constant 16 : i32
    %439 = vector.broadcast %c16_i32_168 : i32 to vector<1x512xi32>
    %440 = arith.cmpi slt, %438, %439 : vector<1x512xi32>
    %441 = arith.andi %436, %440 : vector<1x512xi1>
    %cst_169 = arith.constant 0.000000e+00 : f32
    %442 = vector.shape_cast %441 : vector<1x512xi1> to vector<1x512xi1>
    %443 = vector.broadcast %442 : vector<1x512xi1> to vector<8x512xi1>
    %444 = vector.broadcast %cst_169 : f32 to vector<8x512xf32>
    %445 = arith.select %443, %422, %444 : vector<8x512xi1>, vector<8x512xf32>
    %c48_i32 = arith.constant 48 : i32
    %446 = tpu.dynamic_rotate %225 by %c48_i32 dim 1 : vector<8x512xf32>, i32 -> vector<8x512xf32>
    %c-3_i32_170 = arith.constant -3 : i32
    %447 = vector.broadcast %c-3_i32_170 : i32 to vector<1x512xi32>
    %448 = arith.addi %0, %447 : vector<1x512xi32>
    %c0_i32_171 = arith.constant 0 : i32
    %449 = vector.broadcast %c0_i32_171 : i32 to vector<1x512xi32>
    %450 = arith.cmpi sge, %448, %449 : vector<1x512xi32>
    %c-3_i32_172 = arith.constant -3 : i32
    %451 = vector.broadcast %c-3_i32_172 : i32 to vector<1x512xi32>
    %452 = arith.addi %0, %451 : vector<1x512xi32>
    %c16_i32_173 = arith.constant 16 : i32
    %453 = vector.broadcast %c16_i32_173 : i32 to vector<1x512xi32>
    %454 = arith.cmpi slt, %452, %453 : vector<1x512xi32>
    %455 = arith.andi %450, %454 : vector<1x512xi1>
    %c0_i32_174 = arith.constant 0 : i32
    %456 = vector.broadcast %c0_i32_174 : i32 to vector<1x512xi32>
    %457 = arith.addi %1, %456 : vector<1x512xi32>
    %c0_i32_175 = arith.constant 0 : i32
    %458 = vector.broadcast %c0_i32_175 : i32 to vector<1x512xi32>
    %459 = arith.cmpi sge, %457, %458 : vector<1x512xi32>
    %460 = arith.andi %455, %459 : vector<1x512xi1>
    %c0_i32_176 = arith.constant 0 : i32
    %461 = vector.broadcast %c0_i32_176 : i32 to vector<1x512xi32>
    %462 = arith.addi %1, %461 : vector<1x512xi32>
    %c16_i32_177 = arith.constant 16 : i32
    %463 = vector.broadcast %c16_i32_177 : i32 to vector<1x512xi32>
    %464 = arith.cmpi slt, %462, %463 : vector<1x512xi32>
    %465 = arith.andi %460, %464 : vector<1x512xi1>
    %cst_178 = arith.constant 0.000000e+00 : f32
    %466 = vector.shape_cast %465 : vector<1x512xi1> to vector<1x512xi1>
    %467 = vector.broadcast %466 : vector<1x512xi1> to vector<8x512xi1>
    %468 = vector.broadcast %cst_178 : f32 to vector<8x512xf32>
    %469 = arith.select %467, %446, %468 : vector<8x512xi1>, vector<8x512xf32>
    %c45_i32 = arith.constant 45 : i32
    %470 = tpu.dynamic_rotate %225 by %c45_i32 dim 1 : vector<8x512xf32>, i32 -> vector<8x512xf32>
    %c-3_i32_179 = arith.constant -3 : i32
    %471 = vector.broadcast %c-3_i32_179 : i32 to vector<1x512xi32>
    %472 = arith.addi %0, %471 : vector<1x512xi32>
    %c0_i32_180 = arith.constant 0 : i32
    %473 = vector.broadcast %c0_i32_180 : i32 to vector<1x512xi32>
    %474 = arith.cmpi sge, %472, %473 : vector<1x512xi32>
    %c-3_i32_181 = arith.constant -3 : i32
    %475 = vector.broadcast %c-3_i32_181 : i32 to vector<1x512xi32>
    %476 = arith.addi %0, %475 : vector<1x512xi32>
    %c16_i32_182 = arith.constant 16 : i32
    %477 = vector.broadcast %c16_i32_182 : i32 to vector<1x512xi32>
    %478 = arith.cmpi slt, %476, %477 : vector<1x512xi32>
    %479 = arith.andi %474, %478 : vector<1x512xi1>
    %c3_i32 = arith.constant 3 : i32
    %480 = vector.broadcast %c3_i32 : i32 to vector<1x512xi32>
    %481 = arith.addi %1, %480 : vector<1x512xi32>
    %c0_i32_183 = arith.constant 0 : i32
    %482 = vector.broadcast %c0_i32_183 : i32 to vector<1x512xi32>
    %483 = arith.cmpi sge, %481, %482 : vector<1x512xi32>
    %484 = arith.andi %479, %483 : vector<1x512xi1>
    %c3_i32_184 = arith.constant 3 : i32
    %485 = vector.broadcast %c3_i32_184 : i32 to vector<1x512xi32>
    %486 = arith.addi %1, %485 : vector<1x512xi32>
    %c16_i32_185 = arith.constant 16 : i32
    %487 = vector.broadcast %c16_i32_185 : i32 to vector<1x512xi32>
    %488 = arith.cmpi slt, %486, %487 : vector<1x512xi32>
    %489 = arith.andi %484, %488 : vector<1x512xi1>
    %cst_186 = arith.constant 0.000000e+00 : f32
    %490 = vector.shape_cast %489 : vector<1x512xi1> to vector<1x512xi1>
    %491 = vector.broadcast %490 : vector<1x512xi1> to vector<8x512xi1>
    %492 = vector.broadcast %cst_186 : f32 to vector<8x512xf32>
    %493 = arith.select %491, %470, %492 : vector<8x512xi1>, vector<8x512xf32>
    %c3_i32_187 = arith.constant 3 : i32
    %494 = tpu.dynamic_rotate %225 by %c3_i32_187 dim 1 : vector<8x512xf32>, i32 -> vector<8x512xf32>
    %c0_i32_188 = arith.constant 0 : i32
    %495 = vector.broadcast %c0_i32_188 : i32 to vector<1x512xi32>
    %496 = arith.addi %0, %495 : vector<1x512xi32>
    %c0_i32_189 = arith.constant 0 : i32
    %497 = vector.broadcast %c0_i32_189 : i32 to vector<1x512xi32>
    %498 = arith.cmpi sge, %496, %497 : vector<1x512xi32>
    %c0_i32_190 = arith.constant 0 : i32
    %499 = vector.broadcast %c0_i32_190 : i32 to vector<1x512xi32>
    %500 = arith.addi %0, %499 : vector<1x512xi32>
    %c16_i32_191 = arith.constant 16 : i32
    %501 = vector.broadcast %c16_i32_191 : i32 to vector<1x512xi32>
    %502 = arith.cmpi slt, %500, %501 : vector<1x512xi32>
    %503 = arith.andi %498, %502 : vector<1x512xi1>
    %c-3_i32_192 = arith.constant -3 : i32
    %504 = vector.broadcast %c-3_i32_192 : i32 to vector<1x512xi32>
    %505 = arith.addi %1, %504 : vector<1x512xi32>
    %c0_i32_193 = arith.constant 0 : i32
    %506 = vector.broadcast %c0_i32_193 : i32 to vector<1x512xi32>
    %507 = arith.cmpi sge, %505, %506 : vector<1x512xi32>
    %508 = arith.andi %503, %507 : vector<1x512xi1>
    %c-3_i32_194 = arith.constant -3 : i32
    %509 = vector.broadcast %c-3_i32_194 : i32 to vector<1x512xi32>
    %510 = arith.addi %1, %509 : vector<1x512xi32>
    %c16_i32_195 = arith.constant 16 : i32
    %511 = vector.broadcast %c16_i32_195 : i32 to vector<1x512xi32>
    %512 = arith.cmpi slt, %510, %511 : vector<1x512xi32>
    %513 = arith.andi %508, %512 : vector<1x512xi1>
    %cst_196 = arith.constant 0.000000e+00 : f32
    %514 = vector.shape_cast %513 : vector<1x512xi1> to vector<1x512xi1>
    %515 = vector.broadcast %514 : vector<1x512xi1> to vector<8x512xi1>
    %516 = vector.broadcast %cst_196 : f32 to vector<8x512xf32>
    %517 = arith.select %515, %494, %516 : vector<8x512xi1>, vector<8x512xf32>
    %c509_i32 = arith.constant 509 : i32
    %518 = tpu.dynamic_rotate %225 by %c509_i32 dim 1 : vector<8x512xf32>, i32 -> vector<8x512xf32>
    %c0_i32_197 = arith.constant 0 : i32
    %519 = vector.broadcast %c0_i32_197 : i32 to vector<1x512xi32>
    %520 = arith.addi %0, %519 : vector<1x512xi32>
    %c0_i32_198 = arith.constant 0 : i32
    %521 = vector.broadcast %c0_i32_198 : i32 to vector<1x512xi32>
    %522 = arith.cmpi sge, %520, %521 : vector<1x512xi32>
    %c0_i32_199 = arith.constant 0 : i32
    %523 = vector.broadcast %c0_i32_199 : i32 to vector<1x512xi32>
    %524 = arith.addi %0, %523 : vector<1x512xi32>
    %c16_i32_200 = arith.constant 16 : i32
    %525 = vector.broadcast %c16_i32_200 : i32 to vector<1x512xi32>
    %526 = arith.cmpi slt, %524, %525 : vector<1x512xi32>
    %527 = arith.andi %522, %526 : vector<1x512xi1>
    %c3_i32_201 = arith.constant 3 : i32
    %528 = vector.broadcast %c3_i32_201 : i32 to vector<1x512xi32>
    %529 = arith.addi %1, %528 : vector<1x512xi32>
    %c0_i32_202 = arith.constant 0 : i32
    %530 = vector.broadcast %c0_i32_202 : i32 to vector<1x512xi32>
    %531 = arith.cmpi sge, %529, %530 : vector<1x512xi32>
    %532 = arith.andi %527, %531 : vector<1x512xi1>
    %c3_i32_203 = arith.constant 3 : i32
    %533 = vector.broadcast %c3_i32_203 : i32 to vector<1x512xi32>
    %534 = arith.addi %1, %533 : vector<1x512xi32>
    %c16_i32_204 = arith.constant 16 : i32
    %535 = vector.broadcast %c16_i32_204 : i32 to vector<1x512xi32>
    %536 = arith.cmpi slt, %534, %535 : vector<1x512xi32>
    %537 = arith.andi %532, %536 : vector<1x512xi1>
    %cst_205 = arith.constant 0.000000e+00 : f32
    %538 = vector.shape_cast %537 : vector<1x512xi1> to vector<1x512xi1>
    %539 = vector.broadcast %538 : vector<1x512xi1> to vector<8x512xi1>
    %540 = vector.broadcast %cst_205 : f32 to vector<8x512xf32>
    %541 = arith.select %539, %518, %540 : vector<8x512xi1>, vector<8x512xf32>
    %c467_i32 = arith.constant 467 : i32
    %542 = tpu.dynamic_rotate %225 by %c467_i32 dim 1 : vector<8x512xf32>, i32 -> vector<8x512xf32>
    %c3_i32_206 = arith.constant 3 : i32
    %543 = vector.broadcast %c3_i32_206 : i32 to vector<1x512xi32>
    %544 = arith.addi %0, %543 : vector<1x512xi32>
    %c0_i32_207 = arith.constant 0 : i32
    %545 = vector.broadcast %c0_i32_207 : i32 to vector<1x512xi32>
    %546 = arith.cmpi sge, %544, %545 : vector<1x512xi32>
    %c3_i32_208 = arith.constant 3 : i32
    %547 = vector.broadcast %c3_i32_208 : i32 to vector<1x512xi32>
    %548 = arith.addi %0, %547 : vector<1x512xi32>
    %c16_i32_209 = arith.constant 16 : i32
    %549 = vector.broadcast %c16_i32_209 : i32 to vector<1x512xi32>
    %550 = arith.cmpi slt, %548, %549 : vector<1x512xi32>
    %551 = arith.andi %546, %550 : vector<1x512xi1>
    %c-3_i32_210 = arith.constant -3 : i32
    %552 = vector.broadcast %c-3_i32_210 : i32 to vector<1x512xi32>
    %553 = arith.addi %1, %552 : vector<1x512xi32>
    %c0_i32_211 = arith.constant 0 : i32
    %554 = vector.broadcast %c0_i32_211 : i32 to vector<1x512xi32>
    %555 = arith.cmpi sge, %553, %554 : vector<1x512xi32>
    %556 = arith.andi %551, %555 : vector<1x512xi1>
    %c-3_i32_212 = arith.constant -3 : i32
    %557 = vector.broadcast %c-3_i32_212 : i32 to vector<1x512xi32>
    %558 = arith.addi %1, %557 : vector<1x512xi32>
    %c16_i32_213 = arith.constant 16 : i32
    %559 = vector.broadcast %c16_i32_213 : i32 to vector<1x512xi32>
    %560 = arith.cmpi slt, %558, %559 : vector<1x512xi32>
    %561 = arith.andi %556, %560 : vector<1x512xi1>
    %cst_214 = arith.constant 0.000000e+00 : f32
    %562 = vector.shape_cast %561 : vector<1x512xi1> to vector<1x512xi1>
    %563 = vector.broadcast %562 : vector<1x512xi1> to vector<8x512xi1>
    %564 = vector.broadcast %cst_214 : f32 to vector<8x512xf32>
    %565 = arith.select %563, %542, %564 : vector<8x512xi1>, vector<8x512xf32>
    %c464_i32 = arith.constant 464 : i32
    %566 = tpu.dynamic_rotate %225 by %c464_i32 dim 1 : vector<8x512xf32>, i32 -> vector<8x512xf32>
    %c3_i32_215 = arith.constant 3 : i32
    %567 = vector.broadcast %c3_i32_215 : i32 to vector<1x512xi32>
    %568 = arith.addi %0, %567 : vector<1x512xi32>
    %c0_i32_216 = arith.constant 0 : i32
    %569 = vector.broadcast %c0_i32_216 : i32 to vector<1x512xi32>
    %570 = arith.cmpi sge, %568, %569 : vector<1x512xi32>
    %c3_i32_217 = arith.constant 3 : i32
    %571 = vector.broadcast %c3_i32_217 : i32 to vector<1x512xi32>
    %572 = arith.addi %0, %571 : vector<1x512xi32>
    %c16_i32_218 = arith.constant 16 : i32
    %573 = vector.broadcast %c16_i32_218 : i32 to vector<1x512xi32>
    %574 = arith.cmpi slt, %572, %573 : vector<1x512xi32>
    %575 = arith.andi %570, %574 : vector<1x512xi1>
    %c0_i32_219 = arith.constant 0 : i32
    %576 = vector.broadcast %c0_i32_219 : i32 to vector<1x512xi32>
    %577 = arith.addi %1, %576 : vector<1x512xi32>
    %c0_i32_220 = arith.constant 0 : i32
    %578 = vector.broadcast %c0_i32_220 : i32 to vector<1x512xi32>
    %579 = arith.cmpi sge, %577, %578 : vector<1x512xi32>
    %580 = arith.andi %575, %579 : vector<1x512xi1>
    %c0_i32_221 = arith.constant 0 : i32
    %581 = vector.broadcast %c0_i32_221 : i32 to vector<1x512xi32>
    %582 = arith.addi %1, %581 : vector<1x512xi32>
    %c16_i32_222 = arith.constant 16 : i32
    %583 = vector.broadcast %c16_i32_222 : i32 to vector<1x512xi32>
    %584 = arith.cmpi slt, %582, %583 : vector<1x512xi32>
    %585 = arith.andi %580, %584 : vector<1x512xi1>
    %cst_223 = arith.constant 0.000000e+00 : f32
    %586 = vector.shape_cast %585 : vector<1x512xi1> to vector<1x512xi1>
    %587 = vector.broadcast %586 : vector<1x512xi1> to vector<8x512xi1>
    %588 = vector.broadcast %cst_223 : f32 to vector<8x512xf32>
    %589 = arith.select %587, %566, %588 : vector<8x512xi1>, vector<8x512xf32>
    %c461_i32 = arith.constant 461 : i32
    %590 = tpu.dynamic_rotate %225 by %c461_i32 dim 1 : vector<8x512xf32>, i32 -> vector<8x512xf32>
    %c3_i32_224 = arith.constant 3 : i32
    %591 = vector.broadcast %c3_i32_224 : i32 to vector<1x512xi32>
    %592 = arith.addi %0, %591 : vector<1x512xi32>
    %c0_i32_225 = arith.constant 0 : i32
    %593 = vector.broadcast %c0_i32_225 : i32 to vector<1x512xi32>
    %594 = arith.cmpi sge, %592, %593 : vector<1x512xi32>
    %c3_i32_226 = arith.constant 3 : i32
    %595 = vector.broadcast %c3_i32_226 : i32 to vector<1x512xi32>
    %596 = arith.addi %0, %595 : vector<1x512xi32>
    %c16_i32_227 = arith.constant 16 : i32
    %597 = vector.broadcast %c16_i32_227 : i32 to vector<1x512xi32>
    %598 = arith.cmpi slt, %596, %597 : vector<1x512xi32>
    %599 = arith.andi %594, %598 : vector<1x512xi1>
    %c3_i32_228 = arith.constant 3 : i32
    %600 = vector.broadcast %c3_i32_228 : i32 to vector<1x512xi32>
    %601 = arith.addi %1, %600 : vector<1x512xi32>
    %c0_i32_229 = arith.constant 0 : i32
    %602 = vector.broadcast %c0_i32_229 : i32 to vector<1x512xi32>
    %603 = arith.cmpi sge, %601, %602 : vector<1x512xi32>
    %604 = arith.andi %599, %603 : vector<1x512xi1>
    %c3_i32_230 = arith.constant 3 : i32
    %605 = vector.broadcast %c3_i32_230 : i32 to vector<1x512xi32>
    %606 = arith.addi %1, %605 : vector<1x512xi32>
    %c16_i32_231 = arith.constant 16 : i32
    %607 = vector.broadcast %c16_i32_231 : i32 to vector<1x512xi32>
    %608 = arith.cmpi slt, %606, %607 : vector<1x512xi32>
    %609 = arith.andi %604, %608 : vector<1x512xi1>
    %cst_232 = arith.constant 0.000000e+00 : f32
    %610 = vector.shape_cast %609 : vector<1x512xi1> to vector<1x512xi1>
    %611 = vector.broadcast %610 : vector<1x512xi1> to vector<8x512xi1>
    %612 = vector.broadcast %cst_232 : f32 to vector<8x512xf32>
    %613 = arith.select %611, %590, %612 : vector<8x512xi1>, vector<8x512xf32>
    %614 = tpu.concatenate %445, %469, %493, %517, %225, %541, %565, %589, %613 in 0 : vector<8x512xf32>, vector<8x512xf32>, vector<8x512xf32>, vector<8x512xf32>, vector<8x512xf32>, vector<8x512xf32>, vector<8x512xf32>, vector<8x512xf32>, vector<8x512xf32> -> vector<72x512xf32>
    %615 = arith.truncf %614 : vector<72x512xf32> to vector<72x512xbf16>
    %c0_233 = arith.constant 0 : index
    %c0_234 = arith.constant 0 : index
    %616 = vector.load %arg5[%c0_233, %c0_234] : memref<8x72xbf16, #tpu.memory_space<vmem>>, vector<8x72xbf16>
    %cst_235 = arith.constant dense<0.000000e+00> : vector<8x512xf32>
    %617 = tpu.matmul %616, %615, %cst_235 {dimension_numbers = #tpu.dot_dimension_numbers<[1], [0], [0], [1], [0, 0, 1, 1], [], []>} : vector<8x72xbf16>, vector<72x512xbf16>, vector<8x512xf32> -> vector<8x512xf32>
    %618 = tpu.concatenate %421, %617 in 0 : vector<8x512xf32>, vector<8x512xf32> -> vector<16x512xf32>
    %c0_236 = arith.constant 0 : index
    %c0_237 = arith.constant 0 : index
    %619 = vector.load %arg10[%c0_236, %c0_237] : memref<16x1xf32, #tpu.memory_space<vmem>>, vector<16x1xf32>
    %c0_238 = arith.constant 0 : index
    %c0_239 = arith.constant 0 : index
    %620 = vector.load %arg11[%c0_238, %c0_239] : memref<16x1xf32, #tpu.memory_space<vmem>>, vector<16x1xf32>
    %cst_240 = arith.constant dense<0.000000e+00> : vector<16xf32>
    %621 = vector.multi_reduction <add>, %618, %cst_240 [1] : vector<16x512xf32> to vector<16xf32>
    %622 = vector.shape_cast %621 : vector<16xf32> to vector<16x1xf32>
    %623 = arith.mulf %618, %618 : vector<16x512xf32>
    %cst_241 = arith.constant dense<0.000000e+00> : vector<16xf32>
    %624 = vector.multi_reduction <add>, %623, %cst_241 [1] : vector<16x512xf32> to vector<16xf32>
    %625 = vector.shape_cast %624 : vector<16xf32> to vector<16x1xf32>
    %cst_242 = arith.constant 0.001953125 : f32
    %626 = vector.broadcast %cst_242 : f32 to vector<16x1xf32>
    %627 = arith.mulf %622, %626 : vector<16x1xf32>
    %cst_243 = arith.constant 0.001953125 : f32
    %628 = vector.broadcast %cst_243 : f32 to vector<16x1xf32>
    %629 = arith.mulf %625, %628 : vector<16x1xf32>
    %630 = arith.mulf %627, %627 : vector<16x1xf32>
    %631 = arith.subf %629, %630 : vector<16x1xf32>
    %cst_244 = arith.constant 0.000000e+00 : f32
    %632 = vector.broadcast %cst_244 : f32 to vector<16x1xf32>
    %633 = arith.maximumf %631, %632 : vector<16x1xf32>
    %634 = vector.broadcast %627 : vector<16x1xf32> to vector<16x512xf32>
    %635 = arith.subf %618, %634 : vector<16x512xf32>
    %cst_245 = arith.constant 9.99999974E-6 : f32
    %636 = vector.broadcast %cst_245 : f32 to vector<16x1xf32>
    %637 = arith.addf %633, %636 : vector<16x1xf32>
    %638 = math.rsqrt %637 : vector<16x1xf32>
    %639 = arith.mulf %638, %619 : vector<16x1xf32>
    %640 = vector.broadcast %639 : vector<16x1xf32> to vector<16x512xf32>
    %641 = arith.mulf %635, %640 : vector<16x512xf32>
    %642 = vector.broadcast %620 : vector<16x1xf32> to vector<16x512xf32>
    %643 = arith.addf %641, %642 : vector<16x512xf32>
    %cst_246 = arith.constant 0.000000e+00 : f32
    %644 = vector.broadcast %cst_246 : f32 to vector<16x512xf32>
    %645 = arith.maximumf %643, %644 : vector<16x512xf32>
    %c17_i32_247 = arith.constant 17 : i32
    %646 = tpu.dynamic_rotate %645 by %c17_i32_247 dim 1 : vector<16x512xf32>, i32 -> vector<16x512xf32>
    %c-1_i32_248 = arith.constant -1 : i32
    %647 = vector.broadcast %c-1_i32_248 : i32 to vector<1x512xi32>
    %648 = arith.addi %0, %647 : vector<1x512xi32>
    %c0_i32_249 = arith.constant 0 : i32
    %649 = vector.broadcast %c0_i32_249 : i32 to vector<1x512xi32>
    %650 = arith.cmpi sge, %648, %649 : vector<1x512xi32>
    %c-1_i32_250 = arith.constant -1 : i32
    %651 = vector.broadcast %c-1_i32_250 : i32 to vector<1x512xi32>
    %652 = arith.addi %0, %651 : vector<1x512xi32>
    %c16_i32_251 = arith.constant 16 : i32
    %653 = vector.broadcast %c16_i32_251 : i32 to vector<1x512xi32>
    %654 = arith.cmpi slt, %652, %653 : vector<1x512xi32>
    %655 = arith.andi %650, %654 : vector<1x512xi1>
    %c-1_i32_252 = arith.constant -1 : i32
    %656 = vector.broadcast %c-1_i32_252 : i32 to vector<1x512xi32>
    %657 = arith.addi %1, %656 : vector<1x512xi32>
    %c0_i32_253 = arith.constant 0 : i32
    %658 = vector.broadcast %c0_i32_253 : i32 to vector<1x512xi32>
    %659 = arith.cmpi sge, %657, %658 : vector<1x512xi32>
    %660 = arith.andi %655, %659 : vector<1x512xi1>
    %c-1_i32_254 = arith.constant -1 : i32
    %661 = vector.broadcast %c-1_i32_254 : i32 to vector<1x512xi32>
    %662 = arith.addi %1, %661 : vector<1x512xi32>
    %c16_i32_255 = arith.constant 16 : i32
    %663 = vector.broadcast %c16_i32_255 : i32 to vector<1x512xi32>
    %664 = arith.cmpi slt, %662, %663 : vector<1x512xi32>
    %665 = arith.andi %660, %664 : vector<1x512xi1>
    %cst_256 = arith.constant 0.000000e+00 : f32
    %666 = vector.shape_cast %665 : vector<1x512xi1> to vector<1x512xi1>
    %667 = vector.broadcast %666 : vector<1x512xi1> to vector<16x512xi1>
    %668 = vector.broadcast %cst_256 : f32 to vector<16x512xf32>
    %669 = arith.select %667, %646, %668 : vector<16x512xi1>, vector<16x512xf32>
    %c16_i32_257 = arith.constant 16 : i32
    %670 = tpu.dynamic_rotate %645 by %c16_i32_257 dim 1 : vector<16x512xf32>, i32 -> vector<16x512xf32>
    %c-1_i32_258 = arith.constant -1 : i32
    %671 = vector.broadcast %c-1_i32_258 : i32 to vector<1x512xi32>
    %672 = arith.addi %0, %671 : vector<1x512xi32>
    %c0_i32_259 = arith.constant 0 : i32
    %673 = vector.broadcast %c0_i32_259 : i32 to vector<1x512xi32>
    %674 = arith.cmpi sge, %672, %673 : vector<1x512xi32>
    %c-1_i32_260 = arith.constant -1 : i32
    %675 = vector.broadcast %c-1_i32_260 : i32 to vector<1x512xi32>
    %676 = arith.addi %0, %675 : vector<1x512xi32>
    %c16_i32_261 = arith.constant 16 : i32
    %677 = vector.broadcast %c16_i32_261 : i32 to vector<1x512xi32>
    %678 = arith.cmpi slt, %676, %677 : vector<1x512xi32>
    %679 = arith.andi %674, %678 : vector<1x512xi1>
    %c0_i32_262 = arith.constant 0 : i32
    %680 = vector.broadcast %c0_i32_262 : i32 to vector<1x512xi32>
    %681 = arith.addi %1, %680 : vector<1x512xi32>
    %c0_i32_263 = arith.constant 0 : i32
    %682 = vector.broadcast %c0_i32_263 : i32 to vector<1x512xi32>
    %683 = arith.cmpi sge, %681, %682 : vector<1x512xi32>
    %684 = arith.andi %679, %683 : vector<1x512xi1>
    %c0_i32_264 = arith.constant 0 : i32
    %685 = vector.broadcast %c0_i32_264 : i32 to vector<1x512xi32>
    %686 = arith.addi %1, %685 : vector<1x512xi32>
    %c16_i32_265 = arith.constant 16 : i32
    %687 = vector.broadcast %c16_i32_265 : i32 to vector<1x512xi32>
    %688 = arith.cmpi slt, %686, %687 : vector<1x512xi32>
    %689 = arith.andi %684, %688 : vector<1x512xi1>
    %cst_266 = arith.constant 0.000000e+00 : f32
    %690 = vector.shape_cast %689 : vector<1x512xi1> to vector<1x512xi1>
    %691 = vector.broadcast %690 : vector<1x512xi1> to vector<16x512xi1>
    %692 = vector.broadcast %cst_266 : f32 to vector<16x512xf32>
    %693 = arith.select %691, %670, %692 : vector<16x512xi1>, vector<16x512xf32>
    %c15_i32_267 = arith.constant 15 : i32
    %694 = tpu.dynamic_rotate %645 by %c15_i32_267 dim 1 : vector<16x512xf32>, i32 -> vector<16x512xf32>
    %c-1_i32_268 = arith.constant -1 : i32
    %695 = vector.broadcast %c-1_i32_268 : i32 to vector<1x512xi32>
    %696 = arith.addi %0, %695 : vector<1x512xi32>
    %c0_i32_269 = arith.constant 0 : i32
    %697 = vector.broadcast %c0_i32_269 : i32 to vector<1x512xi32>
    %698 = arith.cmpi sge, %696, %697 : vector<1x512xi32>
    %c-1_i32_270 = arith.constant -1 : i32
    %699 = vector.broadcast %c-1_i32_270 : i32 to vector<1x512xi32>
    %700 = arith.addi %0, %699 : vector<1x512xi32>
    %c16_i32_271 = arith.constant 16 : i32
    %701 = vector.broadcast %c16_i32_271 : i32 to vector<1x512xi32>
    %702 = arith.cmpi slt, %700, %701 : vector<1x512xi32>
    %703 = arith.andi %698, %702 : vector<1x512xi1>
    %c1_i32_272 = arith.constant 1 : i32
    %704 = vector.broadcast %c1_i32_272 : i32 to vector<1x512xi32>
    %705 = arith.addi %1, %704 : vector<1x512xi32>
    %c0_i32_273 = arith.constant 0 : i32
    %706 = vector.broadcast %c0_i32_273 : i32 to vector<1x512xi32>
    %707 = arith.cmpi sge, %705, %706 : vector<1x512xi32>
    %708 = arith.andi %703, %707 : vector<1x512xi1>
    %c1_i32_274 = arith.constant 1 : i32
    %709 = vector.broadcast %c1_i32_274 : i32 to vector<1x512xi32>
    %710 = arith.addi %1, %709 : vector<1x512xi32>
    %c16_i32_275 = arith.constant 16 : i32
    %711 = vector.broadcast %c16_i32_275 : i32 to vector<1x512xi32>
    %712 = arith.cmpi slt, %710, %711 : vector<1x512xi32>
    %713 = arith.andi %708, %712 : vector<1x512xi1>
    %cst_276 = arith.constant 0.000000e+00 : f32
    %714 = vector.shape_cast %713 : vector<1x512xi1> to vector<1x512xi1>
    %715 = vector.broadcast %714 : vector<1x512xi1> to vector<16x512xi1>
    %716 = vector.broadcast %cst_276 : f32 to vector<16x512xf32>
    %717 = arith.select %715, %694, %716 : vector<16x512xi1>, vector<16x512xf32>
    %c1_i32_277 = arith.constant 1 : i32
    %718 = tpu.dynamic_rotate %645 by %c1_i32_277 dim 1 : vector<16x512xf32>, i32 -> vector<16x512xf32>
    %c0_i32_278 = arith.constant 0 : i32
    %719 = vector.broadcast %c0_i32_278 : i32 to vector<1x512xi32>
    %720 = arith.addi %0, %719 : vector<1x512xi32>
    %c0_i32_279 = arith.constant 0 : i32
    %721 = vector.broadcast %c0_i32_279 : i32 to vector<1x512xi32>
    %722 = arith.cmpi sge, %720, %721 : vector<1x512xi32>
    %c0_i32_280 = arith.constant 0 : i32
    %723 = vector.broadcast %c0_i32_280 : i32 to vector<1x512xi32>
    %724 = arith.addi %0, %723 : vector<1x512xi32>
    %c16_i32_281 = arith.constant 16 : i32
    %725 = vector.broadcast %c16_i32_281 : i32 to vector<1x512xi32>
    %726 = arith.cmpi slt, %724, %725 : vector<1x512xi32>
    %727 = arith.andi %722, %726 : vector<1x512xi1>
    %c-1_i32_282 = arith.constant -1 : i32
    %728 = vector.broadcast %c-1_i32_282 : i32 to vector<1x512xi32>
    %729 = arith.addi %1, %728 : vector<1x512xi32>
    %c0_i32_283 = arith.constant 0 : i32
    %730 = vector.broadcast %c0_i32_283 : i32 to vector<1x512xi32>
    %731 = arith.cmpi sge, %729, %730 : vector<1x512xi32>
    %732 = arith.andi %727, %731 : vector<1x512xi1>
    %c-1_i32_284 = arith.constant -1 : i32
    %733 = vector.broadcast %c-1_i32_284 : i32 to vector<1x512xi32>
    %734 = arith.addi %1, %733 : vector<1x512xi32>
    %c16_i32_285 = arith.constant 16 : i32
    %735 = vector.broadcast %c16_i32_285 : i32 to vector<1x512xi32>
    %736 = arith.cmpi slt, %734, %735 : vector<1x512xi32>
    %737 = arith.andi %732, %736 : vector<1x512xi1>
    %cst_286 = arith.constant 0.000000e+00 : f32
    %738 = vector.shape_cast %737 : vector<1x512xi1> to vector<1x512xi1>
    %739 = vector.broadcast %738 : vector<1x512xi1> to vector<16x512xi1>
    %740 = vector.broadcast %cst_286 : f32 to vector<16x512xf32>
    %741 = arith.select %739, %718, %740 : vector<16x512xi1>, vector<16x512xf32>
    %c511_i32_287 = arith.constant 511 : i32
    %742 = tpu.dynamic_rotate %645 by %c511_i32_287 dim 1 : vector<16x512xf32>, i32 -> vector<16x512xf32>
    %c0_i32_288 = arith.constant 0 : i32
    %743 = vector.broadcast %c0_i32_288 : i32 to vector<1x512xi32>
    %744 = arith.addi %0, %743 : vector<1x512xi32>
    %c0_i32_289 = arith.constant 0 : i32
    %745 = vector.broadcast %c0_i32_289 : i32 to vector<1x512xi32>
    %746 = arith.cmpi sge, %744, %745 : vector<1x512xi32>
    %c0_i32_290 = arith.constant 0 : i32
    %747 = vector.broadcast %c0_i32_290 : i32 to vector<1x512xi32>
    %748 = arith.addi %0, %747 : vector<1x512xi32>
    %c16_i32_291 = arith.constant 16 : i32
    %749 = vector.broadcast %c16_i32_291 : i32 to vector<1x512xi32>
    %750 = arith.cmpi slt, %748, %749 : vector<1x512xi32>
    %751 = arith.andi %746, %750 : vector<1x512xi1>
    %c1_i32_292 = arith.constant 1 : i32
    %752 = vector.broadcast %c1_i32_292 : i32 to vector<1x512xi32>
    %753 = arith.addi %1, %752 : vector<1x512xi32>
    %c0_i32_293 = arith.constant 0 : i32
    %754 = vector.broadcast %c0_i32_293 : i32 to vector<1x512xi32>
    %755 = arith.cmpi sge, %753, %754 : vector<1x512xi32>
    %756 = arith.andi %751, %755 : vector<1x512xi1>
    %c1_i32_294 = arith.constant 1 : i32
    %757 = vector.broadcast %c1_i32_294 : i32 to vector<1x512xi32>
    %758 = arith.addi %1, %757 : vector<1x512xi32>
    %c16_i32_295 = arith.constant 16 : i32
    %759 = vector.broadcast %c16_i32_295 : i32 to vector<1x512xi32>
    %760 = arith.cmpi slt, %758, %759 : vector<1x512xi32>
    %761 = arith.andi %756, %760 : vector<1x512xi1>
    %cst_296 = arith.constant 0.000000e+00 : f32
    %762 = vector.shape_cast %761 : vector<1x512xi1> to vector<1x512xi1>
    %763 = vector.broadcast %762 : vector<1x512xi1> to vector<16x512xi1>
    %764 = vector.broadcast %cst_296 : f32 to vector<16x512xf32>
    %765 = arith.select %763, %742, %764 : vector<16x512xi1>, vector<16x512xf32>
    %c497_i32_297 = arith.constant 497 : i32
    %766 = tpu.dynamic_rotate %645 by %c497_i32_297 dim 1 : vector<16x512xf32>, i32 -> vector<16x512xf32>
    %c1_i32_298 = arith.constant 1 : i32
    %767 = vector.broadcast %c1_i32_298 : i32 to vector<1x512xi32>
    %768 = arith.addi %0, %767 : vector<1x512xi32>
    %c0_i32_299 = arith.constant 0 : i32
    %769 = vector.broadcast %c0_i32_299 : i32 to vector<1x512xi32>
    %770 = arith.cmpi sge, %768, %769 : vector<1x512xi32>
    %c1_i32_300 = arith.constant 1 : i32
    %771 = vector.broadcast %c1_i32_300 : i32 to vector<1x512xi32>
    %772 = arith.addi %0, %771 : vector<1x512xi32>
    %c16_i32_301 = arith.constant 16 : i32
    %773 = vector.broadcast %c16_i32_301 : i32 to vector<1x512xi32>
    %774 = arith.cmpi slt, %772, %773 : vector<1x512xi32>
    %775 = arith.andi %770, %774 : vector<1x512xi1>
    %c-1_i32_302 = arith.constant -1 : i32
    %776 = vector.broadcast %c-1_i32_302 : i32 to vector<1x512xi32>
    %777 = arith.addi %1, %776 : vector<1x512xi32>
    %c0_i32_303 = arith.constant 0 : i32
    %778 = vector.broadcast %c0_i32_303 : i32 to vector<1x512xi32>
    %779 = arith.cmpi sge, %777, %778 : vector<1x512xi32>
    %780 = arith.andi %775, %779 : vector<1x512xi1>
    %c-1_i32_304 = arith.constant -1 : i32
    %781 = vector.broadcast %c-1_i32_304 : i32 to vector<1x512xi32>
    %782 = arith.addi %1, %781 : vector<1x512xi32>
    %c16_i32_305 = arith.constant 16 : i32
    %783 = vector.broadcast %c16_i32_305 : i32 to vector<1x512xi32>
    %784 = arith.cmpi slt, %782, %783 : vector<1x512xi32>
    %785 = arith.andi %780, %784 : vector<1x512xi1>
    %cst_306 = arith.constant 0.000000e+00 : f32
    %786 = vector.shape_cast %785 : vector<1x512xi1> to vector<1x512xi1>
    %787 = vector.broadcast %786 : vector<1x512xi1> to vector<16x512xi1>
    %788 = vector.broadcast %cst_306 : f32 to vector<16x512xf32>
    %789 = arith.select %787, %766, %788 : vector<16x512xi1>, vector<16x512xf32>
    %c496_i32_307 = arith.constant 496 : i32
    %790 = tpu.dynamic_rotate %645 by %c496_i32_307 dim 1 : vector<16x512xf32>, i32 -> vector<16x512xf32>
    %c1_i32_308 = arith.constant 1 : i32
    %791 = vector.broadcast %c1_i32_308 : i32 to vector<1x512xi32>
    %792 = arith.addi %0, %791 : vector<1x512xi32>
    %c0_i32_309 = arith.constant 0 : i32
    %793 = vector.broadcast %c0_i32_309 : i32 to vector<1x512xi32>
    %794 = arith.cmpi sge, %792, %793 : vector<1x512xi32>
    %c1_i32_310 = arith.constant 1 : i32
    %795 = vector.broadcast %c1_i32_310 : i32 to vector<1x512xi32>
    %796 = arith.addi %0, %795 : vector<1x512xi32>
    %c16_i32_311 = arith.constant 16 : i32
    %797 = vector.broadcast %c16_i32_311 : i32 to vector<1x512xi32>
    %798 = arith.cmpi slt, %796, %797 : vector<1x512xi32>
    %799 = arith.andi %794, %798 : vector<1x512xi1>
    %c0_i32_312 = arith.constant 0 : i32
    %800 = vector.broadcast %c0_i32_312 : i32 to vector<1x512xi32>
    %801 = arith.addi %1, %800 : vector<1x512xi32>
    %c0_i32_313 = arith.constant 0 : i32
    %802 = vector.broadcast %c0_i32_313 : i32 to vector<1x512xi32>
    %803 = arith.cmpi sge, %801, %802 : vector<1x512xi32>
    %804 = arith.andi %799, %803 : vector<1x512xi1>
    %c0_i32_314 = arith.constant 0 : i32
    %805 = vector.broadcast %c0_i32_314 : i32 to vector<1x512xi32>
    %806 = arith.addi %1, %805 : vector<1x512xi32>
    %c16_i32_315 = arith.constant 16 : i32
    %807 = vector.broadcast %c16_i32_315 : i32 to vector<1x512xi32>
    %808 = arith.cmpi slt, %806, %807 : vector<1x512xi32>
    %809 = arith.andi %804, %808 : vector<1x512xi1>
    %cst_316 = arith.constant 0.000000e+00 : f32
    %810 = vector.shape_cast %809 : vector<1x512xi1> to vector<1x512xi1>
    %811 = vector.broadcast %810 : vector<1x512xi1> to vector<16x512xi1>
    %812 = vector.broadcast %cst_316 : f32 to vector<16x512xf32>
    %813 = arith.select %811, %790, %812 : vector<16x512xi1>, vector<16x512xf32>
    %c495_i32_317 = arith.constant 495 : i32
    %814 = tpu.dynamic_rotate %645 by %c495_i32_317 dim 1 : vector<16x512xf32>, i32 -> vector<16x512xf32>
    %c1_i32_318 = arith.constant 1 : i32
    %815 = vector.broadcast %c1_i32_318 : i32 to vector<1x512xi32>
    %816 = arith.addi %0, %815 : vector<1x512xi32>
    %c0_i32_319 = arith.constant 0 : i32
    %817 = vector.broadcast %c0_i32_319 : i32 to vector<1x512xi32>
    %818 = arith.cmpi sge, %816, %817 : vector<1x512xi32>
    %c1_i32_320 = arith.constant 1 : i32
    %819 = vector.broadcast %c1_i32_320 : i32 to vector<1x512xi32>
    %820 = arith.addi %0, %819 : vector<1x512xi32>
    %c16_i32_321 = arith.constant 16 : i32
    %821 = vector.broadcast %c16_i32_321 : i32 to vector<1x512xi32>
    %822 = arith.cmpi slt, %820, %821 : vector<1x512xi32>
    %823 = arith.andi %818, %822 : vector<1x512xi1>
    %c1_i32_322 = arith.constant 1 : i32
    %824 = vector.broadcast %c1_i32_322 : i32 to vector<1x512xi32>
    %825 = arith.addi %1, %824 : vector<1x512xi32>
    %c0_i32_323 = arith.constant 0 : i32
    %826 = vector.broadcast %c0_i32_323 : i32 to vector<1x512xi32>
    %827 = arith.cmpi sge, %825, %826 : vector<1x512xi32>
    %828 = arith.andi %823, %827 : vector<1x512xi1>
    %c1_i32_324 = arith.constant 1 : i32
    %829 = vector.broadcast %c1_i32_324 : i32 to vector<1x512xi32>
    %830 = arith.addi %1, %829 : vector<1x512xi32>
    %c16_i32_325 = arith.constant 16 : i32
    %831 = vector.broadcast %c16_i32_325 : i32 to vector<1x512xi32>
    %832 = arith.cmpi slt, %830, %831 : vector<1x512xi32>
    %833 = arith.andi %828, %832 : vector<1x512xi1>
    %cst_326 = arith.constant 0.000000e+00 : f32
    %834 = vector.shape_cast %833 : vector<1x512xi1> to vector<1x512xi1>
    %835 = vector.broadcast %834 : vector<1x512xi1> to vector<16x512xi1>
    %836 = vector.broadcast %cst_326 : f32 to vector<16x512xf32>
    %837 = arith.select %835, %814, %836 : vector<16x512xi1>, vector<16x512xf32>
    %838 = tpu.concatenate %669, %693, %717, %741, %645, %765, %789, %813, %837 in 0 : vector<16x512xf32>, vector<16x512xf32>, vector<16x512xf32>, vector<16x512xf32>, vector<16x512xf32>, vector<16x512xf32>, vector<16x512xf32>, vector<16x512xf32>, vector<16x512xf32> -> vector<144x512xf32>
    %839 = arith.truncf %838 : vector<144x512xf32> to vector<144x512xbf16>
    %c0_327 = arith.constant 0 : index
    %c0_328 = arith.constant 0 : index
    %840 = vector.load %arg6[%c0_327, %c0_328] : memref<5x144xbf16, #tpu.memory_space<vmem>>, vector<5x144xbf16>
    %cst_329 = arith.constant dense<0.000000e+00> : vector<5x512xf32>
    %841 = tpu.matmul %840, %839, %cst_329 {dimension_numbers = #tpu.dot_dimension_numbers<[1], [0], [0], [1], [0, 0, 1, 1], [], []>} : vector<5x144xbf16>, vector<144x512xbf16>, vector<5x512xf32> -> vector<5x512xf32>
    %c0_330 = arith.constant 0 : index
    %c0_331 = arith.constant 0 : index
    %842 = vector.load %arg7[%c0_330, %c0_331] : memref<5x1xf32, #tpu.memory_space<vmem>>, vector<5x1xf32>
    %843 = vector.broadcast %842 : vector<5x1xf32> to vector<5x512xf32>
    %844 = arith.addf %841, %843 : vector<5x512xf32>
    %cst_332 = arith.constant dense<0xFF800000> : vector<512xf32>
    %845 = vector.multi_reduction <maximumf>, %844, %cst_332 [0] : vector<5x512xf32> to vector<512xf32>
    %846 = vector.shape_cast %845 : vector<512xf32> to vector<1x512xf32>
    %847 = vector.broadcast %846 : vector<1x512xf32> to vector<5x512xf32>
    %848 = arith.subf %844, %847 : vector<5x512xf32>
    %849 = math.exp %848 : vector<5x512xf32>
    %cst_333 = arith.constant dense<0.000000e+00> : vector<512xf32>
    %850 = vector.multi_reduction <add>, %849, %cst_333 [0] : vector<5x512xf32> to vector<512xf32>
    %851 = vector.shape_cast %850 : vector<512xf32> to vector<1x512xf32>
    %852 = math.log %851 : vector<1x512xf32>
    %853 = vector.broadcast %852 : vector<1x512xf32> to vector<5x512xf32>
    %854 = arith.subf %848, %853 : vector<5x512xf32>
    %c0_334 = arith.constant 0 : index
    %c0_335 = arith.constant 0 : index
    %855 = vector.load %arg12[%c0_334, %c0_335] : memref<5x512xf32, #tpu.memory_space<vmem>>, vector<5x512xf32>
    tpu.vector_store %arg12[%c0_334, %c0_335], %854 {strides = array<i32>} : memref<5x512xf32, #tpu.memory_space<vmem>>, vector<5x512xf32>,
    return
  }
}

</mosaic_0001>

<llo_original>
// kernel: three_layer_semseg_highdim.1
$region0: #{three_layer_semseg_highdim.1}
  #allocation0 [shape = 'u32[]', space=smem, size = 0x4, offset = 0x4, fixed_abs, tag = 'smem constant byte address 0x4 - core index']
  #allocation1 [shape = 'u32[144,128]{1,0:T(1,128)}', space=vmem, size = 0x12000, scoped, tag = 'internal scratch']
  %s0 = inlined_call_operand.vmem [shape: f32[8,512], index: 0, kind: input, shape index: {}]
  %s1 = inlined_call_operand.vmem [shape: s32[1,512], index: 1, kind: input, shape index: {}]
  %s2 = inlined_call_operand.vmem [shape: s32[1,512], index: 2, kind: input, shape index: {}]
  %s3 = inlined_call_operand.vmem [shape: bf16[8,72], index: 3, kind: input, shape index: {}]
  %s4 = inlined_call_operand.vmem [shape: bf16[8,72], index: 4, kind: input, shape index: {}]
  %s5 = inlined_call_operand.vmem [shape: bf16[8,72], index: 5, kind: input, shape index: {}]
  %s6 = inlined_call_operand.vmem [shape: bf16[5,144], index: 6, kind: input, shape index: {}]
  %s7 = inlined_call_operand.vmem [shape: f32[5,1], index: 7, kind: input, shape index: {}]
  %s8 = inlined_call_operand.vmem [shape: f32[8,1], index: 8, kind: input, shape index: {}]
  %s9 = inlined_call_operand.vmem [shape: f32[8,1], index: 9, kind: input, shape index: {}]
  %s10 = inlined_call_operand.vmem [shape: f32[16,1], index: 10, kind: input, shape index: {}]
  %s11 = inlined_call_operand.vmem [shape: f32[16,1], index: 11, kind: input, shape index: {}]
  %s12 = inlined_call_operand.vmem [shape: f32[5,512], index: 12, kind: output, shape index: {}]
  %s13 = sld [smem:[#allocation0]]
  $region58: #{three_layer_semseg_highdim.1} parent=0
    _
  %s15 = ssub.s32 1, %s13
  %s16 = scalar_select 0, %s15, %s13
  // Predicated region
  $region2: #{three_layer_semseg_highdim.1} parent=0 // pred_check
    _
  $region3: #{three_layer_semseg_highdim.1} parent=0 // pred_check_branch
    %18 = sbr.rel (0) target = $region5
  $region4: #{three_layer_semseg_highdim.1} parent=0 // pred_region
    _
  $region5: #{three_layer_semseg_highdim.1} parent=0 // pred_fallthru
    _
  // Predicated region
  $region6: #{three_layer_semseg_highdim.1} parent=0 // pred_check
    _
  $region7: #{three_layer_semseg_highdim.1} parent=0 // pred_check_branch
    %20 = sbr.rel (0) target = $region9
  $region8: #{three_layer_semseg_highdim.1} parent=0 // pred_region
    _
  $region9: #{three_layer_semseg_highdim.1} parent=0 // pred_fallthru
    _
  // Predicated region
  $region10: #{three_layer_semseg_highdim.1} parent=0 // pred_check
    _
  $region11: #{three_layer_semseg_highdim.1} parent=0 // pred_check_branch
    %22 = sbr.rel (0) target = $region13
  $region12: #{three_layer_semseg_highdim.1} parent=0 // pred_region
    _
  $region13: #{three_layer_semseg_highdim.1} parent=0 // pred_fallthru
    _
  // Predicated region
  $region14: #{three_layer_semseg_highdim.1} parent=0 // pred_check
    _
  $region15: #{three_layer_semseg_highdim.1} parent=0 // pred_check_branch
    %24 = sbr.rel (0) target = $region17
  $region16: #{three_layer_semseg_highdim.1} parent=0 // pred_region
    _
  $region17: #{three_layer_semseg_highdim.1} parent=0 // pred_fallthru
    _
  // Predicated region
  $region18: #{three_layer_semseg_highdim.1} parent=0 // pred_check
    _
  $region19: #{three_layer_semseg_highdim.1} parent=0 // pred_check_branch
    %26 = sbr.rel (0) target = $region21
  $region20: #{three_layer_semseg_highdim.1} parent=0 // pred_region
    _
  $region21: #{three_layer_semseg_highdim.1} parent=0 // pred_fallthru
    _
  // Predicated region
  $region22: #{three_layer_semseg_highdim.1} parent=0 // pred_check
    _
  $region23: #{three_layer_semseg_highdim.1} parent=0 // pred_check_branch
    %28 = sbr.rel (0) target = $region25
  $region24: #{three_layer_semseg_highdim.1} parent=0 // pred_region
    _
  $region25: #{three_layer_semseg_highdim.1} parent=0 // pred_fallthru
    _
  // Predicated region
  $region26: #{three_layer_semseg_highdim.1} parent=0 // pred_check
    _
  $region27: #{three_layer_semseg_highdim.1} parent=0 // pred_check_branch
    %30 = sbr.rel (0) target = $region29
  $region28: #{three_layer_semseg_highdim.1} parent=0 // pred_region
    _
  $region29: #{three_layer_semseg_highdim.1} parent=0 // pred_fallthru
    _
  // Predicated region
  $region30: #{three_layer_semseg_highdim.1} parent=0 // pred_check
    _
  $region31: #{three_layer_semseg_highdim.1} parent=0 // pred_check_branch
    %32 = sbr.rel (0) target = $region33
  $region32: #{three_layer_semseg_highdim.1} parent=0 // pred_region
    _
  $region33: #{three_layer_semseg_highdim.1} parent=0 // pred_fallthru
    _
  // Predicated region
  $region34: #{three_layer_semseg_highdim.1} parent=0 // pred_check
    _
  $region35: #{three_layer_semseg_highdim.1} parent=0 // pred_check_branch
    %34 = sbr.rel (0) target = $region37
  $region36: #{three_layer_semseg_highdim.1} parent=0 // pred_region
    _
  $region37: #{three_layer_semseg_highdim.1} parent=0 // pred_fallthru
    _
  // Predicated region
  $region38: #{three_layer_semseg_highdim.1} parent=0 // pred_check
    _
  $region39: #{three_layer_semseg_highdim.1} parent=0 // pred_check_branch
    %36 = sbr.rel (0) target = $region41
  $region40: #{three_layer_semseg_highdim.1} parent=0 // pred_region
    _
  $region41: #{three_layer_semseg_highdim.1} parent=0 // pred_fallthru
    _
  // Predicated region
  $region42: #{three_layer_semseg_highdim.1} parent=0 // pred_check
    _
  $region43: #{three_layer_semseg_highdim.1} parent=0 // pred_check_branch
    %38 = sbr.rel (0) target = $region45
  $region44: #{three_layer_semseg_highdim.1} parent=0 // pred_region
    _
  $region45: #{three_layer_semseg_highdim.1} parent=0 // pred_fallthru
    _
  // Predicated region
  $region46: #{three_layer_semseg_highdim.1} parent=0 // pred_check
    _
  $region47: #{three_layer_semseg_highdim.1} parent=0 // pred_check_branch
    %40 = sbr.rel (0) target = $region49
  $region48: #{three_layer_semseg_highdim.1} parent=0 // pred_region
    _
  $region49: #{three_layer_semseg_highdim.1} parent=0 // pred_fallthru
    _
  %v42 = vld [vmem:[%s1] sm:$0xf]
  %v43 = vld [vmem:[%s2] sm:$0xf]
  %v44 = vld [vmem:[%s0] sm:$0xff]
  %v45 = vld [vmem:[%s0 + $0x8] sm:$0xff]
  %v46 = vld [vmem:[%s0 + $0x10] sm:$0xff]
  %v47 = vld [vmem:[%s0 + $0x18] sm:$0xff]
  %48 = vrot.lane.b32.xlu0 %v44, 17
  %v49 = vpop.permute.xlu0 %48
  %50 = vrot.lane.b32.xlu0 %v45, 17
  %v51 = vpop.permute.xlu0 %50
  %52 = vrot.lane.b32.xlu0 %v46, 17
  %v53 = vpop.permute.xlu0 %52
  %54 = vrot.lane.b32.xlu0 %v47, 17
  %v55 = vpop.permute.xlu0 %54
  %v56 = vlaneseq
  %v57 = vand.u32 %v56, 127
  %vm58 = vcmp.lt.s32.totalorder %v57, 17
  %v59 = vsel %vm58, %v53, %v55
  %v60 = vsel %vm58, %v51, %v53
  %v61 = vsel %vm58, %v49, %v51
  %v62 = vsel %vm58, %v55, %v49
  %v63 = vadd.s32 %v42, 4294967295
  %vm64 = vcmp.ge.s32.totalorder %v63, 0
  %vm65 = vcmp.lt.s32.totalorder %v63, 16
  %vm66 = vmand %vm64, %vm65
  %v67 = vadd.s32 %v43, 4294967295
  %vm68 = vcmp.ge.s32.totalorder %v67, 0
  %vm69 = vmand %vm66, %vm68
  %vm70 = vcmp.lt.s32.totalorder %v67, 16
  %vm71 = vmand %vm69, %vm70
  %v72 = vsel %vm71, 1, 0
  %v73 = vlaneseq
  %v74 = vshrl.u32 %v73, 7
  %v75 = vsub.s32 0, %v74
  %v76 = vrot.slane %v72, %v75
  %v77 = vlaneseq
  %v78 = vshrl.u32 %v77, 7
  %v79 = vsub.s32 1, %v78
  %v80 = vrot.slane %v72, %v79
  %v81 = vlaneseq
  %v82 = vshrl.u32 %v81, 7
  %v83 = vsub.s32 2, %v82
  %v84 = vrot.slane %v72, %v83
  %v85 = vlaneseq
  %v86 = vshrl.u32 %v85, 7
  %v87 = vsub.s32 3, %v86
  %v88 = vrot.slane %v72, %v87
  %vm89 = vcmp.eq.s32.totalorder %v76, 1
  %vm90 = vcmp.eq.s32.totalorder %v80, 1
  %vm91 = vcmp.eq.s32.totalorder %v84, 1
  %vm92 = vcmp.eq.s32.totalorder %v88, 1
  %v93 = vsel %vm89, %v62, 0.0
  %v94 = vsel %vm90, %v61, 0.0
  %v95 = vsel %vm91, %v60, 0.0
  %v96 = vsel %vm92, %v59, 0.0
  %97 = vrot.lane.b32.xlu0 %v44, 16
  %v98 = vpop.permute.xlu0 %97
  %99 = vrot.lane.b32.xlu0 %v45, 16
  %v100 = vpop.permute.xlu0 %99
  %101 = vrot.lane.b32.xlu0 %v46, 16
  %v102 = vpop.permute.xlu0 %101
  %103 = vrot.lane.b32.xlu0 %v47, 16
  %v104 = vpop.permute.xlu0 %103
  %vm105 = vcmp.lt.s32.totalorder %v57, 16
  %v106 = vsel %vm105, %v102, %v104
  %v107 = vsel %vm105, %v100, %v102
  %v108 = vsel %vm105, %v98, %v100
  %v109 = vsel %vm105, %v104, %v98
  %vm110 = vcmp.ge.s32.totalorder %v43, 0
  %vm111 = vmand %vm66, %vm110
  %vm112 = vcmp.lt.s32.totalorder %v43, 16
  %vm113 = vmand %vm111, %vm112
  %v114 = vsel %vm113, 1, 0
  %v115 = vlaneseq
  %v116 = vshrl.u32 %v115, 7
  %v117 = vsub.s32 0, %v116
  %v118 = vrot.slane %v114, %v117
  %v119 = vlaneseq
  %v120 = vshrl.u32 %v119, 7
  %v121 = vsub.s32 1, %v120
  %v122 = vrot.slane %v114, %v121
  %v123 = vlaneseq
  %v124 = vshrl.u32 %v123, 7
  %v125 = vsub.s32 2, %v124
  %v126 = vrot.slane %v114, %v125
  %v127 = vlaneseq
  %v128 = vshrl.u32 %v127, 7
  %v129 = vsub.s32 3, %v128
  %v130 = vrot.slane %v114, %v129
  %vm131 = vcmp.eq.s32.totalorder %v118, 1
  %vm132 = vcmp.eq.s32.totalorder %v122, 1
  %vm133 = vcmp.eq.s32.totalorder %v126, 1
  %vm134 = vcmp.eq.s32.totalorder %v130, 1
  %v135 = vsel %vm131, %v109, 0.0
  %v136 = vsel %vm132, %v108, 0.0
  %v137 = vsel %vm133, %v107, 0.0
  %v138 = vsel %vm134, %v106, 0.0
  %139 = vrot.lane.b32.xlu0 %v44, 15
  %v140 = vpop.permute.xlu0 %139
  %141 = vrot.lane.b32.xlu0 %v45, 15
  %v142 = vpop.permute.xlu0 %141
  %143 = vrot.lane.b32.xlu0 %v46, 15
  %v144 = vpop.permute.xlu0 %143
  %145 = vrot.lane.b32.xlu0 %v47, 15
  %v146 = vpop.permute.xlu0 %145
  %vm147 = vcmp.lt.s32.totalorder %v57, 15
  %v148 = vsel %vm147, %v144, %v146
  %v149 = vsel %vm147, %v142, %v144
  %v150 = vsel %vm147, %v140, %v142
  %v151 = vsel %vm147, %v146, %v140
  %v152 = vadd.s32 %v43, 1
  %vm153 = vcmp.ge.s32.totalorder %v152, 0
  %vm154 = vmand %vm66, %vm153
  %vm155 = vcmp.lt.s32.totalorder %v152, 16
  %vm156 = vmand %vm154, %vm155
  %v157 = vsel %vm156, 1, 0
  %v158 = vlaneseq
  %v159 = vshrl.u32 %v158, 7
  %v160 = vsub.s32 0, %v159
  %v161 = vrot.slane %v157, %v160
  %v162 = vlaneseq
  %v163 = vshrl.u32 %v162, 7
  %v164 = vsub.s32 1, %v163
  %v165 = vrot.slane %v157, %v164
  %v166 = vlaneseq
  %v167 = vshrl.u32 %v166, 7
  %v168 = vsub.s32 2, %v167
  %v169 = vrot.slane %v157, %v168
  %v170 = vlaneseq
  %v171 = vshrl.u32 %v170, 7
  %v172 = vsub.s32 3, %v171
  %v173 = vrot.slane %v157, %v172
  %vm174 = vcmp.eq.s32.totalorder %v161, 1
  %vm175 = vcmp.eq.s32.totalorder %v165, 1
  %vm176 = vcmp.eq.s32.totalorder %v169, 1
  %vm177 = vcmp.eq.s32.totalorder %v173, 1
  %v178 = vsel %vm174, %v151, 0.0
  %v179 = vsel %vm175, %v150, 0.0
  %v180 = vsel %vm176, %v149, 0.0
  %v181 = vsel %vm177, %v148, 0.0
  %182 = vrot.lane.b32.xlu0 %v44, 1
  %v183 = vpop.permute.xlu0 %182
  %184 = vrot.lane.b32.xlu0 %v45, 1
  %v185 = vpop.permute.xlu0 %184
  %186 = vrot.lane.b32.xlu0 %v46, 1
  %v187 = vpop.permute.xlu0 %186
  %188 = vrot.lane.b32.xlu0 %v47, 1
  %v189 = vpop.permute.xlu0 %188
  %vm190 = vcmp.lt.s32.totalorder %v57, 1
  %v191 = vsel %vm190, %v187, %v189
  %v192 = vsel %vm190, %v185, %v187
  %v193 = vsel %vm190, %v183, %v185
  %v194 = vsel %vm190, %v189, %v183
  %vm195 = vcmp.ge.s32.totalorder %v42, 0
  %vm196 = vcmp.lt.s32.totalorder %v42, 16
  %vm197 = vmand %vm195, %vm196
  %vm198 = vmand %vm197, %vm68
  %vm199 = vmand %vm198, %vm70
  %v200 = vsel %vm199, 1, 0
  %v201 = vlaneseq
  %v202 = vshrl.u32 %v201, 7
  %v203 = vsub.s32 0, %v202
  %v204 = vrot.slane %v200, %v203
  %v205 = vlaneseq
  %v206 = vshrl.u32 %v205, 7
  %v207 = vsub.s32 1, %v206
  %v208 = vrot.slane %v200, %v207
  %v209 = vlaneseq
  %v210 = vshrl.u32 %v209, 7
  %v211 = vsub.s32 2, %v210
  %v212 = vrot.slane %v200, %v211
  %v213 = vlaneseq
  %v214 = vshrl.u32 %v213, 7
  %v215 = vsub.s32 3, %v214
  %v216 = vrot.slane %v200, %v215
  %vm217 = vcmp.eq.s32.totalorder %v204, 1
  %vm218 = vcmp.eq.s32.totalorder %v208, 1
  %vm219 = vcmp.eq.s32.totalorder %v212, 1
  %vm220 = vcmp.eq.s32.totalorder %v216, 1
  %v221 = vsel %vm217, %v194, 0.0
  %v222 = vsel %vm218, %v193, 0.0
  %v223 = vsel %vm219, %v192, 0.0
  %v224 = vsel %vm220, %v191, 0.0
  %225 = vrot.lane.b32.xlu0 %v44, 127
  %v226 = vpop.permute.xlu0 %225
  %227 = vrot.lane.b32.xlu0 %v45, 127
  %v228 = vpop.permute.xlu0 %227
  %229 = vrot.lane.b32.xlu0 %v46, 127
  %v230 = vpop.permute.xlu0 %229
  %231 = vrot.lane.b32.xlu0 %v47, 127
  %v232 = vpop.permute.xlu0 %231
  %vm233 = vcmp.lt.s32.totalorder %v57, 127
  %v234 = vsel %vm233, %v230, %v232
  %v235 = vsel %vm233, %v228, %v230
  %v236 = vsel %vm233, %v226, %v228
  %v237 = vsel %vm233, %v232, %v226
  %vm238 = vmand %vm197, %vm153
  %vm239 = vmand %vm238, %vm155
  %v240 = vsel %vm239, 1, 0
  %v241 = vlaneseq
  %v242 = vshrl.u32 %v241, 7
  %v243 = vsub.s32 0, %v242
  %v244 = vrot.slane %v240, %v243
  %v245 = vlaneseq
  %v246 = vshrl.u32 %v245, 7
  %v247 = vsub.s32 1, %v246
  %v248 = vrot.slane %v240, %v247
  %v249 = vlaneseq
  %v250 = vshrl.u32 %v249, 7
  %v251 = vsub.s32 2, %v250
  %v252 = vrot.slane %v240, %v251
  %v253 = vlaneseq
  %v254 = vshrl.u32 %v253, 7
  %v255 = vsub.s32 3, %v254
  %v256 = vrot.slane %v240, %v255
  %vm257 = vcmp.eq.s32.totalorder %v244, 1
  %vm258 = vcmp.eq.s32.totalorder %v248, 1
  %vm259 = vcmp.eq.s32.totalorder %v252, 1
  %vm260 = vcmp.eq.s32.totalorder %v256, 1
  %v261 = vsel %vm257, %v236, 0.0
  %v262 = vsel %vm258, %v235, 0.0
  %v263 = vsel %vm259, %v234, 0.0
  %v264 = vsel %vm260, %v237, 0.0
  %265 = vrot.lane.b32.xlu0 %v44, 113
  %v266 = vpop.permute.xlu0 %265
  %267 = vrot.lane.b32.xlu0 %v45, 113
  %v268 = vpop.permute.xlu0 %267
  %269 = vrot.lane.b32.xlu0 %v46, 113
  %v270 = vpop.permute.xlu0 %269
  %271 = vrot.lane.b32.xlu0 %v47, 113
  %v272 = vpop.permute.xlu0 %271
  %vm273 = vcmp.lt.s32.totalorder %v57, 113
  %v274 = vsel %vm273, %v270, %v272
  %v275 = vsel %vm273, %v268, %v270
  %v276 = vsel %vm273, %v266, %v268
  %v277 = vsel %vm273, %v272, %v266
  %v278 = vadd.s32 %v42, 1
  %vm279 = vcmp.ge.s32.totalorder %v278, 0
  %vm280 = vcmp.lt.s32.totalorder %v278, 16
  %vm281 = vmand %vm279, %vm280
  %vm282 = vmand %vm281, %vm68
  %vm283 = vmand %vm282, %vm70
  %v284 = vsel %vm283, 1, 0
  %v285 = vlaneseq
  %v286 = vshrl.u32 %v285, 7
  %v287 = vsub.s32 0, %v286
  %v288 = vrot.slane %v284, %v287
  %v289 = vlaneseq
  %v290 = vshrl.u32 %v289, 7
  %v291 = vsub.s32 1, %v290
  %v292 = vrot.slane %v284, %v291
  %v293 = vlaneseq
  %v294 = vshrl.u32 %v293, 7
  %v295 = vsub.s32 2, %v294
  %v296 = vrot.slane %v284, %v295
  %v297 = vlaneseq
  %v298 = vshrl.u32 %v297, 7
  %v299 = vsub.s32 3, %v298
  %v300 = vrot.slane %v284, %v299
  %vm301 = vcmp.eq.s32.totalorder %v288, 1
  %vm302 = vcmp.eq.s32.totalorder %v292, 1
  %vm303 = vcmp.eq.s32.totalorder %v296, 1
  %vm304 = vcmp.eq.s32.totalorder %v300, 1
  %v305 = vsel %vm301, %v276, 0.0
  %v306 = vsel %vm302, %v275, 0.0
  %v307 = vsel %vm303, %v274, 0.0
  %v308 = vsel %vm304, %v277, 0.0
  %309 = vrot.lane.b32.xlu0 %v44, 112
  %v310 = vpop.permute.xlu0 %309
  %311 = vrot.lane.b32.xlu0 %v45, 112
  %v312 = vpop.permute.xlu0 %311
  %313 = vrot.lane.b32.xlu0 %v46, 112
  %v314 = vpop.permute.xlu0 %313
  %315 = vrot.lane.b32.xlu0 %v47, 112
  %v316 = vpop.permute.xlu0 %315
  %vm317 = vcmp.lt.s32.totalorder %v57, 112
  %v318 = vsel %vm317, %v314, %v316
  %v319 = vsel %vm317, %v312, %v314
  %v320 = vsel %vm317, %v310, %v312
  %v321 = vsel %vm317, %v316, %v310
  %vm322 = vmand %vm281, %vm110
  %vm323 = vmand %vm322, %vm112
  %v324 = vsel %vm323, 1, 0
  %v325 = vlaneseq
  %v326 = vshrl.u32 %v325, 7
  %v327 = vsub.s32 0, %v326
  %v328 = vrot.slane %v324, %v327
  %v329 = vlaneseq
  %v330 = vshrl.u32 %v329, 7
  %v331 = vsub.s32 1, %v330
  %v332 = vrot.slane %v324, %v331
  %v333 = vlaneseq
  %v334 = vshrl.u32 %v333, 7
  %v335 = vsub.s32 2, %v334
  %v336 = vrot.slane %v324, %v335
  %v337 = vlaneseq
  %v338 = vshrl.u32 %v337, 7
  %v339 = vsub.s32 3, %v338
  %v340 = vrot.slane %v324, %v339
  %vm341 = vcmp.eq.s32.totalorder %v328, 1
  %vm342 = vcmp.eq.s32.totalorder %v332, 1
  %vm343 = vcmp.eq.s32.totalorder %v336, 1
  %vm344 = vcmp.eq.s32.totalorder %v340, 1
  %v345 = vsel %vm341, %v320, 0.0
  %v346 = vsel %vm342, %v319, 0.0
  %v347 = vsel %vm343, %v318, 0.0
  %v348 = vsel %vm344, %v321, 0.0
  %349 = vrot.lane.b32.xlu0 %v44, 111
  %v350 = vpop.permute.xlu0 %349
  %351 = vrot.lane.b32.xlu0 %v45, 111
  %v352 = vpop.permute.xlu0 %351
  %353 = vrot.lane.b32.xlu0 %v46, 111
  %v354 = vpop.permute.xlu0 %353
  %355 = vrot.lane.b32.xlu0 %v47, 111
  %v356 = vpop.permute.xlu0 %355
  %vm357 = vcmp.lt.s32.totalorder %v57, 111
  %v358 = vsel %vm357, %v354, %v356
  %v359 = vsel %vm357, %v352, %v354
  %v360 = vsel %vm357, %v350, %v352
  %v361 = vsel %vm357, %v356, %v350
  %vm362 = vmand %vm281, %vm153
  %vm363 = vmand %vm362, %vm155
  %v364 = vsel %vm363, 1, 0
  %v365 = vlaneseq
  %v366 = vshrl.u32 %v365, 7
  %v367 = vsub.s32 0, %v366
  %v368 = vrot.slane %v364, %v367
  %v369 = vlaneseq
  %v370 = vshrl.u32 %v369, 7
  %v371 = vsub.s32 1, %v370
  %v372 = vrot.slane %v364, %v371
  %v373 = vlaneseq
  %v374 = vshrl.u32 %v373, 7
  %v375 = vsub.s32 2, %v374
  %v376 = vrot.slane %v364, %v375
  %v377 = vlaneseq
  %v378 = vshrl.u32 %v377, 7
  %v379 = vsub.s32 3, %v378
  %v380 = vrot.slane %v364, %v379
  %vm381 = vcmp.eq.s32.totalorder %v368, 1
  %vm382 = vcmp.eq.s32.totalorder %v372, 1
  %vm383 = vcmp.eq.s32.totalorder %v376, 1
  %vm384 = vcmp.eq.s32.totalorder %v380, 1
  %v385 = vsel %vm381, %v360, 0.0
  %v386 = vsel %vm382, %v359, 0.0
  %v387 = vsel %vm383, %v358, 0.0
  %v388 = vsel %vm384, %v361, 0.0
  %v389 = vpack.c.bf16 %v135, %v93
  %v390 = vpack.c.bf16 %v136, %v94
  %v391 = vpack.c.bf16 %v137, %v95
  %v392 = vpack.c.bf16 %v138, %v96
  %v393 = vpack.c.bf16 %v221, %v178
  %v394 = vpack.c.bf16 %v222, %v179
  %v395 = vpack.c.bf16 %v223, %v180
  %v396 = vpack.c.bf16 %v224, %v181
  %v397 = vpack.c.bf16 %v261, %v44
  %v398 = vpack.c.bf16 %v262, %v45
  %v399 = vpack.c.bf16 %v263, %v46
  %v400 = vpack.c.bf16 %v264, %v47
  %v401 = vpack.c.bf16 %v345, %v305
  %v402 = vpack.c.bf16 %v346, %v306
  %v403 = vpack.c.bf16 %v347, %v307
  %v404 = vpack.c.bf16 %v348, %v308
  %v405 = vpack.c.bf16 %v385, %v385
  %v406 = vpack.c.bf16 %v386, %v386
  %v407 = vpack.c.bf16 %v387, %v387
  %v408 = vpack.c.bf16 %v388, %v388
  %v409 = vld [vmem:[%s3] sm:$0xf]
  %vm410 = vcmask 588800
  %v412 = vsel %vm410, %v409, 0
  %vm414 = vcmask 1043456
  %v416 = vsel %vm414, %v405, 0
  %v419 = vsel %vm414, %v406, 0
  %v422 = vsel %vm414, %v407, 0
  %v425 = vsel %vm414, %v408, 0
  %427 = vmatprep.subr.bf16.mxu0 %v390
  %428 = vmatpush1.bf16.msra.mxu0 %v389
  %429 = vmatprep.subr.bf16.mxu0 %v394
  %430 = vmatpush1.bf16.msra.mxu0 %v393
  %431 = vmatprep.subr.bf16.mxu0 %v398
  %432 = vmatpush1.bf16.msra.mxu0 %v397
  %433 = vmatprep.subr.bf16.mxu0 %v402
  %434 = vmatpush1.bf16.msra.mxu0 %v401
  %435 = vmatprep.subr.bf16.mxu0 %v419
  %436 = vmatpush1.bf16.msra.mxu0 %v416
  %437 = vmatprep.subr.bf16.mxu0 0
  %438 = vmatpush1.bf16.msra.mxu0 0
  %439 = vmatprep.subr.bf16.mxu0 0
  %440 = vmatpush1.bf16.msra.mxu0 0
  %441 = vmatprep.subr.bf16.mxu0 0
  %442 = vmatpush1.bf16.msra.mxu0 0
  %443 = vmatprep.subr.bf16.mxu0 0
  %444 = vmatpush1.bf16.msra.mxu0 0
  %445 = vmatprep.subr.bf16.mxu0 0
  %446 = vmatpush1.bf16.msra.mxu0 0
  %447 = vmatprep.subr.bf16.mxu0 0
  %448 = vmatpush1.bf16.msra.mxu0 0
  %449 = vmatprep.subr.bf16.mxu0 0
  %450 = vmatpush1.bf16.msra.mxu0 0
  %451 = vmatprep.subr.bf16.mxu0 0
  %452 = vmatpush1.bf16.msra.mxu0 0
  %453 = vmatprep.subr.bf16.mxu0 0
  %454 = vmatpush1.bf16.msra.mxu0 0
  %455 = vmatprep.subr.bf16.mxu0 0
  %456 = vmatpush1.bf16.msra.mxu0 0
  %457 = vmatprep.subr.bf16.mxu0 0
  %458 = vmatpush1.bf16.msra.mxu0 0
  %459 = vmatprep.mubr.bf16.mxu0 0
  %460 = vmatmul.mubr.bf16.gmra.mrb[0].mxu0 %v412
  %v461 = vpop.f32.mrb[0].mxu0
  %v462 = vadd.f32 0.0, %v461
  %v463 = vpop.f32.mrb[0].mxu0
  %v464 = vadd.f32 0.0, %v463
  %v465 = vpop.f32.mrb[0].mxu0
  %v466 = vpop.f32.mrb[0].mxu0
  %467 = vdwg.mxu0
  %468 = vmatprep.subr.bf16.mxu0 %v392
  %469 = vmatpush1.bf16.msra.mxu0 %v391
  %470 = vmatprep.subr.bf16.mxu0 %v396
  %471 = vmatpush1.bf16.msra.mxu0 %v395
  %472 = vmatprep.subr.bf16.mxu0 %v400
  %473 = vmatpush1.bf16.msra.mxu0 %v399
  %474 = vmatprep.subr.bf16.mxu0 %v404
  %475 = vmatpush1.bf16.msra.mxu0 %v403
  %476 = vmatprep.subr.bf16.mxu0 %v425
  %477 = vmatpush1.bf16.msra.mxu0 %v422
  %478 = vmatprep.subr.bf16.mxu0 0
  %479 = vmatpush1.bf16.msra.mxu0 0
  %480 = vmatprep.subr.bf16.mxu0 0
  %481 = vmatpush1.bf16.msra.mxu0 0
  %482 = vmatprep.subr.bf16.mxu0 0
  %483 = vmatpush1.bf16.msra.mxu0 0
  %484 = vmatprep.subr.bf16.mxu0 0
  %485 = vmatpush1.bf16.msra.mxu0 0
  %486 = vmatprep.subr.bf16.mxu0 0
  %487 = vmatpush1.bf16.msra.mxu0 0
  %488 = vmatprep.subr.bf16.mxu0 0
  %489 = vmatpush1.bf16.msra.mxu0 0
  %490 = vmatprep.subr.bf16.mxu0 0
  %491 = vmatpush1.bf16.msra.mxu0 0
  %492 = vmatprep.subr.bf16.mxu0 0
  %493 = vmatpush1.bf16.msra.mxu0 0
  %494 = vmatprep.subr.bf16.mxu0 0
  %495 = vmatpush1.bf16.msra.mxu0 0
  %496 = vmatprep.subr.bf16.mxu0 0
  %497 = vmatpush1.bf16.msra.mxu0 0
  %498 = vmatprep.subr.bf16.mxu0 0
  %499 = vmatpush1.bf16.msra.mxu0 0
  %500 = vmatprep.mubr.bf16.mxu0 0
  %501 = vmatmul.mubr.bf16.gmra.mrb[0].mxu0 %v412
  %v502 = vpop.f32.mrb[0].mxu0
  %v503 = vadd.f32 0.0, %v502
  %v504 = vpop.f32.mrb[0].mxu0
  %v505 = vadd.f32 0.0, %v504
  %v506 = vpop.f32.mrb[0].mxu0
  %v507 = vpop.f32.mrb[0].mxu0
  %508 = vdwg.mxu0
  %v509 = vld [vmem:[%s8] sm:$0xff]
  %v510 = vld [vmem:[%s9] sm:$0xff]
  %v511 = vadd.f32 %v462, %v464
  %v512 = vadd.f32 %v511, %v503
  %v513 = vadd.f32 %v512, %v505
  %514 = vadd.xlane.f32.xlu0 %v513
  %v515 = vpop.xlane.xlu0 %514
  %v516 = vmul.f32 %v462, %v462
  %v517 = vmul.f32 %v464, %v464
  %v518 = vmul.f32 %v503, %v503
  %v519 = vmul.f32 %v505, %v505
  %v520 = vadd.f32 %v516, %v517
  %v521 = vadd.f32 %v520, %v518
  %v522 = vadd.f32 %v521, %v519
  %523 = vadd.xlane.f32.xlu0 %v522
  %v524 = vpop.xlane.xlu0 %523
  %v525 = vmul.f32 %v515, 0.001953125
  %v526 = vmul.f32 %v524, 0.001953125
  %v527 = vmul.f32 %v525, %v525
  %v528 = vsub.f32 %v526, %v527
  %v529 = vmax.f32 %v528, 0.0
  %v530 = vsub.f32 %v462, %v525
  %v531 = vsub.f32 %v464, %v525
  %v532 = vsub.f32 %v503, %v525
  %v533 = vsub.f32 %v505, %v525
  %v534 = vadd.f32 %v529, 1e-05
  %v535 = vrsqrt.pop %v534
  %v536 = vmul.f32 %v535, %v509
  %538 = vset.pattern.permute.xlu0 0
  %539 = vperm.xlu0 %538, %v536
  %v540 = vpop.permute.xlu0 %539
  %v542 = vmul.f32 %v530, %v540
  %v543 = vmul.f32 %v531, %v540
  %v544 = vmul.f32 %v532, %v540
  %v545 = vmul.f32 %v533, %v540
  %547 = vset.pattern.permute.xlu0 0
  %548 = vperm.xlu0 %547, %v510
  %v549 = vpop.permute.xlu0 %548
  %v551 = vadd.f32 %v542, %v549
  %v552 = vadd.f32 %v543, %v549
  %v553 = vadd.f32 %v544, %v549
  %v554 = vadd.f32 %v545, %v549
  %v555 = vmax.f32 %v551, 0.0
  %v556 = vmax.f32 %v552, 0.0
  %v557 = vmax.f32 %v553, 0.0
  %v558 = vmax.f32 %v554, 0.0
  %559 = vrot.lane.b32.xlu0 %v555, 34
  %v560 = vpop.permute.xlu0 %559
  %561 = vrot.lane.b32.xlu0 %v556, 34
  %v562 = vpop.permute.xlu0 %561
  %563 = vrot.lane.b32.xlu0 %v557, 34
  %v564 = vpop.permute.xlu0 %563
  %565 = vrot.lane.b32.xlu0 %v558, 34
  %v566 = vpop.permute.xlu0 %565
  %vm567 = vcmp.lt.s32.totalorder %v57, 34
  %v568 = vsel %vm567, %v564, %v566
  %v569 = vsel %vm567, %v562, %v564
  %v570 = vsel %vm567, %v560, %v562
  %v571 = vsel %vm567, %v566, %v560
  %v572 = vadd.s32 %v42, 4294967294
  %vm573 = vcmp.ge.s32.totalorder %v572, 0
  %vm574 = vcmp.lt.s32.totalorder %v572, 16
  %vm575 = vmand %vm573, %vm574
  %v576 = vadd.s32 %v43, 4294967294
  %vm577 = vcmp.ge.s32.totalorder %v576, 0
  %vm578 = vmand %vm575, %vm577
  %vm579 = vcmp.lt.s32.totalorder %v576, 16
  %vm580 = vmand %vm578, %vm579
  %v581 = vsel %vm580, 1, 0
  %v582 = vlaneseq
  %v583 = vshrl.u32 %v582, 7
  %v584 = vsub.s32 0, %v583
  %v585 = vrot.slane %v581, %v584
  %v586 = vlaneseq
  %v587 = vshrl.u32 %v586, 7
  %v588 = vsub.s32 1, %v587
  %v589 = vrot.slane %v581, %v588
  %v590 = vlaneseq
  %v591 = vshrl.u32 %v590, 7
  %v592 = vsub.s32 2, %v591
  %v593 = vrot.slane %v581, %v592
  %v594 = vlaneseq
  %v595 = vshrl.u32 %v594, 7
  %v596 = vsub.s32 3, %v595
  %v597 = vrot.slane %v581, %v596
  %vm598 = vcmp.eq.s32.totalorder %v585, 1
  %vm599 = vcmp.eq.s32.totalorder %v589, 1
  %vm600 = vcmp.eq.s32.totalorder %v593, 1
  %vm601 = vcmp.eq.s32.totalorder %v597, 1
  %v602 = vsel %vm598, %v571, 0.0
  %v603 = vsel %vm599, %v570, 0.0
  %v604 = vsel %vm600, %v569, 0.0
  %v605 = vsel %vm601, %v568, 0.0
  %606 = vrot.lane.b32.xlu0 %v555, 32
  %v607 = vpop.permute.xlu0 %606
  %608 = vrot.lane.b32.xlu0 %v556, 32
  %v609 = vpop.permute.xlu0 %608
  %610 = vrot.lane.b32.xlu0 %v557, 32
  %v611 = vpop.permute.xlu0 %610
  %612 = vrot.lane.b32.xlu0 %v558, 32
  %v613 = vpop.permute.xlu0 %612
  %vm614 = vcmp.lt.s32.totalorder %v57, 32
  %v615 = vsel %vm614, %v611, %v613
  %v616 = vsel %vm614, %v609, %v611
  %v617 = vsel %vm614, %v607, %v609
  %v618 = vsel %vm614, %v613, %v607
  %vm619 = vmand %vm575, %vm110
  %vm620 = vmand %vm619, %vm112
  %v621 = vsel %vm620, 1, 0
  %v622 = vlaneseq
  %v623 = vshrl.u32 %v622, 7
  %v624 = vsub.s32 0, %v623
  %v625 = vrot.slane %v621, %v624
  %v626 = vlaneseq
  %v627 = vshrl.u32 %v626, 7
  %v628 = vsub.s32 1, %v627
  %v629 = vrot.slane %v621, %v628
  %v630 = vlaneseq
  %v631 = vshrl.u32 %v630, 7
  %v632 = vsub.s32 2, %v631
  %v633 = vrot.slane %v621, %v632
  %v634 = vlaneseq
  %v635 = vshrl.u32 %v634, 7
  %v636 = vsub.s32 3, %v635
  %v637 = vrot.slane %v621, %v636
  %vm638 = vcmp.eq.s32.totalorder %v625, 1
  %vm639 = vcmp.eq.s32.totalorder %v629, 1
  %vm640 = vcmp.eq.s32.totalorder %v633, 1
  %vm641 = vcmp.eq.s32.totalorder %v637, 1
  %v642 = vsel %vm638, %v618, 0.0
  %v643 = vsel %vm639, %v617, 0.0
  %v644 = vsel %vm640, %v616, 0.0
  %v645 = vsel %vm641, %v615, 0.0
  %646 = vrot.lane.b32.xlu0 %v555, 30
  %v647 = vpop.permute.xlu0 %646
  %648 = vrot.lane.b32.xlu0 %v556, 30
  %v649 = vpop.permute.xlu0 %648
  %650 = vrot.lane.b32.xlu0 %v557, 30
  %v651 = vpop.permute.xlu0 %650
  %652 = vrot.lane.b32.xlu0 %v558, 30
  %v653 = vpop.permute.xlu0 %652
  %vm654 = vcmp.lt.s32.totalorder %v57, 30
  %v655 = vsel %vm654, %v651, %v653
  %v656 = vsel %vm654, %v649, %v651
  %v657 = vsel %vm654, %v647, %v649
  %v658 = vsel %vm654, %v653, %v647
  %v659 = vadd.s32 %v43, 2
  %vm660 = vcmp.ge.s32.totalorder %v659, 0
  %vm661 = vmand %vm575, %vm660
  %vm662 = vcmp.lt.s32.totalorder %v659, 16
  %vm663 = vmand %vm661, %vm662
  %v664 = vsel %vm663, 1, 0
  %v665 = vlaneseq
  %v666 = vshrl.u32 %v665, 7
  %v667 = vsub.s32 0, %v666
  %v668 = vrot.slane %v664, %v667
  %v669 = vlaneseq
  %v670 = vshrl.u32 %v669, 7
  %v671 = vsub.s32 1, %v670
  %v672 = vrot.slane %v664, %v671
  %v673 = vlaneseq
  %v674 = vshrl.u32 %v673, 7
  %v675 = vsub.s32 2, %v674
  %v676 = vrot.slane %v664, %v675
  %v677 = vlaneseq
  %v678 = vshrl.u32 %v677, 7
  %v679 = vsub.s32 3, %v678
  %v680 = vrot.slane %v664, %v679
  %vm681 = vcmp.eq.s32.totalorder %v668, 1
  %vm682 = vcmp.eq.s32.totalorder %v672, 1
  %vm683 = vcmp.eq.s32.totalorder %v676, 1
  %vm684 = vcmp.eq.s32.totalorder %v680, 1
  %v685 = vsel %vm681, %v658, 0.0
  %v686 = vsel %vm682, %v657, 0.0
  %v687 = vsel %vm683, %v656, 0.0
  %v688 = vsel %vm684, %v655, 0.0
  %689 = vrot.lane.b32.xlu0 %v555, 2
  %v690 = vpop.permute.xlu0 %689
  %691 = vrot.lane.b32.xlu0 %v556, 2
  %v692 = vpop.permute.xlu0 %691
  %693 = vrot.lane.b32.xlu0 %v557, 2
  %v694 = vpop.permute.xlu0 %693
  %695 = vrot.lane.b32.xlu0 %v558, 2
  %v696 = vpop.permute.xlu0 %695
  %vm697 = vcmp.lt.s32.totalorder %v57, 2
  %v698 = vsel %vm697, %v694, %v696
  %v699 = vsel %vm697, %v692, %v694
  %v700 = vsel %vm697, %v690, %v692
  %v701 = vsel %vm697, %v696, %v690
  %vm702 = vmand %vm197, %vm577
  %vm703 = vmand %vm702, %vm579
  %v704 = vsel %vm703, 1, 0
  %v705 = vlaneseq
  %v706 = vshrl.u32 %v705, 7
  %v707 = vsub.s32 0, %v706
  %v708 = vrot.slane %v704, %v707
  %v709 = vlaneseq
  %v710 = vshrl.u32 %v709, 7
  %v711 = vsub.s32 1, %v710
  %v712 = vrot.slane %v704, %v711
  %v713 = vlaneseq
  %v714 = vshrl.u32 %v713, 7
  %v715 = vsub.s32 2, %v714
  %v716 = vrot.slane %v704, %v715
  %v717 = vlaneseq
  %v718 = vshrl.u32 %v717, 7
  %v719 = vsub.s32 3, %v718
  %v720 = vrot.slane %v704, %v719
  %vm721 = vcmp.eq.s32.totalorder %v708, 1
  %vm722 = vcmp.eq.s32.totalorder %v712, 1
  %vm723 = vcmp.eq.s32.totalorder %v716, 1
  %vm724 = vcmp.eq.s32.totalorder %v720, 1
  %v725 = vsel %vm721, %v701, 0.0
  %v726 = vsel %vm722, %v700, 0.0
  %v727 = vsel %vm723, %v699, 0.0
  %v728 = vsel %vm724, %v698, 0.0
  %729 = vrot.lane.b32.xlu0 %v555, 126
  %v730 = vpop.permute.xlu0 %729
  %731 = vrot.lane.b32.xlu0 %v556, 126
  %v732 = vpop.permute.xlu0 %731
  %733 = vrot.lane.b32.xlu0 %v557, 126
  %v734 = vpop.permute.xlu0 %733
  %735 = vrot.lane.b32.xlu0 %v558, 126
  %v736 = vpop.permute.xlu0 %735
  %vm737 = vcmp.lt.s32.totalorder %v57, 126
  %v738 = vsel %vm737, %v734, %v736
  %v739 = vsel %vm737, %v732, %v734
  %v740 = vsel %vm737, %v730, %v732
  %v741 = vsel %vm737, %v736, %v730
  %vm742 = vmand %vm197, %vm660
  %vm743 = vmand %vm742, %vm662
  %v744 = vsel %vm743, 1, 0
  %v745 = vlaneseq
  %v746 = vshrl.u32 %v745, 7
  %v747 = vsub.s32 0, %v746
  %v748 = vrot.slane %v744, %v747
  %v749 = vlaneseq
  %v750 = vshrl.u32 %v749, 7
  %v751 = vsub.s32 1, %v750
  %v752 = vrot.slane %v744, %v751
  %v753 = vlaneseq
  %v754 = vshrl.u32 %v753, 7
  %v755 = vsub.s32 2, %v754
  %v756 = vrot.slane %v744, %v755
  %v757 = vlaneseq
  %v758 = vshrl.u32 %v757, 7
  %v759 = vsub.s32 3, %v758
  %v760 = vrot.slane %v744, %v759
  %vm761 = vcmp.eq.s32.totalorder %v748, 1
  %vm762 = vcmp.eq.s32.totalorder %v752, 1
  %vm763 = vcmp.eq.s32.totalorder %v756, 1
  %vm764 = vcmp.eq.s32.totalorder %v760, 1
  %v765 = vsel %vm761, %v740, 0.0
  %v766 = vsel %vm762, %v739, 0.0
  %v767 = vsel %vm763, %v738, 0.0
  %v768 = vsel %vm764, %v741, 0.0
  %769 = vrot.lane.b32.xlu0 %v555, 98
  %v770 = vpop.permute.xlu0 %769
  %771 = vrot.lane.b32.xlu0 %v556, 98
  %v772 = vpop.permute.xlu0 %771
  %773 = vrot.lane.b32.xlu0 %v557, 98
  %v774 = vpop.permute.xlu0 %773
  %775 = vrot.lane.b32.xlu0 %v558, 98
  %v776 = vpop.permute.xlu0 %775
  %vm777 = vcmp.lt.s32.totalorder %v57, 98
  %v778 = vsel %vm777, %v774, %v776
  %v779 = vsel %vm777, %v772, %v774
  %v780 = vsel %vm777, %v770, %v772
  %v781 = vsel %vm777, %v776, %v770
  %v782 = vadd.s32 %v42, 2
  %vm783 = vcmp.ge.s32.totalorder %v782, 0
  %vm784 = vcmp.lt.s32.totalorder %v782, 16
  %vm785 = vmand %vm783, %vm784
  %vm786 = vmand %vm785, %vm577
  %vm787 = vmand %vm786, %vm579
  %v788 = vsel %vm787, 1, 0
  %v789 = vlaneseq
  %v790 = vshrl.u32 %v789, 7
  %v791 = vsub.s32 0, %v790
  %v792 = vrot.slane %v788, %v791
  %v793 = vlaneseq
  %v794 = vshrl.u32 %v793, 7
  %v795 = vsub.s32 1, %v794
  %v796 = vrot.slane %v788, %v795
  %v797 = vlaneseq
  %v798 = vshrl.u32 %v797, 7
  %v799 = vsub.s32 2, %v798
  %v800 = vrot.slane %v788, %v799
  %v801 = vlaneseq
  %v802 = vshrl.u32 %v801, 7
  %v803 = vsub.s32 3, %v802
  %v804 = vrot.slane %v788, %v803
  %vm805 = vcmp.eq.s32.totalorder %v792, 1
  %vm806 = vcmp.eq.s32.totalorder %v796, 1
  %vm807 = vcmp.eq.s32.totalorder %v800, 1
  %vm808 = vcmp.eq.s32.totalorder %v804, 1
  %v809 = vsel %vm805, %v780, 0.0
  %v810 = vsel %vm806, %v779, 0.0
  %v811 = vsel %vm807, %v778, 0.0
  %v812 = vsel %vm808, %v781, 0.0
  %813 = vrot.lane.b32.xlu0 %v555, 96
  %v814 = vpop.permute.xlu0 %813
  %815 = vrot.lane.b32.xlu0 %v556, 96
  %v816 = vpop.permute.xlu0 %815
  %817 = vrot.lane.b32.xlu0 %v557, 96
  %v818 = vpop.permute.xlu0 %817
  %819 = vrot.lane.b32.xlu0 %v558, 96
  %v820 = vpop.permute.xlu0 %819
  %vm821 = vcmp.lt.s32.totalorder %v57, 96
  %v822 = vsel %vm821, %v818, %v820
  %v823 = vsel %vm821, %v816, %v818
  %v824 = vsel %vm821, %v814, %v816
  %v825 = vsel %vm821, %v820, %v814
  %vm826 = vmand %vm785, %vm110
  %vm827 = vmand %vm826, %vm112
  %v828 = vsel %vm827, 1, 0
  %v829 = vlaneseq
  %v830 = vshrl.u32 %v829, 7
  %v831 = vsub.s32 0, %v830
  %v832 = vrot.slane %v828, %v831
  %v833 = vlaneseq
  %v834 = vshrl.u32 %v833, 7
  %v835 = vsub.s32 1, %v834
  %v836 = vrot.slane %v828, %v835
  %v837 = vlaneseq
  %v838 = vshrl.u32 %v837, 7
  %v839 = vsub.s32 2, %v838
  %v840 = vrot.slane %v828, %v839
  %v841 = vlaneseq
  %v842 = vshrl.u32 %v841, 7
  %v843 = vsub.s32 3, %v842
  %v844 = vrot.slane %v828, %v843
  %vm845 = vcmp.eq.s32.totalorder %v832, 1
  %vm846 = vcmp.eq.s32.totalorder %v836, 1
  %vm847 = vcmp.eq.s32.totalorder %v840, 1
  %vm848 = vcmp.eq.s32.totalorder %v844, 1
  %v849 = vsel %vm845, %v824, 0.0
  %v850 = vsel %vm846, %v823, 0.0
  %v851 = vsel %vm847, %v822, 0.0
  %v852 = vsel %vm848, %v825, 0.0
  %853 = vrot.lane.b32.xlu0 %v555, 94
  %v854 = vpop.permute.xlu0 %853
  %855 = vrot.lane.b32.xlu0 %v556, 94
  %v856 = vpop.permute.xlu0 %855
  %857 = vrot.lane.b32.xlu0 %v557, 94
  %v858 = vpop.permute.xlu0 %857
  %859 = vrot.lane.b32.xlu0 %v558, 94
  %v860 = vpop.permute.xlu0 %859
  %vm861 = vcmp.lt.s32.totalorder %v57, 94
  %v862 = vsel %vm861, %v858, %v860
  %v863 = vsel %vm861, %v856, %v858
  %v864 = vsel %vm861, %v854, %v856
  %v865 = vsel %vm861, %v860, %v854
  %vm866 = vmand %vm785, %vm660
  %vm867 = vmand %vm866, %vm662
  %v868 = vsel %vm867, 1, 0
  %v869 = vlaneseq
  %v870 = vshrl.u32 %v869, 7
  %v871 = vsub.s32 0, %v870
  %v872 = vrot.slane %v868, %v871
  %v873 = vlaneseq
  %v874 = vshrl.u32 %v873, 7
  %v875 = vsub.s32 1, %v874
  %v876 = vrot.slane %v868, %v875
  %v877 = vlaneseq
  %v878 = vshrl.u32 %v877, 7
  %v879 = vsub.s32 2, %v878
  %v880 = vrot.slane %v868, %v879
  %v881 = vlaneseq
  %v882 = vshrl.u32 %v881, 7
  %v883 = vsub.s32 3, %v882
  %v884 = vrot.slane %v868, %v883
  %vm885 = vcmp.eq.s32.totalorder %v872, 1
  %vm886 = vcmp.eq.s32.totalorder %v876, 1
  %vm887 = vcmp.eq.s32.totalorder %v880, 1
  %vm888 = vcmp.eq.s32.totalorder %v884, 1
  %v889 = vsel %vm885, %v864, 0.0
  %v890 = vsel %vm886, %v863, 0.0
  %v891 = vsel %vm887, %v862, 0.0
  %v892 = vsel %vm888, %v865, 0.0
  %v893 = vpack.c.bf16 %v642, %v602
  %v894 = vpack.c.bf16 %v643, %v603
  %v895 = vpack.c.bf16 %v644, %v604
  %v896 = vpack.c.bf16 %v645, %v605
  %v897 = vpack.c.bf16 %v725, %v685
  %v898 = vpack.c.bf16 %v726, %v686
  %v899 = vpack.c.bf16 %v727, %v687
  %v900 = vpack.c.bf16 %v728, %v688
  %v901 = vpack.c.bf16 %v765, %v555
  %v902 = vpack.c.bf16 %v766, %v556
  %v903 = vpack.c.bf16 %v767, %v557
  %v904 = vpack.c.bf16 %v768, %v558
  %v905 = vpack.c.bf16 %v849, %v809
  %v906 = vpack.c.bf16 %v850, %v810
  %v907 = vpack.c.bf16 %v851, %v811
  %v908 = vpack.c.bf16 %v852, %v812
  %v909 = vpack.c.bf16 %v889, %v889
  %v910 = vpack.c.bf16 %v890, %v890
  %v911 = vpack.c.bf16 %v891, %v891
  %v912 = vpack.c.bf16 %v892, %v892
  %v913 = vld [vmem:[%s4] sm:$0xf]
  %v915 = vsel %vm410, %v913, 0
  %v918 = vsel %vm414, %v909, 0
  %v921 = vsel %vm414, %v910, 0
  %v924 = vsel %vm414, %v911, 0
  %v927 = vsel %vm414, %v912, 0
  %929 = vmatprep.subr.bf16.mxu0 %v894
  %930 = vmatpush1.bf16.msra.mxu0 %v893
  %931 = vmatprep.subr.bf16.mxu0 %v898
  %932 = vmatpush1.bf16.msra.mxu0 %v897
  %933 = vmatprep.subr.bf16.mxu0 %v902
  %934 = vmatpush1.bf16.msra.mxu0 %v901
  %935 = vmatprep.subr.bf16.mxu0 %v906
  %936 = vmatpush1.bf16.msra.mxu0 %v905
  %937 = vmatprep.subr.bf16.mxu0 %v921
  %938 = vmatpush1.bf16.msra.mxu0 %v918
  %939 = vmatprep.subr.bf16.mxu0 0
  %940 = vmatpush1.bf16.msra.mxu0 0
  %941 = vmatprep.subr.bf16.mxu0 0
  %942 = vmatpush1.bf16.msra.mxu0 0
  %943 = vmatprep.subr.bf16.mxu0 0
  %944 = vmatpush1.bf16.msra.mxu0 0
  %945 = vmatprep.subr.bf16.mxu0 0
  %946 = vmatpush1.bf16.msra.mxu0 0
  %947 = vmatprep.subr.bf16.mxu0 0
  %948 = vmatpush1.bf16.msra.mxu0 0
  %949 = vmatprep.subr.bf16.mxu0 0
  %950 = vmatpush1.bf16.msra.mxu0 0
  %951 = vmatprep.subr.bf16.mxu0 0
  %952 = vmatpush1.bf16.msra.mxu0 0
  %953 = vmatprep.subr.bf16.mxu0 0
  %954 = vmatpush1.bf16.msra.mxu0 0
  %955 = vmatprep.subr.bf16.mxu0 0
  %956 = vmatpush1.bf16.msra.mxu0 0
  %957 = vmatprep.subr.bf16.mxu0 0
  %958 = vmatpush1.bf16.msra.mxu0 0
  %959 = vmatprep.subr.bf16.mxu0 0
  %960 = vmatpush1.bf16.msra.mxu0 0
  %961 = vmatprep.mubr.bf16.mxu0 0
  %962 = vmatmul.mubr.bf16.gmra.mrb[0].mxu0 %v915
  %v963 = vpop.f32.mrb[0].mxu0
  %v964 = vadd.f32 0.0, %v963
  %v965 = vpop.f32.mrb[0].mxu0
  %v966 = vadd.f32 0.0, %v965
  %v967 = vpop.f32.mrb[0].mxu0
  %v968 = vpop.f32.mrb[0].mxu0
  %969 = vdwg.mxu0
  %970 = vmatprep.subr.bf16.mxu0 %v896
  %971 = vmatpush1.bf16.msra.mxu0 %v895
  %972 = vmatprep.subr.bf16.mxu0 %v900
  %973 = vmatpush1.bf16.msra.mxu0 %v899
  %974 = vmatprep.subr.bf16.mxu0 %v904
  %975 = vmatpush1.bf16.msra.mxu0 %v903
  %976 = vmatprep.subr.bf16.mxu0 %v908
  %977 = vmatpush1.bf16.msra.mxu0 %v907
  %978 = vmatprep.subr.bf16.mxu0 %v927
  %979 = vmatpush1.bf16.msra.mxu0 %v924
  %980 = vmatprep.subr.bf16.mxu0 0
  %981 = vmatpush1.bf16.msra.mxu0 0
  %982 = vmatprep.subr.bf16.mxu0 0
  %983 = vmatpush1.bf16.msra.mxu0 0
  %984 = vmatprep.subr.bf16.mxu0 0
  %985 = vmatpush1.bf16.msra.mxu0 0
  %986 = vmatprep.subr.bf16.mxu0 0
  %987 = vmatpush1.bf16.msra.mxu0 0
  %988 = vmatprep.subr.bf16.mxu0 0
  %989 = vmatpush1.bf16.msra.mxu0 0
  %990 = vmatprep.subr.bf16.mxu0 0
  %991 = vmatpush1.bf16.msra.mxu0 0
  %992 = vmatprep.subr.bf16.mxu0 0
  %993 = vmatpush1.bf16.msra.mxu0 0
  %994 = vmatprep.subr.bf16.mxu0 0
  %995 = vmatpush1.bf16.msra.mxu0 0
  %996 = vmatprep.subr.bf16.mxu0 0
  %997 = vmatpush1.bf16.msra.mxu0 0
  %998 = vmatprep.subr.bf16.mxu0 0
  %999 = vmatpush1.bf16.msra.mxu0 0
  %1000 = vmatprep.subr.bf16.mxu0 0
  %1001 = vmatpush1.bf16.msra.mxu0 0
  %1002 = vmatprep.mubr.bf16.mxu0 0
  %1003 = vmatmul.mubr.bf16.gmra.mrb[0].mxu0 %v915
  %v1004 = vpop.f32.mrb[0].mxu0
  %v1005 = vadd.f32 0.0, %v1004
  %v1006 = vpop.f32.mrb[0].mxu0
  %v1007 = vadd.f32 0.0, %v1006
  %v1008 = vpop.f32.mrb[0].mxu0
  %v1009 = vpop.f32.mrb[0].mxu0
  %1010 = vdwg.mxu0
  %1011 = vrot.lane.b32.xlu0 %v555, 51
  %v1012 = vpop.permute.xlu0 %1011
  %1013 = vrot.lane.b32.xlu0 %v556, 51
  %v1014 = vpop.permute.xlu0 %1013
  %1015 = vrot.lane.b32.xlu0 %v557, 51
  %v1016 = vpop.permute.xlu0 %1015
  %1017 = vrot.lane.b32.xlu0 %v558, 51
  %v1018 = vpop.permute.xlu0 %1017
  %vm1019 = vcmp.lt.s32.totalorder %v57, 51
  %v1020 = vsel %vm1019, %v1016, %v1018
  %v1021 = vsel %vm1019, %v1014, %v1016
  %v1022 = vsel %vm1019, %v1012, %v1014
  %v1023 = vsel %vm1019, %v1018, %v1012
  %v1024 = vadd.s32 %v42, 4294967293
  %vm1025 = vcmp.ge.s32.totalorder %v1024, 0
  %vm1026 = vcmp.lt.s32.totalorder %v1024, 16
  %vm1027 = vmand %vm1025, %vm1026
  %v1028 = vadd.s32 %v43, 4294967293
  %vm1029 = vcmp.ge.s32.totalorder %v1028, 0
  %vm1030 = vmand %vm1027, %vm1029
  %vm1031 = vcmp.lt.s32.totalorder %v1028, 16
  %vm1032 = vmand %vm1030, %vm1031
  %v1033 = vsel %vm1032, 1, 0
  %v1034 = vlaneseq
  %v1035 = vshrl.u32 %v1034, 7
  %v1036 = vsub.s32 0, %v1035
  %v1037 = vrot.slane %v1033, %v1036
  %v1038 = vlaneseq
  %v1039 = vshrl.u32 %v1038, 7
  %v1040 = vsub.s32 1, %v1039
  %v1041 = vrot.slane %v1033, %v1040
  %v1042 = vlaneseq
  %v1043 = vshrl.u32 %v1042, 7
  %v1044 = vsub.s32 2, %v1043
  %v1045 = vrot.slane %v1033, %v1044
  %v1046 = vlaneseq
  %v1047 = vshrl.u32 %v1046, 7
  %v1048 = vsub.s32 3, %v1047
  %v1049 = vrot.slane %v1033, %v1048
  %vm1050 = vcmp.eq.s32.totalorder %v1037, 1
  %vm1051 = vcmp.eq.s32.totalorder %v1041, 1
  %vm1052 = vcmp.eq.s32.totalorder %v1045, 1
  %vm1053 = vcmp.eq.s32.totalorder %v1049, 1
  %v1054 = vsel %vm1050, %v1023, 0.0
  %v1055 = vsel %vm1051, %v1022, 0.0
  %v1056 = vsel %vm1052, %v1021, 0.0
  %v1057 = vsel %vm1053, %v1020, 0.0
  %1058 = vrot.lane.b32.xlu0 %v555, 48
  %v1059 = vpop.permute.xlu0 %1058
  %1060 = vrot.lane.b32.xlu0 %v556, 48
  %v1061 = vpop.permute.xlu0 %1060
  %1062 = vrot.lane.b32.xlu0 %v557, 48
  %v1063 = vpop.permute.xlu0 %1062
  %1064 = vrot.lane.b32.xlu0 %v558, 48
  %v1065 = vpop.permute.xlu0 %1064
  %vm1066 = vcmp.lt.s32.totalorder %v57, 48
  %v1067 = vsel %vm1066, %v1063, %v1065
  %v1068 = vsel %vm1066, %v1061, %v1063
  %v1069 = vsel %vm1066, %v1059, %v1061
  %v1070 = vsel %vm1066, %v1065, %v1059
  %vm1071 = vmand %vm1027, %vm110
  %vm1072 = vmand %vm1071, %vm112
  %v1073 = vsel %vm1072, 1, 0
  %v1074 = vlaneseq
  %v1075 = vshrl.u32 %v1074, 7
  %v1076 = vsub.s32 0, %v1075
  %v1077 = vrot.slane %v1073, %v1076
  %v1078 = vlaneseq
  %v1079 = vshrl.u32 %v1078, 7
  %v1080 = vsub.s32 1, %v1079
  %v1081 = vrot.slane %v1073, %v1080
  %v1082 = vlaneseq
  %v1083 = vshrl.u32 %v1082, 7
  %v1084 = vsub.s32 2, %v1083
  %v1085 = vrot.slane %v1073, %v1084
  %v1086 = vlaneseq
  %v1087 = vshrl.u32 %v1086, 7
  %v1088 = vsub.s32 3, %v1087
  %v1089 = vrot.slane %v1073, %v1088
  %vm1090 = vcmp.eq.s32.totalorder %v1077, 1
  %vm1091 = vcmp.eq.s32.totalorder %v1081, 1
  %vm1092 = vcmp.eq.s32.totalorder %v1085, 1
  %vm1093 = vcmp.eq.s32.totalorder %v1089, 1
  %v1094 = vsel %vm1090, %v1070, 0.0
  %v1095 = vsel %vm1091, %v1069, 0.0
  %v1096 = vsel %vm1092, %v1068, 0.0
  %v1097 = vsel %vm1093, %v1067, 0.0
  %1098 = vrot.lane.b32.xlu0 %v555, 45
  %v1099 = vpop.permute.xlu0 %1098
  %1100 = vrot.lane.b32.xlu0 %v556, 45
  %v1101 = vpop.permute.xlu0 %1100
  %1102 = vrot.lane.b32.xlu0 %v557, 45
  %v1103 = vpop.permute.xlu0 %1102
  %1104 = vrot.lane.b32.xlu0 %v558, 45
  %v1105 = vpop.permute.xlu0 %1104
  %vm1106 = vcmp.lt.s32.totalorder %v57, 45
  %v1107 = vsel %vm1106, %v1103, %v1105
  %v1108 = vsel %vm1106, %v1101, %v1103
  %v1109 = vsel %vm1106, %v1099, %v1101
  %v1110 = vsel %vm1106, %v1105, %v1099
  %v1111 = vadd.s32 %v43, 3
  %vm1112 = vcmp.ge.s32.totalorder %v1111, 0
  %vm1113 = vmand %vm1027, %vm1112
  %vm1114 = vcmp.lt.s32.totalorder %v1111, 16
  %vm1115 = vmand %vm1113, %vm1114
  %v1116 = vsel %vm1115, 1, 0
  %v1117 = vlaneseq
  %v1118 = vshrl.u32 %v1117, 7
  %v1119 = vsub.s32 0, %v1118
  %v1120 = vrot.slane %v1116, %v1119
  %v1121 = vlaneseq
  %v1122 = vshrl.u32 %v1121, 7
  %v1123 = vsub.s32 1, %v1122
  %v1124 = vrot.slane %v1116, %v1123
  %v1125 = vlaneseq
  %v1126 = vshrl.u32 %v1125, 7
  %v1127 = vsub.s32 2, %v1126
  %v1128 = vrot.slane %v1116, %v1127
  %v1129 = vlaneseq
  %v1130 = vshrl.u32 %v1129, 7
  %v1131 = vsub.s32 3, %v1130
  %v1132 = vrot.slane %v1116, %v1131
  %vm1133 = vcmp.eq.s32.totalorder %v1120, 1
  %vm1134 = vcmp.eq.s32.totalorder %v1124, 1
  %vm1135 = vcmp.eq.s32.totalorder %v1128, 1
  %vm1136 = vcmp.eq.s32.totalorder %v1132, 1
  %v1137 = vsel %vm1133, %v1110, 0.0
  %v1138 = vsel %vm1134, %v1109, 0.0
  %v1139 = vsel %vm1135, %v1108, 0.0
  %v1140 = vsel %vm1136, %v1107, 0.0
  %1141 = vrot.lane.b32.xlu0 %v555, 3
  %v1142 = vpop.permute.xlu0 %1141
  %1143 = vrot.lane.b32.xlu0 %v556, 3
  %v1144 = vpop.permute.xlu0 %1143
  %1145 = vrot.lane.b32.xlu0 %v557, 3
  %v1146 = vpop.permute.xlu0 %1145
  %1147 = vrot.lane.b32.xlu0 %v558, 3
  %v1148 = vpop.permute.xlu0 %1147
  %vm1149 = vcmp.lt.s32.totalorder %v57, 3
  %v1150 = vsel %vm1149, %v1146, %v1148
  %v1151 = vsel %vm1149, %v1144, %v1146
  %v1152 = vsel %vm1149, %v1142, %v1144
  %v1153 = vsel %vm1149, %v1148, %v1142
  %vm1154 = vmand %vm197, %vm1029
  %vm1155 = vmand %vm1154, %vm1031
  %v1156 = vsel %vm1155, 1, 0
  %v1157 = vlaneseq
  %v1158 = vshrl.u32 %v1157, 7
  %v1159 = vsub.s32 0, %v1158
  %v1160 = vrot.slane %v1156, %v1159
  %v1161 = vlaneseq
  %v1162 = vshrl.u32 %v1161, 7
  %v1163 = vsub.s32 1, %v1162
  %v1164 = vrot.slane %v1156, %v1163
  %v1165 = vlaneseq
  %v1166 = vshrl.u32 %v1165, 7
  %v1167 = vsub.s32 2, %v1166
  %v1168 = vrot.slane %v1156, %v1167
  %v1169 = vlaneseq
  %v1170 = vshrl.u32 %v1169, 7
  %v1171 = vsub.s32 3, %v1170
  %v1172 = vrot.slane %v1156, %v1171
  %vm1173 = vcmp.eq.s32.totalorder %v1160, 1
  %vm1174 = vcmp.eq.s32.totalorder %v1164, 1
  %vm1175 = vcmp.eq.s32.totalorder %v1168, 1
  %vm1176 = vcmp.eq.s32.totalorder %v1172, 1
  %v1177 = vsel %vm1173, %v1153, 0.0
  %v1178 = vsel %vm1174, %v1152, 0.0
  %v1179 = vsel %vm1175, %v1151, 0.0
  %v1180 = vsel %vm1176, %v1150, 0.0
  %1181 = vrot.lane.b32.xlu0 %v555, 125
  %v1182 = vpop.permute.xlu0 %1181
  %1183 = vrot.lane.b32.xlu0 %v556, 125
  %v1184 = vpop.permute.xlu0 %1183
  %1185 = vrot.lane.b32.xlu0 %v557, 125
  %v1186 = vpop.permute.xlu0 %1185
  %1187 = vrot.lane.b32.xlu0 %v558, 125
  %v1188 = vpop.permute.xlu0 %1187
  %vm1189 = vcmp.lt.s32.totalorder %v57, 125
  %v1190 = vsel %vm1189, %v1186, %v1188
  %v1191 = vsel %vm1189, %v1184, %v1186
  %v1192 = vsel %vm1189, %v1182, %v1184
  %v1193 = vsel %vm1189, %v1188, %v1182
  %vm1194 = vmand %vm197, %vm1112
  %vm1195 = vmand %vm1194, %vm1114
  %v1196 = vsel %vm1195, 1, 0
  %v1197 = vlaneseq
  %v1198 = vshrl.u32 %v1197, 7
  %v1199 = vsub.s32 0, %v1198
  %v1200 = vrot.slane %v1196, %v1199
  %v1201 = vlaneseq
  %v1202 = vshrl.u32 %v1201, 7
  %v1203 = vsub.s32 1, %v1202
  %v1204 = vrot.slane %v1196, %v1203
  %v1205 = vlaneseq
  %v1206 = vshrl.u32 %v1205, 7
  %v1207 = vsub.s32 2, %v1206
  %v1208 = vrot.slane %v1196, %v1207
  %v1209 = vlaneseq
  %v1210 = vshrl.u32 %v1209, 7
  %v1211 = vsub.s32 3, %v1210
  %v1212 = vrot.slane %v1196, %v1211
  %vm1213 = vcmp.eq.s32.totalorder %v1200, 1
  %vm1214 = vcmp.eq.s32.totalorder %v1204, 1
  %vm1215 = vcmp.eq.s32.totalorder %v1208, 1
  %vm1216 = vcmp.eq.s32.totalorder %v1212, 1
  %v1217 = vsel %vm1213, %v1192, 0.0
  %v1218 = vsel %vm1214, %v1191, 0.0
  %v1219 = vsel %vm1215, %v1190, 0.0
  %v1220 = vsel %vm1216, %v1193, 0.0
  %1221 = vrot.lane.b32.xlu0 %v555, 83
  %v1222 = vpop.permute.xlu0 %1221
  %1223 = vrot.lane.b32.xlu0 %v556, 83
  %v1224 = vpop.permute.xlu0 %1223
  %1225 = vrot.lane.b32.xlu0 %v557, 83
  %v1226 = vpop.permute.xlu0 %1225
  %1227 = vrot.lane.b32.xlu0 %v558, 83
  %v1228 = vpop.permute.xlu0 %1227
  %vm1229 = vcmp.lt.s32.totalorder %v57, 83
  %v1230 = vsel %vm1229, %v1226, %v1228
  %v1231 = vsel %vm1229, %v1224, %v1226
  %v1232 = vsel %vm1229, %v1222, %v1224
  %v1233 = vsel %vm1229, %v1228, %v1222
  %v1234 = vadd.s32 %v42, 3
  %vm1235 = vcmp.ge.s32.totalorder %v1234, 0
  %vm1236 = vcmp.lt.s32.totalorder %v1234, 16
  %vm1237 = vmand %vm1235, %vm1236
  %vm1238 = vmand %vm1237, %vm1029
  %vm1239 = vmand %vm1238, %vm1031
  %v1240 = vsel %vm1239, 1, 0
  %v1241 = vlaneseq
  %v1242 = vshrl.u32 %v1241, 7
  %v1243 = vsub.s32 0, %v1242
  %v1244 = vrot.slane %v1240, %v1243
  %v1245 = vlaneseq
  %v1246 = vshrl.u32 %v1245, 7
  %v1247 = vsub.s32 1, %v1246
  %v1248 = vrot.slane %v1240, %v1247
  %v1249 = vlaneseq
  %v1250 = vshrl.u32 %v1249, 7
  %v1251 = vsub.s32 2, %v1250
  %v1252 = vrot.slane %v1240, %v1251
  %v1253 = vlaneseq
  %v1254 = vshrl.u32 %v1253, 7
  %v1255 = vsub.s32 3, %v1254
  %v1256 = vrot.slane %v1240, %v1255
  %vm1257 = vcmp.eq.s32.totalorder %v1244, 1
  %vm1258 = vcmp.eq.s32.totalorder %v1248, 1
  %vm1259 = vcmp.eq.s32.totalorder %v1252, 1
  %vm1260 = vcmp.eq.s32.totalorder %v1256, 1
  %v1261 = vsel %vm1257, %v1232, 0.0
  %v1262 = vsel %vm1258, %v1231, 0.0
  %v1263 = vsel %vm1259, %v1230, 0.0
  %v1264 = vsel %vm1260, %v1233, 0.0
  %1265 = vrot.lane.b32.xlu0 %v555, 80
  %v1266 = vpop.permute.xlu0 %1265
  %1267 = vrot.lane.b32.xlu0 %v556, 80
  %v1268 = vpop.permute.xlu0 %1267
  %1269 = vrot.lane.b32.xlu0 %v557, 80
  %v1270 = vpop.permute.xlu0 %1269
  %1271 = vrot.lane.b32.xlu0 %v558, 80
  %v1272 = vpop.permute.xlu0 %1271
  %vm1273 = vcmp.lt.s32.totalorder %v57, 80
  %v1274 = vsel %vm1273, %v1270, %v1272
  %v1275 = vsel %vm1273, %v1268, %v1270
  %v1276 = vsel %vm1273, %v1266, %v1268
  %v1277 = vsel %vm1273, %v1272, %v1266
  %vm1278 = vmand %vm1237, %vm110
  %vm1279 = vmand %vm1278, %vm112
  %v1280 = vsel %vm1279, 1, 0
  %v1281 = vlaneseq
  %v1282 = vshrl.u32 %v1281, 7
  %v1283 = vsub.s32 0, %v1282
  %v1284 = vrot.slane %v1280, %v1283
  %v1285 = vlaneseq
  %v1286 = vshrl.u32 %v1285, 7
  %v1287 = vsub.s32 1, %v1286
  %v1288 = vrot.slane %v1280, %v1287
  %v1289 = vlaneseq
  %v1290 = vshrl.u32 %v1289, 7
  %v1291 = vsub.s32 2, %v1290
  %v1292 = vrot.slane %v1280, %v1291
  %v1293 = vlaneseq
  %v1294 = vshrl.u32 %v1293, 7
  %v1295 = vsub.s32 3, %v1294
  %v1296 = vrot.slane %v1280, %v1295
  %vm1297 = vcmp.eq.s32.totalorder %v1284, 1
  %vm1298 = vcmp.eq.s32.totalorder %v1288, 1
  %vm1299 = vcmp.eq.s32.totalorder %v1292, 1
  %vm1300 = vcmp.eq.s32.totalorder %v1296, 1
  %v1301 = vsel %vm1297, %v1276, 0.0
  %v1302 = vsel %vm1298, %v1275, 0.0
  %v1303 = vsel %vm1299, %v1274, 0.0
  %v1304 = vsel %vm1300, %v1277, 0.0
  %1305 = vrot.lane.b32.xlu0 %v555, 77
  %v1306 = vpop.permute.xlu0 %1305
  %1307 = vrot.lane.b32.xlu0 %v556, 77
  %v1308 = vpop.permute.xlu0 %1307
  %1309 = vrot.lane.b32.xlu0 %v557, 77
  %v1310 = vpop.permute.xlu0 %1309
  %1311 = vrot.lane.b32.xlu0 %v558, 77
  %v1312 = vpop.permute.xlu0 %1311
  %vm1313 = vcmp.lt.s32.totalorder %v57, 77
  %v1314 = vsel %vm1313, %v1310, %v1312
  %v1315 = vsel %vm1313, %v1308, %v1310
  %v1316 = vsel %vm1313, %v1306, %v1308
  %v1317 = vsel %vm1313, %v1312, %v1306
  %vm1318 = vmand %vm1237, %vm1112
  %vm1319 = vmand %vm1318, %vm1114
  %v1320 = vsel %vm1319, 1, 0
  %v1321 = vlaneseq
  %v1322 = vshrl.u32 %v1321, 7
  %v1323 = vsub.s32 0, %v1322
  %v1324 = vrot.slane %v1320, %v1323
  %v1325 = vlaneseq
  %v1326 = vshrl.u32 %v1325, 7
  %v1327 = vsub.s32 1, %v1326
  %v1328 = vrot.slane %v1320, %v1327
  %v1329 = vlaneseq
  %v1330 = vshrl.u32 %v1329, 7
  %v1331 = vsub.s32 2, %v1330
  %v1332 = vrot.slane %v1320, %v1331
  %v1333 = vlaneseq
  %v1334 = vshrl.u32 %v1333, 7
  %v1335 = vsub.s32 3, %v1334
  %v1336 = vrot.slane %v1320, %v1335
  %vm1337 = vcmp.eq.s32.totalorder %v1324, 1
  %vm1338 = vcmp.eq.s32.totalorder %v1328, 1
  %vm1339 = vcmp.eq.s32.totalorder %v1332, 1
  %vm1340 = vcmp.eq.s32.totalorder %v1336, 1
  %v1341 = vsel %vm1337, %v1316, 0.0
  %v1342 = vsel %vm1338, %v1315, 0.0
  %v1343 = vsel %vm1339, %v1314, 0.0
  %v1344 = vsel %vm1340, %v1317, 0.0
  %v1345 = vpack.c.bf16 %v1094, %v1054
  %v1346 = vpack.c.bf16 %v1095, %v1055
  %v1347 = vpack.c.bf16 %v1096, %v1056
  %v1348 = vpack.c.bf16 %v1097, %v1057
  %v1349 = vpack.c.bf16 %v1177, %v1137
  %v1350 = vpack.c.bf16 %v1178, %v1138
  %v1351 = vpack.c.bf16 %v1179, %v1139
  %v1352 = vpack.c.bf16 %v1180, %v1140
  %v1353 = vpack.c.bf16 %v1217, %v555
  %v1354 = vpack.c.bf16 %v1218, %v556
  %v1355 = vpack.c.bf16 %v1219, %v557
  %v1356 = vpack.c.bf16 %v1220, %v558
  %v1357 = vpack.c.bf16 %v1301, %v1261
  %v1358 = vpack.c.bf16 %v1302, %v1262
  %v1359 = vpack.c.bf16 %v1303, %v1263
  %v1360 = vpack.c.bf16 %v1304, %v1264
  %v1361 = vpack.c.bf16 %v1341, %v1341
  %v1362 = vpack.c.bf16 %v1342, %v1342
  %v1363 = vpack.c.bf16 %v1343, %v1343
  %v1364 = vpack.c.bf16 %v1344, %v1344
  %v1365 = vld [vmem:[%s5] sm:$0xf]
  %v1367 = vsel %vm410, %v1365, 0
  %v1370 = vsel %vm414, %v1361, 0
  %v1373 = vsel %vm414, %v1362, 0
  %v1376 = vsel %vm414, %v1363, 0
  %v1379 = vsel %vm414, %v1364, 0
  %1381 = vmatprep.subr.bf16.mxu0 %v1346
  %1382 = vmatpush1.bf16.msra.mxu0 %v1345
  %1383 = vmatprep.subr.bf16.mxu0 %v1350
  %1384 = vmatpush1.bf16.msra.mxu0 %v1349
  %1385 = vmatprep.subr.bf16.mxu0 %v1354
  %1386 = vmatpush1.bf16.msra.mxu0 %v1353
  %1387 = vmatprep.subr.bf16.mxu0 %v1358
  %1388 = vmatpush1.bf16.msra.mxu0 %v1357
  %1389 = vmatprep.subr.bf16.mxu0 %v1373
  %1390 = vmatpush1.bf16.msra.mxu0 %v1370
  %1391 = vmatprep.subr.bf16.mxu0 0
  %1392 = vmatpush1.bf16.msra.mxu0 0
  %1393 = vmatprep.subr.bf16.mxu0 0
  %1394 = vmatpush1.bf16.msra.mxu0 0
  %1395 = vmatprep.subr.bf16.mxu0 0
  %1396 = vmatpush1.bf16.msra.mxu0 0
  %1397 = vmatprep.subr.bf16.mxu0 0
  %1398 = vmatpush1.bf16.msra.mxu0 0
  %1399 = vmatprep.subr.bf16.mxu0 0
  %1400 = vmatpush1.bf16.msra.mxu0 0
  %1401 = vmatprep.subr.bf16.mxu0 0
  %1402 = vmatpush1.bf16.msra.mxu0 0
  %1403 = vmatprep.subr.bf16.mxu0 0
  %1404 = vmatpush1.bf16.msra.mxu0 0
  %1405 = vmatprep.subr.bf16.mxu0 0
  %1406 = vmatpush1.bf16.msra.mxu0 0
  %1407 = vmatprep.subr.bf16.mxu0 0
  %1408 = vmatpush1.bf16.msra.mxu0 0
  %1409 = vmatprep.subr.bf16.mxu0 0
  %1410 = vmatpush1.bf16.msra.mxu0 0
  %1411 = vmatprep.subr.bf16.mxu0 0
  %1412 = vmatpush1.bf16.msra.mxu0 0
  %1413 = vmatprep.mubr.bf16.mxu0 0
  %1414 = vmatmul.mubr.bf16.gmra.mrb[0].mxu0 %v1367
  %v1415 = vpop.f32.mrb[0].mxu0
  %v1416 = vadd.f32 0.0, %v1415
  %v1417 = vpop.f32.mrb[0].mxu0
  %v1418 = vadd.f32 0.0, %v1417
  %v1419 = vpop.f32.mrb[0].mxu0
  %v1420 = vpop.f32.mrb[0].mxu0
  %1421 = vdwg.mxu0
  %1422 = vmatprep.subr.bf16.mxu0 %v1348
  %1423 = vmatpush1.bf16.msra.mxu0 %v1347
  %1424 = vmatprep.subr.bf16.mxu0 %v1352
  %1425 = vmatpush1.bf16.msra.mxu0 %v1351
  %1426 = vmatprep.subr.bf16.mxu0 %v1356
  %1427 = vmatpush1.bf16.msra.mxu0 %v1355
  %1428 = vmatprep.subr.bf16.mxu0 %v1360
  %1429 = vmatpush1.bf16.msra.mxu0 %v1359
  %1430 = vmatprep.subr.bf16.mxu0 %v1379
  %1431 = vmatpush1.bf16.msra.mxu0 %v1376
  %1432 = vmatprep.subr.bf16.mxu0 0
  %1433 = vmatpush1.bf16.msra.mxu0 0
  %1434 = vmatprep.subr.bf16.mxu0 0
  %1435 = vmatpush1.bf16.msra.mxu0 0
  %1436 = vmatprep.subr.bf16.mxu0 0
  %1437 = vmatpush1.bf16.msra.mxu0 0
  %1438 = vmatprep.subr.bf16.mxu0 0
  %1439 = vmatpush1.bf16.msra.mxu0 0
  %1440 = vmatprep.subr.bf16.mxu0 0
  %1441 = vmatpush1.bf16.msra.mxu0 0
  %1442 = vmatprep.subr.bf16.mxu0 0
  %1443 = vmatpush1.bf16.msra.mxu0 0
  %1444 = vmatprep.subr.bf16.mxu0 0
  %1445 = vmatpush1.bf16.msra.mxu0 0
  %1446 = vmatprep.subr.bf16.mxu0 0
  %1447 = vmatpush1.bf16.msra.mxu0 0
  %1448 = vmatprep.subr.bf16.mxu0 0
  %1449 = vmatpush1.bf16.msra.mxu0 0
  %1450 = vmatprep.subr.bf16.mxu0 0
  %1451 = vmatpush1.bf16.msra.mxu0 0
  %1452 = vmatprep.subr.bf16.mxu0 0
  %1453 = vmatpush1.bf16.msra.mxu0 0
  %1454 = vmatprep.mubr.bf16.mxu0 0
  %1455 = vmatmul.mubr.bf16.gmra.mrb[0].mxu0 %v1367
  %v1456 = vpop.f32.mrb[0].mxu0
  %v1457 = vadd.f32 0.0, %v1456
  %v1458 = vpop.f32.mrb[0].mxu0
  %v1459 = vadd.f32 0.0, %v1458
  %v1460 = vpop.f32.mrb[0].mxu0
  %v1461 = vpop.f32.mrb[0].mxu0
  %1462 = vdwg.mxu0
  %v1463 = vld [vmem:[%s10] sm:$0xff]
  %v1464 = vld [vmem:[%s10 + $0x8] sm:$0xff]
  %v1465 = vld [vmem:[%s11] sm:$0xff]
  %v1466 = vld [vmem:[%s11 + $0x8] sm:$0xff]
  %v1467 = vadd.f32 %v964, %v966
  %v1468 = vadd.f32 %v1467, %v1005
  %v1469 = vadd.f32 %v1468, %v1007
  %1470 = vadd.xlane.f32.xlu0 %v1469
  %v1471 = vpop.xlane.xlu0 %1470
  %v1472 = vadd.f32 %v1416, %v1418
  %v1473 = vadd.f32 %v1472, %v1457
  %v1474 = vadd.f32 %v1473, %v1459
  %1475 = vadd.xlane.f32.xlu0 %v1474
  %v1476 = vpop.xlane.xlu0 %1475
  %v1477 = vmul.f32 %v964, %v964
  %v1478 = vmul.f32 %v966, %v966
  %v1479 = vmul.f32 %v1005, %v1005
  %v1480 = vmul.f32 %v1007, %v1007
  %v1481 = vmul.f32 %v1416, %v1416
  %v1482 = vmul.f32 %v1418, %v1418
  %v1483 = vmul.f32 %v1457, %v1457
  %v1484 = vmul.f32 %v1459, %v1459
  %v1485 = vadd.f32 %v1477, %v1478
  %v1486 = vadd.f32 %v1485, %v1479
  %v1487 = vadd.f32 %v1486, %v1480
  %1488 = vadd.xlane.f32.xlu0 %v1487
  %v1489 = vpop.xlane.xlu0 %1488
  %v1490 = vadd.f32 %v1481, %v1482
  %v1491 = vadd.f32 %v1490, %v1483
  %v1492 = vadd.f32 %v1491, %v1484
  %1493 = vadd.xlane.f32.xlu0 %v1492
  %v1494 = vpop.xlane.xlu0 %1493
  %v1495 = vmul.f32 %v1471, 0.001953125
  %v1496 = vmul.f32 %v1476, 0.001953125
  %v1497 = vmul.f32 %v1489, 0.001953125
  %v1498 = vmul.f32 %v1494, 0.001953125
  %v1499 = vmul.f32 %v1495, %v1495
  %v1500 = vmul.f32 %v1496, %v1496
  %v1501 = vsub.f32 %v1497, %v1499
  %v1502 = vsub.f32 %v1498, %v1500
  %v1503 = vmax.f32 %v1501, 0.0
  %v1504 = vmax.f32 %v1502, 0.0
  %v1505 = vsub.f32 %v964, %v1495
  %v1506 = vsub.f32 %v966, %v1495
  %v1507 = vsub.f32 %v1005, %v1495
  %v1508 = vsub.f32 %v1007, %v1495
  %v1509 = vsub.f32 %v1416, %v1496
  %v1510 = vsub.f32 %v1418, %v1496
  %v1511 = vsub.f32 %v1457, %v1496
  %v1512 = vsub.f32 %v1459, %v1496
  %v1513 = vadd.f32 %v1503, 1e-05
  %v1514 = vadd.f32 %v1504, 1e-05
  %v1515 = vrsqrt.pop %v1513
  %v1516 = vrsqrt.pop %v1514
  %v1517 = vmul.f32 %v1515, %v1463
  %v1518 = vmul.f32 %v1516, %v1464
  %1520 = vset.pattern.permute.xlu0 0
  %1521 = vperm.xlu0 %1520, %v1517
  %v1522 = vpop.permute.xlu0 %1521
  %1525 = vset.pattern.permute.xlu0 0
  %1526 = vperm.xlu0 %1525, %v1518
  %v1527 = vpop.permute.xlu0 %1526
  %v1529 = vmul.f32 %v1505, %v1522
  %v1530 = vmul.f32 %v1506, %v1522
  %v1531 = vmul.f32 %v1507, %v1522
  %v1532 = vmul.f32 %v1508, %v1522
  %v1533 = vmul.f32 %v1509, %v1527
  %v1534 = vmul.f32 %v1510, %v1527
  %v1535 = vmul.f32 %v1511, %v1527
  %v1536 = vmul.f32 %v1512, %v1527
  %1538 = vset.pattern.permute.xlu0 0
  %1539 = vperm.xlu0 %1538, %v1465
  %v1540 = vpop.permute.xlu0 %1539
  %1543 = vset.pattern.permute.xlu0 0
  %1544 = vperm.xlu0 %1543, %v1466
  %v1545 = vpop.permute.xlu0 %1544
  %v1547 = vadd.f32 %v1529, %v1540
  %v1548 = vadd.f32 %v1530, %v1540
  %v1549 = vadd.f32 %v1531, %v1540
  %v1550 = vadd.f32 %v1532, %v1540
  %v1551 = vadd.f32 %v1533, %v1545
  %v1552 = vadd.f32 %v1534, %v1545
  %v1553 = vadd.f32 %v1535, %v1545
  %v1554 = vadd.f32 %v1536, %v1545
  %v1555 = vmax.f32 %v1547, 0.0
  %v1556 = vmax.f32 %v1548, 0.0
  %v1557 = vmax.f32 %v1549, 0.0
  %v1558 = vmax.f32 %v1550, 0.0
  %v1559 = vmax.f32 %v1551, 0.0
  %v1560 = vmax.f32 %v1552, 0.0
  %v1561 = vmax.f32 %v1553, 0.0
  %v1562 = vmax.f32 %v1554, 0.0
  %1563 = vrot.lane.b32.xlu0 %v1555, 17
  %v1564 = vpop.permute.xlu0 %1563
  %1565 = vrot.lane.b32.xlu0 %v1559, 17
  %v1566 = vpop.permute.xlu0 %1565
  %1567 = vrot.lane.b32.xlu0 %v1556, 17
  %v1568 = vpop.permute.xlu0 %1567
  %1569 = vrot.lane.b32.xlu0 %v1560, 17
  %v1570 = vpop.permute.xlu0 %1569
  %1571 = vrot.lane.b32.xlu0 %v1557, 17
  %v1572 = vpop.permute.xlu0 %1571
  %1573 = vrot.lane.b32.xlu0 %v1561, 17
  %v1574 = vpop.permute.xlu0 %1573
  %1575 = vrot.lane.b32.xlu0 %v1558, 17
  %v1576 = vpop.permute.xlu0 %1575
  %1577 = vrot.lane.b32.xlu0 %v1562, 17
  %v1578 = vpop.permute.xlu0 %1577
  %v1579 = vsel %vm58, %v1572, %v1576
  %v1580 = vsel %vm58, %v1574, %v1578
  %v1581 = vsel %vm58, %v1568, %v1572
  %v1582 = vsel %vm58, %v1570, %v1574
  %v1583 = vsel %vm58, %v1564, %v1568
  %v1584 = vsel %vm58, %v1566, %v1570
  %v1585 = vsel %vm58, %v1576, %v1564
  %v1586 = vsel %vm58, %v1578, %v1566
  %v1587 = vsel %vm89, %v1585, 0.0
  %v1588 = vsel %vm90, %v1583, 0.0
  %v1589 = vsel %vm91, %v1581, 0.0
  %v1590 = vsel %vm92, %v1579, 0.0
  %v1591 = vsel %vm89, %v1586, 0.0
  %v1592 = vsel %vm90, %v1584, 0.0
  %v1593 = vsel %vm91, %v1582, 0.0
  %v1594 = vsel %vm92, %v1580, 0.0
  %1595 = vrot.lane.b32.xlu0 %v1555, 16
  %v1596 = vpop.permute.xlu0 %1595
  %1597 = vrot.lane.b32.xlu0 %v1559, 16
  %v1598 = vpop.permute.xlu0 %1597
  %1599 = vrot.lane.b32.xlu0 %v1556, 16
  %v1600 = vpop.permute.xlu0 %1599
  %1601 = vrot.lane.b32.xlu0 %v1560, 16
  %v1602 = vpop.permute.xlu0 %1601
  %1603 = vrot.lane.b32.xlu0 %v1557, 16
  %v1604 = vpop.permute.xlu0 %1603
  %1605 = vrot.lane.b32.xlu0 %v1561, 16
  %v1606 = vpop.permute.xlu0 %1605
  %1607 = vrot.lane.b32.xlu0 %v1558, 16
  %v1608 = vpop.permute.xlu0 %1607
  %1609 = vrot.lane.b32.xlu0 %v1562, 16
  %v1610 = vpop.permute.xlu0 %1609
  %v1611 = vsel %vm105, %v1604, %v1608
  %v1612 = vsel %vm105, %v1606, %v1610
  %v1613 = vsel %vm105, %v1600, %v1604
  %v1614 = vsel %vm105, %v1602, %v1606
  %v1615 = vsel %vm105, %v1596, %v1600
  %v1616 = vsel %vm105, %v1598, %v1602
  %v1617 = vsel %vm105, %v1608, %v1596
  %v1618 = vsel %vm105, %v1610, %v1598
  %v1619 = vsel %vm131, %v1617, 0.0
  %v1620 = vsel %vm132, %v1615, 0.0
  %v1621 = vsel %vm133, %v1613, 0.0
  %v1622 = vsel %vm134, %v1611, 0.0
  %v1623 = vsel %vm131, %v1618, 0.0
  %v1624 = vsel %vm132, %v1616, 0.0
  %v1625 = vsel %vm133, %v1614, 0.0
  %v1626 = vsel %vm134, %v1612, 0.0
  %1627 = vrot.lane.b32.xlu0 %v1555, 15
  %v1628 = vpop.permute.xlu0 %1627
  %1629 = vrot.lane.b32.xlu0 %v1559, 15
  %v1630 = vpop.permute.xlu0 %1629
  %1631 = vrot.lane.b32.xlu0 %v1556, 15
  %v1632 = vpop.permute.xlu0 %1631
  %1633 = vrot.lane.b32.xlu0 %v1560, 15
  %v1634 = vpop.permute.xlu0 %1633
  %1635 = vrot.lane.b32.xlu0 %v1557, 15
  %v1636 = vpop.permute.xlu0 %1635
  %1637 = vrot.lane.b32.xlu0 %v1561, 15
  %v1638 = vpop.permute.xlu0 %1637
  %1639 = vrot.lane.b32.xlu0 %v1558, 15
  %v1640 = vpop.permute.xlu0 %1639
  %1641 = vrot.lane.b32.xlu0 %v1562, 15
  %v1642 = vpop.permute.xlu0 %1641
  %v1643 = vsel %vm147, %v1636, %v1640
  %v1644 = vsel %vm147, %v1638, %v1642
  %v1645 = vsel %vm147, %v1632, %v1636
  %v1646 = vsel %vm147, %v1634, %v1638
  %v1647 = vsel %vm147, %v1628, %v1632
  %v1648 = vsel %vm147, %v1630, %v1634
  %v1649 = vsel %vm147, %v1640, %v1628
  %v1650 = vsel %vm147, %v1642, %v1630
  %v1651 = vsel %vm174, %v1649, 0.0
  %v1652 = vsel %vm175, %v1647, 0.0
  %v1653 = vsel %vm176, %v1645, 0.0
  %v1654 = vsel %vm177, %v1643, 0.0
  %v1655 = vsel %vm174, %v1650, 0.0
  %v1656 = vsel %vm175, %v1648, 0.0
  %v1657 = vsel %vm176, %v1646, 0.0
  %v1658 = vsel %vm177, %v1644, 0.0
  %1659 = vrot.lane.b32.xlu0 %v1555, 1
  %v1660 = vpop.permute.xlu0 %1659
  %1661 = vrot.lane.b32.xlu0 %v1559, 1
  %v1662 = vpop.permute.xlu0 %1661
  %1663 = vrot.lane.b32.xlu0 %v1556, 1
  %v1664 = vpop.permute.xlu0 %1663
  %1665 = vrot.lane.b32.xlu0 %v1560, 1
  %v1666 = vpop.permute.xlu0 %1665
  %1667 = vrot.lane.b32.xlu0 %v1557, 1
  %v1668 = vpop.permute.xlu0 %1667
  %1669 = vrot.lane.b32.xlu0 %v1561, 1
  %v1670 = vpop.permute.xlu0 %1669
  %1671 = vrot.lane.b32.xlu0 %v1558, 1
  %v1672 = vpop.permute.xlu0 %1671
  %1673 = vrot.lane.b32.xlu0 %v1562, 1
  %v1674 = vpop.permute.xlu0 %1673
  %v1675 = vsel %vm190, %v1668, %v1672
  %v1676 = vsel %vm190, %v1670, %v1674
  %v1677 = vsel %vm190, %v1664, %v1668
  %v1678 = vsel %vm190, %v1666, %v1670
  %v1679 = vsel %vm190, %v1660, %v1664
  %v1680 = vsel %vm190, %v1662, %v1666
  %v1681 = vsel %vm190, %v1672, %v1660
  %v1682 = vsel %vm190, %v1674, %v1662
  %v1683 = vsel %vm217, %v1681, 0.0
  %v1684 = vsel %vm218, %v1679, 0.0
  %v1685 = vsel %vm219, %v1677, 0.0
  %v1686 = vsel %vm220, %v1675, 0.0
  %v1687 = vsel %vm217, %v1682, 0.0
  %v1688 = vsel %vm218, %v1680, 0.0
  %v1689 = vsel %vm219, %v1678, 0.0
  %v1690 = vsel %vm220, %v1676, 0.0
  %1691 = vrot.lane.b32.xlu0 %v1555, 127
  %v1692 = vpop.permute.xlu0 %1691
  %1693 = vrot.lane.b32.xlu0 %v1559, 127
  %v1694 = vpop.permute.xlu0 %1693
  %1695 = vrot.lane.b32.xlu0 %v1556, 127
  %v1696 = vpop.permute.xlu0 %1695
  %1697 = vrot.lane.b32.xlu0 %v1560, 127
  %v1698 = vpop.permute.xlu0 %1697
  %1699 = vrot.lane.b32.xlu0 %v1557, 127
  %v1700 = vpop.permute.xlu0 %1699
  %1701 = vrot.lane.b32.xlu0 %v1561, 127
  %v1702 = vpop.permute.xlu0 %1701
  %1703 = vrot.lane.b32.xlu0 %v1558, 127
  %v1704 = vpop.permute.xlu0 %1703
  %1705 = vrot.lane.b32.xlu0 %v1562, 127
  %v1706 = vpop.permute.xlu0 %1705
  %v1707 = vsel %vm233, %v1700, %v1704
  %v1708 = vsel %vm233, %v1702, %v1706
  %v1709 = vsel %vm233, %v1696, %v1700
  %v1710 = vsel %vm233, %v1698, %v1702
  %v1711 = vsel %vm233, %v1692, %v1696
  %v1712 = vsel %vm233, %v1694, %v1698
  %v1713 = vsel %vm233, %v1704, %v1692
  %v1714 = vsel %vm233, %v1706, %v1694
  %v1715 = vsel %vm257, %v1711, 0.0
  %v1716 = vsel %vm258, %v1709, 0.0
  %v1717 = vsel %vm259, %v1707, 0.0
  %v1718 = vsel %vm260, %v1713, 0.0
  %v1719 = vsel %vm257, %v1712, 0.0
  %v1720 = vsel %vm258, %v1710, 0.0
  %v1721 = vsel %vm259, %v1708, 0.0
  %v1722 = vsel %vm260, %v1714, 0.0
  %1723 = vrot.lane.b32.xlu0 %v1555, 113
  %v1724 = vpop.permute.xlu0 %1723
  %1725 = vrot.lane.b32.xlu0 %v1559, 113
  %v1726 = vpop.permute.xlu0 %1725
  %1727 = vrot.lane.b32.xlu0 %v1556, 113
  %v1728 = vpop.permute.xlu0 %1727
  %1729 = vrot.lane.b32.xlu0 %v1560, 113
  %v1730 = vpop.permute.xlu0 %1729
  %1731 = vrot.lane.b32.xlu0 %v1557, 113
  %v1732 = vpop.permute.xlu0 %1731
  %1733 = vrot.lane.b32.xlu0 %v1561, 113
  %v1734 = vpop.permute.xlu0 %1733
  %1735 = vrot.lane.b32.xlu0 %v1558, 113
  %v1736 = vpop.permute.xlu0 %1735
  %1737 = vrot.lane.b32.xlu0 %v1562, 113
  %v1738 = vpop.permute.xlu0 %1737
  %v1739 = vsel %vm273, %v1732, %v1736
  %v1740 = vsel %vm273, %v1734, %v1738
  %v1741 = vsel %vm273, %v1728, %v1732
  %v1742 = vsel %vm273, %v1730, %v1734
  %v1743 = vsel %vm273, %v1724, %v1728
  %v1744 = vsel %vm273, %v1726, %v1730
  %v1745 = vsel %vm273, %v1736, %v1724
  %v1746 = vsel %vm273, %v1738, %v1726
  %v1747 = vsel %vm301, %v1743, 0.0
  %v1748 = vsel %vm302, %v1741, 0.0
  %v1749 = vsel %vm303, %v1739, 0.0
  %v1750 = vsel %vm304, %v1745, 0.0
  %v1751 = vsel %vm301, %v1744, 0.0
  %v1752 = vsel %vm302, %v1742, 0.0
  %v1753 = vsel %vm303, %v1740, 0.0
  %v1754 = vsel %vm304, %v1746, 0.0
  %1755 = vrot.lane.b32.xlu0 %v1555, 112
  %v1756 = vpop.permute.xlu0 %1755
  %1757 = vrot.lane.b32.xlu0 %v1559, 112
  %v1758 = vpop.permute.xlu0 %1757
  %1759 = vrot.lane.b32.xlu0 %v1556, 112
  %v1760 = vpop.permute.xlu0 %1759
  %1761 = vrot.lane.b32.xlu0 %v1560, 112
  %v1762 = vpop.permute.xlu0 %1761
  %1763 = vrot.lane.b32.xlu0 %v1557, 112
  %v1764 = vpop.permute.xlu0 %1763
  %1765 = vrot.lane.b32.xlu0 %v1561, 112
  %v1766 = vpop.permute.xlu0 %1765
  %1767 = vrot.lane.b32.xlu0 %v1558, 112
  %v1768 = vpop.permute.xlu0 %1767
  %1769 = vrot.lane.b32.xlu0 %v1562, 112
  %v1770 = vpop.permute.xlu0 %1769
  %v1771 = vsel %vm317, %v1764, %v1768
  %v1772 = vsel %vm317, %v1766, %v1770
  %v1773 = vsel %vm317, %v1760, %v1764
  %v1774 = vsel %vm317, %v1762, %v1766
  %v1775 = vsel %vm317, %v1756, %v1760
  %v1776 = vsel %vm317, %v1758, %v1762
  %v1777 = vsel %vm317, %v1768, %v1756
  %v1778 = vsel %vm317, %v1770, %v1758
  %v1779 = vsel %vm341, %v1775, 0.0
  %v1780 = vsel %vm342, %v1773, 0.0
  %v1781 = vsel %vm343, %v1771, 0.0
  %v1782 = vsel %vm344, %v1777, 0.0
  %v1783 = vsel %vm341, %v1776, 0.0
  %v1784 = vsel %vm342, %v1774, 0.0
  %v1785 = vsel %vm343, %v1772, 0.0
  %v1786 = vsel %vm344, %v1778, 0.0
  %1787 = vrot.lane.b32.xlu0 %v1555, 111
  %v1788 = vpop.permute.xlu0 %1787
  %1789 = vrot.lane.b32.xlu0 %v1559, 111
  %v1790 = vpop.permute.xlu0 %1789
  %1791 = vrot.lane.b32.xlu0 %v1556, 111
  %v1792 = vpop.permute.xlu0 %1791
  %1793 = vrot.lane.b32.xlu0 %v1560, 111
  %v1794 = vpop.permute.xlu0 %1793
  %1795 = vrot.lane.b32.xlu0 %v1557, 111
  %v1796 = vpop.permute.xlu0 %1795
  %1797 = vrot.lane.b32.xlu0 %v1561, 111
  %v1798 = vpop.permute.xlu0 %1797
  %1799 = vrot.lane.b32.xlu0 %v1558, 111
  %v1800 = vpop.permute.xlu0 %1799
  %1801 = vrot.lane.b32.xlu0 %v1562, 111
  %v1802 = vpop.permute.xlu0 %1801
  %v1803 = vsel %vm357, %v1796, %v1800
  %v1804 = vsel %vm357, %v1798, %v1802
  %v1805 = vsel %vm357, %v1792, %v1796
  %v1806 = vsel %vm357, %v1794, %v1798
  %v1807 = vsel %vm357, %v1788, %v1792
  %v1808 = vsel %vm357, %v1790, %v1794
  %v1809 = vsel %vm357, %v1800, %v1788
  %v1810 = vsel %vm357, %v1802, %v1790
  %v1811 = vsel %vm381, %v1807, 0.0
  %v1812 = vsel %vm382, %v1805, 0.0
  %v1813 = vsel %vm383, %v1803, 0.0
  %v1814 = vsel %vm384, %v1809, 0.0
  %v1815 = vsel %vm381, %v1808, 0.0
  %v1816 = vsel %vm382, %v1806, 0.0
  %v1817 = vsel %vm383, %v1804, 0.0
  %v1818 = vsel %vm384, %v1810, 0.0
  %v1819 = vpack.c.bf16 %v1591, %v1587
  %v1820 = vpack.c.bf16 %v1592, %v1588
  %v1821 = vpack.c.bf16 %v1593, %v1589
  %v1822 = vpack.c.bf16 %v1594, %v1590
  %v1823 = vpack.c.bf16 %v1623, %v1619
  %v1824 = vpack.c.bf16 %v1624, %v1620
  %v1825 = vpack.c.bf16 %v1625, %v1621
  %v1826 = vpack.c.bf16 %v1626, %v1622
  %v1827 = vpack.c.bf16 %v1655, %v1651
  %v1828 = vpack.c.bf16 %v1656, %v1652
  %v1829 = vpack.c.bf16 %v1657, %v1653
  %v1830 = vpack.c.bf16 %v1658, %v1654
  %v1831 = vpack.c.bf16 %v1687, %v1683
  %v1832 = vpack.c.bf16 %v1688, %v1684
  %v1833 = vpack.c.bf16 %v1689, %v1685
  %v1834 = vpack.c.bf16 %v1690, %v1686
  %v1835 = vpack.c.bf16 %v1559, %v1555
  %v1836 = vpack.c.bf16 %v1560, %v1556
  %v1837 = vpack.c.bf16 %v1561, %v1557
  %v1838 = vpack.c.bf16 %v1562, %v1558
  %v1839 = vpack.c.bf16 %v1719, %v1715
  %v1840 = vpack.c.bf16 %v1720, %v1716
  %v1841 = vpack.c.bf16 %v1721, %v1717
  %v1842 = vpack.c.bf16 %v1722, %v1718
  %v1843 = vpack.c.bf16 %v1751, %v1747
  %v1844 = vpack.c.bf16 %v1752, %v1748
  %v1845 = vpack.c.bf16 %v1753, %v1749
  %v1846 = vpack.c.bf16 %v1754, %v1750
  %v1847 = vpack.c.bf16 %v1783, %v1779
  %v1848 = vpack.c.bf16 %v1784, %v1780
  %v1849 = vpack.c.bf16 %v1785, %v1781
  %v1850 = vpack.c.bf16 %v1786, %v1782
  %v1851 = vpack.c.bf16 %v1815, %v1811
  %v1852 = vpack.c.bf16 %v1816, %v1812
  %v1853 = vpack.c.bf16 %v1817, %v1813
  %v1854 = vpack.c.bf16 %v1818, %v1814
  %v1855 = vld [vmem:[%s6] sm:$0x77]
  %v1856 = vld [vmem:[%s7] sm:$0x1f]
  %1858 = vset.pattern.permute.xlu0 0
  %1859 = vperm.xlu0 %1858, %v1856
  %v1860 = vpop.permute.xlu0 %1859
  %v1863 = vunpack.c.l.b16 %v1855
  %v1864 = vunpack.c.h.b16 %v1855
  %v1865 = vpack.c.b16 %v1863, %v1863
  %v1866 = vpack.c.b16 %v1864, %v1864
  %vm1868 = vcmask 130048
  %v1870 = vsel %vm1868, %v1866, 0
  %1872 = vmatprep.subr.bf16.mxu0 %v1820
  %1873 = vmatpush1.bf16.msra.mxu0 %v1819
  %1874 = vmatprep.subr.bf16.mxu0 %v1824
  %1875 = vmatpush1.bf16.msra.mxu0 %v1823
  %1876 = vmatprep.subr.bf16.mxu0 %v1828
  %1877 = vmatpush1.bf16.msra.mxu0 %v1827
  %1878 = vmatprep.subr.bf16.mxu0 %v1832
  %1879 = vmatpush1.bf16.msra.mxu0 %v1831
  %1880 = vmatprep.subr.bf16.mxu0 %v1836
  %1881 = vmatpush1.bf16.msra.mxu0 %v1835
  %1882 = vmatprep.subr.bf16.mxu0 %v1840
  %1883 = vmatpush1.bf16.msra.mxu0 %v1839
  %1884 = vmatprep.subr.bf16.mxu0 %v1844
  %1885 = vmatpush1.bf16.msra.mxu0 %v1843
  %1886 = vmatprep.subr.bf16.mxu0 %v1848
  %1887 = vmatpush1.bf16.msra.mxu0 %v1847
  %1888 = vmatprep.subr.bf16.mxu0 %v1852
  %1889 = vmatpush1.bf16.msra.mxu0 %v1851
  %1890 = vmatprep.subr.bf16.mxu0 0
  %1891 = vmatpush1.bf16.msra.mxu0 0
  %1892 = vmatprep.subr.bf16.mxu0 0
  %1893 = vmatpush1.bf16.msra.mxu0 0
  %1894 = vmatprep.subr.bf16.mxu0 0
  %1895 = vmatpush1.bf16.msra.mxu0 0
  %1896 = vmatprep.subr.bf16.mxu0 0
  %1897 = vmatpush1.bf16.msra.mxu0 0
  %1898 = vmatprep.subr.bf16.mxu0 0
  %1899 = vmatpush1.bf16.msra.mxu0 0
  %1900 = vmatprep.subr.bf16.mxu0 0
  %1901 = vmatpush1.bf16.msra.mxu0 0
  %1902 = vmatprep.subr.bf16.mxu0 0
  %1903 = vmatpush1.bf16.msra.mxu0 0
  %1904 = vmatprep.mubr.bf16.mxu0 %v1870
  %1905 = vmatmul.mubr.bf16.gmra.mrb[0].mxu0 %v1865
  %v1906 = vpop.f32.mrb[0].mxu0
  %v1907 = vadd.f32 %v1860, %v1906
  %v1908 = vpop.f32.mrb[0].mxu0
  %v1909 = vadd.f32 %v1860, %v1908
  %v1910 = vpop.f32.mrb[0].mxu0
  %v1911 = vpop.f32.mrb[0].mxu0
  %1912 = vdwg.mxu0
  %1913 = vmatprep.subr.bf16.mxu0 %v1822
  %1914 = vmatpush1.bf16.msra.mxu0 %v1821
  %1915 = vmatprep.subr.bf16.mxu0 %v1826
  %1916 = vmatpush1.bf16.msra.mxu0 %v1825
  %1917 = vmatprep.subr.bf16.mxu0 %v1830
  %1918 = vmatpush1.bf16.msra.mxu0 %v1829
  %1919 = vmatprep.subr.bf16.mxu0 %v1834
  %1920 = vmatpush1.bf16.msra.mxu0 %v1833
  %1921 = vmatprep.subr.bf16.mxu0 %v1838
  %1922 = vmatpush1.bf16.msra.mxu0 %v1837
  %1923 = vmatprep.subr.bf16.mxu0 %v1842
  %1924 = vmatpush1.bf16.msra.mxu0 %v1841
  %1925 = vmatprep.subr.bf16.mxu0 %v1846
  %1926 = vmatpush1.bf16.msra.mxu0 %v1845
  %1927 = vmatprep.subr.bf16.mxu0 %v1850
  %1928 = vmatpush1.bf16.msra.mxu0 %v1849
  %1929 = vmatprep.subr.bf16.mxu0 %v1854
  %1930 = vmatpush1.bf16.msra.mxu0 %v1853
  %1931 = vmatprep.subr.bf16.mxu0 0
  %1932 = vmatpush1.bf16.msra.mxu0 0
  %1933 = vmatprep.subr.bf16.mxu0 0
  %1934 = vmatpush1.bf16.msra.mxu0 0
  %1935 = vmatprep.subr.bf16.mxu0 0
  %1936 = vmatpush1.bf16.msra.mxu0 0
  %1937 = vmatprep.subr.bf16.mxu0 0
  %1938 = vmatpush1.bf16.msra.mxu0 0
  %1939 = vmatprep.subr.bf16.mxu0 0
  %1940 = vmatpush1.bf16.msra.mxu0 0
  %1941 = vmatprep.subr.bf16.mxu0 0
  %1942 = vmatpush1.bf16.msra.mxu0 0
  %1943 = vmatprep.subr.bf16.mxu0 0
  %1944 = vmatpush1.bf16.msra.mxu0 0
  %1945 = vmatprep.mubr.bf16.mxu0 %v1870
  %1946 = vmatmul.mubr.bf16.gmra.mrb[0].mxu0 %v1865
  %v1947 = vpop.f32.mrb[0].mxu0
  %v1948 = vadd.f32 %v1860, %v1947
  %v1949 = vpop.f32.mrb[0].mxu0
  %v1950 = vadd.f32 %v1860, %v1949
  %v1951 = vpop.f32.mrb[0].mxu0
  %v1952 = vpop.f32.mrb[0].mxu0
  %1953 = vdwg.mxu0
  %vm1954 = vcmask 1044480
  %v1955 = vsel %vm1954, %v1907, -inf
  %v1956 = vrot.slane %v1955, 4
  %v1957 = vmax.f32 %v1955, %v1956
  %v1958 = vrot.slane %v1957, 2
  %v1959 = vmax.f32 %v1957, %v1958
  %v1960 = vrot.slane %v1959, 1
  %v1961 = vmax.f32 %v1959, %v1960
  %v1962 = vsel %vm1954, %v1909, -inf
  %v1963 = vrot.slane %v1962, 4
  %v1964 = vmax.f32 %v1962, %v1963
  %v1965 = vrot.slane %v1964, 2
  %v1966 = vmax.f32 %v1964, %v1965
  %v1967 = vrot.slane %v1966, 1
  %v1968 = vmax.f32 %v1966, %v1967
  %v1969 = vsel %vm1954, %v1948, -inf
  %v1970 = vrot.slane %v1969, 4
  %v1971 = vmax.f32 %v1969, %v1970
  %v1972 = vrot.slane %v1971, 2
  %v1973 = vmax.f32 %v1971, %v1972
  %v1974 = vrot.slane %v1973, 1
  %v1975 = vmax.f32 %v1973, %v1974
  %v1976 = vsel %vm1954, %v1950, -inf
  %v1977 = vrot.slane %v1976, 4
  %v1978 = vmax.f32 %v1976, %v1977
  %v1979 = vrot.slane %v1978, 2
  %v1980 = vmax.f32 %v1978, %v1979
  %v1981 = vrot.slane %v1980, 1
  %v1982 = vmax.f32 %v1980, %v1981
  %v1983 = vsub.f32 %v1907, %v1961
  %v1984 = vsub.f32 %v1909, %v1968
  %v1985 = vsub.f32 %v1948, %v1975
  %v1986 = vsub.f32 %v1950, %v1982
  %v1987 = vmul.f32 %v1983, 1.442695
  %v1988 = vpow.pop %v1987
  %v1989 = vmul.f32 %v1984, 1.442695
  %v1990 = vpow.pop %v1989
  %v1991 = vmul.f32 %v1985, 1.442695
  %v1992 = vpow.pop %v1991
  %v1993 = vmul.f32 %v1986, 1.442695
  %v1994 = vpow.pop %v1993
  %v1995 = vsel %vm1954, %v1988, 0.0
  %v1996 = vrot.slane %v1995, 4
  %v1997 = vadd.f32 %v1995, %v1996
  %v1998 = vrot.slane %v1997, 2
  %v1999 = vadd.f32 %v1997, %v1998
  %v2000 = vrot.slane %v1999, 1
  %v2001 = vadd.f32 %v1999, %v2000
  %v2002 = vsel %vm1954, %v1990, 0.0
  %v2003 = vrot.slane %v2002, 4
  %v2004 = vadd.f32 %v2002, %v2003
  %v2005 = vrot.slane %v2004, 2
  %v2006 = vadd.f32 %v2004, %v2005
  %v2007 = vrot.slane %v2006, 1
  %v2008 = vadd.f32 %v2006, %v2007
  %v2009 = vsel %vm1954, %v1992, 0.0
  %v2010 = vrot.slane %v2009, 4
  %v2011 = vadd.f32 %v2009, %v2010
  %v2012 = vrot.slane %v2011, 2
  %v2013 = vadd.f32 %v2011, %v2012
  %v2014 = vrot.slane %v2013, 1
  %v2015 = vadd.f32 %v2013, %v2014
  %v2016 = vsel %vm1954, %v1994, 0.0
  %v2017 = vrot.slane %v2016, 4
  %v2018 = vadd.f32 %v2016, %v2017
  %v2019 = vrot.slane %v2018, 2
  %v2020 = vadd.f32 %v2018, %v2019
  %v2021 = vrot.slane %v2020, 1
  %v2022 = vadd.f32 %v2020, %v2021
  %v2023 = vlog2.pop %v2001
  %v2024 = vmul.f32 %v2023, 0.6931472
  %v2025 = vlog2.pop %v2008
  %v2026 = vmul.f32 %v2025, 0.6931472
  %v2027 = vlog2.pop %v2015
  %v2028 = vmul.f32 %v2027, 0.6931472
  %v2029 = vlog2.pop %v2022
  %v2030 = vmul.f32 %v2029, 0.6931472
  %v2031 = vsub.f32 %v1983, %v2024
  %v2032 = vsub.f32 %v1984, %v2026
  %v2033 = vsub.f32 %v1985, %v2028
  %v2034 = vsub.f32 %v1986, %v2030
  %2035 = vst [vmem:[%s12] sm:$0x1f] %v2031
  %2036 = vst [vmem:[%s12 + $0x8] sm:$0x1f] %v2032
  %2037 = vst [vmem:[%s12 + $0x10] sm:$0x1f] %v2033
  %2038 = vst [vmem:[%s12 + $0x18] sm:$0x1f] %v2034
  // Predicated region
  $region50: #{three_layer_semseg_highdim.1} parent=0 // pred_check
    _
  $region51: #{three_layer_semseg_highdim.1} parent=0 // pred_check_branch
    %2040 = sbr.rel (0) target = $region53
  $region52: #{three_layer_semseg_highdim.1} parent=0 // pred_region
    _
  $region53: #{three_layer_semseg_highdim.1} parent=0 // pred_fallthru
    _
  // Predicated region
  $region54: #{three_layer_semseg_highdim.1} parent=0 // pred_check
    _
  $region55: #{three_layer_semseg_highdim.1} parent=0 // pred_check_branch
    %2042 = sbr.rel (0) target = $region57
  $region56: #{three_layer_semseg_highdim.1} parent=0 // pred_region
    _
  $region57: #{three_layer_semseg_highdim.1} parent=0 // pred_fallthru
    _

</llo_original>
